<compile_context>
chip_gen: v5e
topology: v5e:2x2
jax: 0.10.0
libtpu: 0.0.40
codegen_flags: <defaults>
</compile_context>

<pallas_src>
import functools

import jax
import jax.numpy as jnp
from jax.experimental import pallas as pl
from jax.experimental.pallas import tpu as pltpu

EPS = 1e-5
_VMEM_LIMIT = 48 * 1024 * 1024   # scoped-VMEM request; safe on v5e/v6e/v7x
_VMEM_BUDGET = 40 * 1024 * 1024  # planning budget used when picking nb


def _zero_pad_border(pad_ref, nb, hp, wp, c):
    """Zero only the 1-element border of the padded scratch.

    The interior is fully overwritten every grid step, so a full-buffer memset
    each step would be pure vst-slot overhead.  The border must be re-zeroed
    every step because VMEM scratch is uninitialized and, under megacore
    splitting, we cannot identify "the first step on this core".
    """
    zrow = jnp.zeros((nb, 1, wp + 2, c), pad_ref.dtype)
    pad_ref[:, 0:1, :, :] = zrow
    pad_ref[:, hp + 1:hp + 2, :, :] = zrow
    zcol = jnp.zeros((nb, hp + 2, 1, c), pad_ref.dtype)
    pad_ref[:, :, 0:1, :] = zcol
    pad_ref[:, :, wp + 1:wp + 2, :] = zcol


def _conv3x3_im2col(pad_ref, col_ref, w_ref, nb, hp, wp, cin):
    """3x3 'same' conv over all nb samples as ONE im2col MXU matmul.

    pad_ref: (nb, hp+2, wp+2, cin) bf16 zero-bordered activations.
    col_ref: (nb*hp*wp, 9*cin)     bf16 im2col patch matrix.
    w_ref:   (9*cin, cout)         bf16 weights, rows ordered (kh, kw, cin).
    Returns f32 (nb*hp*wp, cout).
    """
    rows = nb * hp * wp
    for kh in range(3):
        for kw in range(3):
            k = kh * 3 + kw
            col_ref[:, k * cin:(k + 1) * cin] = (
                pad_ref[:, kh:kh + hp, kw:kw + wp, :].reshape(rows, cin))
    return jnp.dot(col_ref[...], w_ref[...], preferred_element_type=jnp.float32)


def _pool_conv_kernel(hp, wp, cin, cmid, nb,
                      x_ref, w_ref, y_ref, s_ref, q_ref, pad_ref, col_ref):
    _zero_pad_border(pad_ref, nb, hp, wp, cin)

    # 2x2 max-pool, batched over all nb samples (max is exact in bf16).
    # Input was reshaped so even/odd W columns sit side-by-side on lanes.
    x = x_ref[...]                                               # (nb, h, wp, 2*cin)
    xw = jnp.maximum(x[:, :, :, 0:cin], x[:, :, :, cin:2 * cin])  # W-pool
    xw = xw.reshape(nb * hp, 2, wp, cin)                          # split H pairs
    pooled = jnp.maximum(xw[:, 0], xw[:, 1]).reshape(nb, hp, wp, cin)
    pad_ref[:, 1:hp + 1, 1:wp + 1, :] = pooled                    # interior only

    acc = _conv3x3_im2col(pad_ref, col_ref, w_ref, nb, hp, wp, cin)
    y_ref[...] = acc.reshape(nb, hp, wp, cmid).astype(y_ref.dtype)

    # per-step per-channel partial sums for BN1 batch statistics (f32)
    s_ref[...] = jnp.sum(acc, axis=0).reshape(1, 1, cmid)
    q_ref[...] = jnp.sum(acc * acc, axis=0).reshape(1, 1, cmid)


def _bnrelu_conv_kernel(hp, wp, cin, cout, nb,
                        x_ref, sc_ref, sh_ref, w_ref,
                        y_ref, s_ref, q_ref, pad_ref, col_ref):
    _zero_pad_border(pad_ref, nb, hp, wp, cin)

    # BN1 + ReLU in f32 (VPU), stored bf16 into the pad interior.
    a = jnp.maximum(x_ref[...].astype(jnp.float32) * sc_ref[...] + sh_ref[...], 0.0)
    pad_ref[:, 1:hp + 1, 1:wp + 1, :] = a.astype(pad_ref.dtype)

    acc = _conv3x3_im2col(pad_ref, col_ref, w_ref, nb, hp, wp, cin)
    y_ref[...] = acc.reshape(nb, hp, wp, cout).astype(y_ref.dtype)

    s_ref[...] = jnp.sum(acc, axis=0).reshape(1, 1, cout)
    q_ref[...] = jnp.sum(acc * acc, axis=0).reshape(1, 1, cout)


def _bnrelu_kernel(x_ref, sc_ref, sh_ref, o_ref):
    o_ref[...] = jnp.maximum(
        x_ref[...].astype(jnp.float32) * sc_ref[...] + sh_ref[...], 0.0)


def _bn_scale_shift(s, q, gamma, beta, count):
    """Finish the BN reduction (tiny O(C) glue) and fold into scale/shift.

    Training-mode BatchNorm2d: biased variance over (N, H, W), eps=1e-5.
    TODO(synk): E[x^2]-E[x]^2 is cancellation-prone for very large-magnitude
    activations; switch to a Welford-style per-step (count, mean, M2) merge if
    that regime ever matters.
    """
    mean = jnp.sum(s, axis=(0, 1)) / count
    ex2 = jnp.sum(q, axis=(0, 1)) / count
    var = ex2 - mean * mean
    scale = gamma / jnp.sqrt(var + EPS)
    shift = beta - mean * scale
    return scale, shift


def _step_vmem_bytes(nb, h, hp, wp, cin, cmid, cout):
    """Rough per-step VMEM bytes (double-buffered I/O blocks + scratches)."""
    bf = 2  # bf16 everywhere in VMEM
    k1 = (2 * nb * h * wp * 2 * cin * bf           # pooled-layout input, 2 bufs
          + 2 * nb * hp * wp * cmid * bf           # y1 output, 2 bufs
          + nb * (hp + 2) * (wp + 2) * cin * bf    # pad scratch
          + nb * hp * wp * 9 * cin * bf            # col scratch
          + 2 * 9 * cin * cmid * bf)               # weights
    k2 = (2 * nb * hp * wp * cmid * bf
          + 2 * nb * hp * wp * cout * bf
          + nb * (hp + 2) * (wp + 2) * cmid * bf
          + nb * hp * wp * 9 * cmid * bf
          + 2 * 9 * cmid * cout * bf)
    return max(k1, k2)


def _choose_block_n(n, h, hp, wp, cin, cmid, cout,
                    budget=_VMEM_BUDGET, target_rows=256):
    """Samples per grid step: fill the MXU M dimension (>=256 rows on v6e/v7x)
    under a byte budget; once M is full, prefer keeping >=2 grid steps so both
    v7x TensorCores stay busy under dimension_semantics='parallel'."""
    fitting = [d for d in range(1, n + 1)
               if n % d == 0
               and _step_vmem_bytes(d, h, hp, wp, cin, cmid, cout) <= budget]
    if not fitting:
        return 1
    for d in fitting:  # smallest nb that fills M while keeping >=2 steps
        if d * hp * wp >= target_rows and n // d >= 2:
            return d
    return fitting[-1]  # otherwise the biggest block that fits the budget


def down_forward(x_nchw, params):
    """Down(in_ch, out_ch): MaxPool2d(2) -> (Conv3x3 -> BN -> ReLU) x2.

    params = (w1, g1, b1, w2, g2, b2), PyTorch layouts:
      w1: (cmid, cin, 3, 3), w2: (cout, cmid, 3, 3), g*/b*: per-channel affine.
    """
    w1, g1, b1, w2, g2, b2 = params
    n, cin, h, w = x_nchw.shape
    cmid = w1.shape[0]
    cout = w2.shape[0]
    hp, wp = h // 2, w // 2
    count = n * hp * wp
    nb = _choose_block_n(n, h, hp, wp, cin, cmid, cout)
    steps = n // nb

    # NCHW -> NHWC once (channels on lanes), bf16 to halve HBM traffic.  The
    # reshape pairs even/odd W columns on the lane axis (layout-preserving) so
    # the 2x2 max-pool runs fully in-kernel with no pre-strided tap arrays.
    # TODO(synk): keep NHWC end-to-end in the surrounding model to drop the
    # entry/exit transposes (each is a full HBM pass outside the pipeline).
    x = jnp.transpose(x_nchw, (0, 2, 3, 1)).astype(jnp.bfloat16)
    x = x.reshape(n, h, wp, 2 * cin)

    # torch conv weight (out, in, kh, kw) -> im2col matrix (kh*kw*in, out), bf16
    w1r = jnp.transpose(w1, (2, 3, 1, 0)).reshape(9 * cin, cmid).astype(jnp.bfloat16)
    w2r = jnp.transpose(w2, (2, 3, 1, 0)).reshape(9 * cmid, cout).astype(jnp.bfloat16)

    cparams = pltpu.CompilerParams(dimension_semantics=("parallel",),
                                   vmem_limit_bytes=_VMEM_LIMIT)

    # ---- kernel 1: in-kernel 2x2 max-pool + conv1 (one im2col matmul) + BN1 stats
    # TODO(synk): for real UNet image sizes add an H-tiling grid axis with a
    # 1-row halo on pooled rows so the pad/col scratches stay bounded on v7x's
    # 64 MiB VMEM; also pad wp to a multiple of 8 and cin/cmid toward 128
    # lanes for lane-dense stores / layout-friendly reshapes.
    y1, s1, q1 = pl.pallas_call(
        functools.partial(_pool_conv_kernel, hp, wp, cin, cmid, nb),
        grid=(steps,),
        in_specs=[pl.BlockSpec((nb, h, wp, 2 * cin), lambda i: (i, 0, 0, 0)),
                  pl.BlockSpec((9 * cin, cmid), lambda i: (0, 0))],
        out_specs=[pl.BlockSpec((nb, hp, wp, cmid), lambda i: (i, 0, 0, 0)),
                   pl.BlockSpec((1, 1, cmid), lambda i: (i, 0, 0)),
                   pl.BlockSpec((1, 1, cmid), lambda i: (i, 0, 0))],
        out_shape=(jax.ShapeDtypeStruct((n, hp, wp, cmid), jnp.bfloat16),
                   jax.ShapeDtypeStruct((steps, 1, cmid), jnp.float32),
                   jax.ShapeDtypeStruct((steps, 1, cmid), jnp.float32)),
        scratch_shapes=[pltpu.VMEM((nb, hp + 2, wp + 2, cin), jnp.bfloat16),
                        pltpu.VMEM((nb * hp * wp, 9 * cin), jnp.bfloat16)],
        compiler_params=cparams,
    )(x, w1r)

    sc1, sh1 = _bn_scale_shift(s1, q1, g1, b1, count)

    # ---- kernel 2: BN1 + ReLU + conv2 (one im2col matmul) + BN2 stats ---------
    y2, s2, q2 = pl.pallas_call(
        functools.partial(_bnrelu_conv_kernel, hp, wp, cmid, cout, nb),
        grid=(steps,),
        in_specs=[pl.BlockSpec((nb, hp, wp, cmid), lambda i: (i, 0, 0, 0)),
                  pl.BlockSpec((1, 1, 1, cmid), lambda i: (0, 0, 0, 0)),
                  pl.BlockSpec((1, 1, 1, cmid), lambda i: (0, 0, 0, 0)),
                  pl.BlockSpec((9 * cmid, cout), lambda i: (0, 0))],
        out_specs=[pl.BlockSpec((nb, hp, wp, cout), lambda i: (i, 0, 0, 0)),
                   pl.BlockSpec((1, 1, cout), lambda i: (i, 0, 0)),
                   pl.BlockSpec((1, 1, cout), lambda i: (i, 0, 0))],
        out_shape=(jax.ShapeDtypeStruct((n, hp, wp, cout), jnp.bfloat16),
                   jax.ShapeDtypeStruct((steps, 1, cout), jnp.float32),
                   jax.ShapeDtypeStruct((steps, 1, cout), jnp.float32)),
        scratch_shapes=[pltpu.VMEM((nb, hp + 2, wp + 2, cmid), jnp.bfloat16),
                        pltpu.VMEM((nb * hp * wp, 9 * cmid), jnp.bfloat16)],
        compiler_params=cparams,
    )(y1, sc1.reshape(1, 1, 1, cmid), sh1.reshape(1, 1, 1, cmid), w2r)

    sc2, sh2 = _bn_scale_shift(s2, q2, g2, b2, count)

    # ---- kernel 3: BN2 + ReLU (kept only for a standalone Down) ---------------
    out = pl.pallas_call(
        _bnrelu_kernel,
        grid=(steps,),
        in_specs=[pl.BlockSpec((nb, hp, wp, cout), lambda i: (i, 0, 0, 0)),
                  pl.BlockSpec((1, 1, 1, cout), lambda i: (0, 0, 0, 0)),
                  pl.BlockSpec((1, 1, 1, cout), lambda i: (0, 0, 0, 0))],
        out_specs=pl.BlockSpec((nb, hp, wp, cout), lambda i: (i, 0, 0, 0)),
        out_shape=jax.ShapeDtypeStruct((n, hp, wp, cout), jnp.float32),
        compiler_params=cparams,
    )(y2, sc2.reshape(1, 1, 1, cout), sh2.reshape(1, 1, 1, cout))

    return jnp.transpose(out, (0, 3, 1, 2))   # back to NCHW


def _reference(x, params):
    """Pure-JAX f32 reference of Down (training-mode BN) for the smoke test."""
    w1, g1, b1, w2, g2, b2 = params
    xp = jax.lax.reduce_window(x, -jnp.inf, jax.lax.max,
                               (1, 1, 2, 2), (1, 1, 2, 2), "VALID")

    def conv(a, wt):
        return jax.lax.conv_general_dilated(
            a, wt, (1, 1), ((1, 1), (1, 1)),
            dimension_numbers=("NCHW", "OIHW", "NCHW"))

    def bnrelu(a, g, b):
        mean = a.mean(axis=(0, 2, 3), keepdims=True)
        var = a.var(axis=(0, 2, 3), keepdims=True)
        y = (a - mean) / jnp.sqrt(var + EPS) * g.reshape(1, -1, 1, 1) + b.reshape(1, -1, 1, 1)
        return jnp.maximum(y, 0.0)

    y = bnrelu(conv(xp, w1), g1, b1)
    return bnrelu(conv(y, w2), g2, b2)


if __name__ == "__main__":
    key = jax.random.PRNGKey(0)
    n, cin, cout, h, w = 2, 4, 8, 16, 16
    cmid = cout  # DoubleConv default: mid_channels = out_channels

    k0, k1, k2 = jax.random.split(key, 3)
    x = jax.random.normal(k0, (n, cin, h, w), jnp.float32)
    w1 = jax.random.normal(k1, (cmid, cin, 3, 3), jnp.float32) * 0.2
    w2 = jax.random.normal(k2, (cout, cmid, 3, 3), jnp.float32) * 0.2
    g1 = jnp.ones((cmid,), jnp.float32)
    b1 = jnp.zeros((cmid,), jnp.float32)
    g2 = jnp.ones((cout,), jnp.float32)
    b2 = jnp.zeros((cout,), jnp.float32)
    params = (w1, g1, b1, w2, g2, b2)

    out = jax.jit(down_forward)(x, params)
    jax.block_until_ready(out)
    assert out.shape == (n, cout, h // 2, w // 2), out.shape
    assert bool(jnp.all(jnp.isfinite(out)))

    ref = _reference(x, params)
    # bf16 matmul operands + bf16 intermediates -> generous tolerance
    assert bool(jnp.allclose(out, ref, atol=1e-1, rtol=1e-1)), \
        float(jnp.max(jnp.abs(out - ref)))
    print("KERNEL_OK")
</pallas_src>

<mosaic_0001>
module attributes {stable_mosaic.version = 11 : i64} {
  func.func @_pool_conv_kernel(%arg0: i32, %arg1: memref<2x16x8x8xbf16, #tpu.memory_space<vmem>>, %arg2: memref<36x8xbf16, #tpu.memory_space<vmem>>, %arg3: memref<2x8x8x8xbf16, #tpu.memory_space<vmem>>, %arg4: memref<1x1x8xf32, #tpu.memory_space<vmem>>, %arg5: memref<1x1x8xf32, #tpu.memory_space<vmem>>, %arg6: memref<2x10x10x4xbf16, #tpu.memory_space<vmem>>, %arg7: memref<128x36xbf16, #tpu.memory_space<vmem>>) attributes {dimension_semantics = [#tpu.dimension_semantics<parallel>], iteration_bounds = array<i64: 1>, scalar_prefetch = 0 : i64, scratch_operands = 2 : i64, tpu.core_type = #tpu.core_type<tc>, window_params = [{transform_indices = @transform_0, window_bounds = array<i64: 2, 16, 8, 8>}, {pipeline_mode = #tpu.pipeline_mode<synchronous>, transform_indices = @transform_1, window_bounds = array<i64: 36, 8>}, {transform_indices = @transform_2, window_bounds = array<i64: 2, 8, 8, 8>}, {transform_indices = @transform_3, window_bounds = array<i64: 1, 1, 8>}, {transform_indices = @transform_4, window_bounds = array<i64: 1, 1, 8>}]} {
    %cst = arith.constant 0.000000e+00 : bf16
    %0 = vector.broadcast %cst : bf16 to vector<2x1x10x4xbf16>
    %c0 = arith.constant 0 : index
    %c0_0 = arith.constant 0 : index
    %c0_1 = arith.constant 0 : index
    %c0_2 = arith.constant 0 : index
    %1 = vector.load %arg6[%c0, %c0_0, %c0_1, %c0_2] : memref<2x10x10x4xbf16, #tpu.memory_space<vmem>>, vector<2x1x10x4xbf16>
    tpu.vector_store %arg6[%c0, %c0_0, %c0_1, %c0_2], %0 {strides = array<i32>} : memref<2x10x10x4xbf16, #tpu.memory_space<vmem>>, vector<2x1x10x4xbf16>,
    %c0_3 = arith.constant 0 : index
    %c9 = arith.constant 9 : index
    %c0_4 = arith.constant 0 : index
    %c0_5 = arith.constant 0 : index
    %2 = vector.load %arg6[%c0_3, %c9, %c0_4, %c0_5] : memref<2x10x10x4xbf16, #tpu.memory_space<vmem>>, vector<2x1x10x4xbf16>
    tpu.vector_store %arg6[%c0_3, %c9, %c0_4, %c0_5], %0 {strides = array<i32>} : memref<2x10x10x4xbf16, #tpu.memory_space<vmem>>, vector<2x1x10x4xbf16>,
    %cst_6 = arith.constant 0.000000e+00 : bf16
    %3 = vector.broadcast %cst_6 : bf16 to vector<2x10x1x4xbf16>
    %c0_7 = arith.constant 0 : index
    %c0_8 = arith.constant 0 : index
    %c0_9 = arith.constant 0 : index
    %c0_10 = arith.constant 0 : index
    %4 = vector.load %arg6[%c0_7, %c0_8, %c0_9, %c0_10] : memref<2x10x10x4xbf16, #tpu.memory_space<vmem>>, vector<2x10x1x4xbf16>
    tpu.vector_store %arg6[%c0_7, %c0_8, %c0_9, %c0_10], %3 {strides = array<i32>} : memref<2x10x10x4xbf16, #tpu.memory_space<vmem>>, vector<2x10x1x4xbf16>,
    %c0_11 = arith.constant 0 : index
    %c0_12 = arith.constant 0 : index
    %c9_13 = arith.constant 9 : index
    %c0_14 = arith.constant 0 : index
    %5 = vector.load %arg6[%c0_11, %c0_12, %c9_13, %c0_14] : memref<2x10x10x4xbf16, #tpu.memory_space<vmem>>, vector<2x10x1x4xbf16>
    tpu.vector_store %arg6[%c0_11, %c0_12, %c9_13, %c0_14], %3 {strides = array<i32>} : memref<2x10x10x4xbf16, #tpu.memory_space<vmem>>, vector<2x10x1x4xbf16>,
    %c0_15 = arith.constant 0 : index
    %c0_16 = arith.constant 0 : index
    %c0_17 = arith.constant 0 : index
    %c0_18 = arith.constant 0 : index
    %6 = vector.load %arg1[%c0_15, %c0_16, %c0_17, %c0_18] : memref<2x16x8x8xbf16, #tpu.memory_space<vmem>>, vector<2x16x8x8xbf16>
    %7 = vector.extract_strided_slice %6 {offsets = [0, 0, 0, 0], sizes = [2, 16, 8, 4], strides = [1, 1, 1, 1]} : vector<2x16x8x8xbf16> to vector<2x16x8x4xbf16>
    %8 = vector.extract_strided_slice %6 {offsets = [0, 0, 0, 4], sizes = [2, 16, 8, 4], strides = [1, 1, 1, 1]} : vector<2x16x8x8xbf16> to vector<2x16x8x4xbf16>
    %9 = arith.maximumf %7, %8 : vector<2x16x8x4xbf16>
    %10 = vector.shape_cast %9 : vector<2x16x8x4xbf16> to vector<16x2x8x4xbf16>
    %11 = vector.extract_strided_slice %10 {offsets = [0, 0, 0, 0], sizes = [16, 1, 8, 4], strides = [1, 1, 1, 1]} : vector<16x2x8x4xbf16> to vector<16x1x8x4xbf16>
    %12 = vector.shape_cast %11 : vector<16x1x8x4xbf16> to vector<16x8x4xbf16>
    %13 = vector.extract_strided_slice %10 {offsets = [0, 1, 0, 0], sizes = [16, 1, 8, 4], strides = [1, 1, 1, 1]} : vector<16x2x8x4xbf16> to vector<16x1x8x4xbf16>
    %14 = vector.shape_cast %13 : vector<16x1x8x4xbf16> to vector<16x8x4xbf16>
    %15 = arith.maximumf %12, %14 : vector<16x8x4xbf16>
    %16 = vector.shape_cast %15 : vector<16x8x4xbf16> to vector<2x8x8x4xbf16>
    %c0_19 = arith.constant 0 : index
    %c1 = arith.constant 1 : index
    %c1_20 = arith.constant 1 : index
    %c0_21 = arith.constant 0 : index
    %17 = vector.load %arg6[%c0_19, %c1, %c1_20, %c0_21] : memref<2x10x10x4xbf16, #tpu.memory_space<vmem>>, vector<2x8x8x4xbf16>
    tpu.vector_store %arg6[%c0_19, %c1, %c1_20, %c0_21], %16 {strides = array<i32>} : memref<2x10x10x4xbf16, #tpu.memory_space<vmem>>, vector<2x8x8x4xbf16>,
    %c0_22 = arith.constant 0 : index
    %c0_23 = arith.constant 0 : index
    %c0_24 = arith.constant 0 : index
    %c0_25 = arith.constant 0 : index
    %18 = vector.load %arg6[%c0_22, %c0_23, %c0_24, %c0_25] : memref<2x10x10x4xbf16, #tpu.memory_space<vmem>>, vector<2x8x8x4xbf16>
    %19 = vector.shape_cast %18 : vector<2x8x8x4xbf16> to vector<128x4xbf16>
    %c0_26 = arith.constant 0 : index
    %c0_27 = arith.constant 0 : index
    %20 = vector.load %arg7[%c0_26, %c0_27] : memref<128x36xbf16, #tpu.memory_space<vmem>>, vector<128x4xbf16>
    tpu.vector_store %arg7[%c0_26, %c0_27], %19 {strides = array<i32>} : memref<128x36xbf16, #tpu.memory_space<vmem>>, vector<128x4xbf16>,
    %c0_28 = arith.constant 0 : index
    %c0_29 = arith.constant 0 : index
    %c1_30 = arith.constant 1 : index
    %c0_31 = arith.constant 0 : index
    %21 = vector.load %arg6[%c0_28, %c0_29, %c1_30, %c0_31] : memref<2x10x10x4xbf16, #tpu.memory_space<vmem>>, vector<2x8x8x4xbf16>
    %22 = vector.shape_cast %21 : vector<2x8x8x4xbf16> to vector<128x4xbf16>
    %c0_32 = arith.constant 0 : index
    %c4 = arith.constant 4 : index
    %23 = vector.load %arg7[%c0_32, %c4] : memref<128x36xbf16, #tpu.memory_space<vmem>>, vector<128x4xbf16>
    tpu.vector_store %arg7[%c0_32, %c4], %22 {strides = array<i32>} : memref<128x36xbf16, #tpu.memory_space<vmem>>, vector<128x4xbf16>,
    %c0_33 = arith.constant 0 : index
    %c0_34 = arith.constant 0 : index
    %c2 = arith.constant 2 : index
    %c0_35 = arith.constant 0 : index
    %24 = vector.load %arg6[%c0_33, %c0_34, %c2, %c0_35] : memref<2x10x10x4xbf16, #tpu.memory_space<vmem>>, vector<2x8x8x4xbf16>
    %25 = vector.shape_cast %24 : vector<2x8x8x4xbf16> to vector<128x4xbf16>
    %c0_36 = arith.constant 0 : index
    %c8 = arith.constant 8 : index
    %26 = vector.load %arg7[%c0_36, %c8] : memref<128x36xbf16, #tpu.memory_space<vmem>>, vector<128x4xbf16>
    tpu.vector_store %arg7[%c0_36, %c8], %25 {strides = array<i32>} : memref<128x36xbf16, #tpu.memory_space<vmem>>, vector<128x4xbf16>,
    %c0_37 = arith.constant 0 : index
    %c1_38 = arith.constant 1 : index
    %c0_39 = arith.constant 0 : index
    %c0_40 = arith.constant 0 : index
    %27 = vector.load %arg6[%c0_37, %c1_38, %c0_39, %c0_40] : memref<2x10x10x4xbf16, #tpu.memory_space<vmem>>, vector<2x8x8x4xbf16>
    %28 = vector.shape_cast %27 : vector<2x8x8x4xbf16> to vector<128x4xbf16>
    %c0_41 = arith.constant 0 : index
    %c12 = arith.constant 12 : index
    %29 = vector.load %arg7[%c0_41, %c12] : memref<128x36xbf16, #tpu.memory_space<vmem>>, vector<128x4xbf16>
    tpu.vector_store %arg7[%c0_41, %c12], %28 {strides = array<i32>} : memref<128x36xbf16, #tpu.memory_space<vmem>>, vector<128x4xbf16>,
    %c0_42 = arith.constant 0 : index
    %c1_43 = arith.constant 1 : index
    %c1_44 = arith.constant 1 : index
    %c0_45 = arith.constant 0 : index
    %30 = vector.load %arg6[%c0_42, %c1_43, %c1_44, %c0_45] : memref<2x10x10x4xbf16, #tpu.memory_space<vmem>>, vector<2x8x8x4xbf16>
    %31 = vector.shape_cast %30 : vector<2x8x8x4xbf16> to vector<128x4xbf16>
    %c0_46 = arith.constant 0 : index
    %c16 = arith.constant 16 : index
    %32 = vector.load %arg7[%c0_46, %c16] : memref<128x36xbf16, #tpu.memory_space<vmem>>, vector<128x4xbf16>
    tpu.vector_store %arg7[%c0_46, %c16], %31 {strides = array<i32>} : memref<128x36xbf16, #tpu.memory_space<vmem>>, vector<128x4xbf16>,
    %c0_47 = arith.constant 0 : index
    %c1_48 = arith.constant 1 : index
    %c2_49 = arith.constant 2 : index
    %c0_50 = arith.constant 0 : index
    %33 = vector.load %arg6[%c0_47, %c1_48, %c2_49, %c0_50] : memref<2x10x10x4xbf16, #tpu.memory_space<vmem>>, vector<2x8x8x4xbf16>
    %34 = vector.shape_cast %33 : vector<2x8x8x4xbf16> to vector<128x4xbf16>
    %c0_51 = arith.constant 0 : index
    %c20 = arith.constant 20 : index
    %35 = vector.load %arg7[%c0_51, %c20] : memref<128x36xbf16, #tpu.memory_space<vmem>>, vector<128x4xbf16>
    tpu.vector_store %arg7[%c0_51, %c20], %34 {strides = array<i32>} : memref<128x36xbf16, #tpu.memory_space<vmem>>, vector<128x4xbf16>,
    %c0_52 = arith.constant 0 : index
    %c2_53 = arith.constant 2 : index
    %c0_54 = arith.constant 0 : index
    %c0_55 = arith.constant 0 : index
    %36 = vector.load %arg6[%c0_52, %c2_53, %c0_54, %c0_55] : memref<2x10x10x4xbf16, #tpu.memory_space<vmem>>, vector<2x8x8x4xbf16>
    %37 = vector.shape_cast %36 : vector<2x8x8x4xbf16> to vector<128x4xbf16>
    %c0_56 = arith.constant 0 : index
    %c24 = arith.constant 24 : index
    %38 = vector.load %arg7[%c0_56, %c24] : memref<128x36xbf16, #tpu.memory_space<vmem>>, vector<128x4xbf16>
    tpu.vector_store %arg7[%c0_56, %c24], %37 {strides = array<i32>} : memref<128x36xbf16, #tpu.memory_space<vmem>>, vector<128x4xbf16>,
    %c0_57 = arith.constant 0 : index
    %c2_58 = arith.constant 2 : index
    %c1_59 = arith.constant 1 : index
    %c0_60 = arith.constant 0 : index
    %39 = vector.load %arg6[%c0_57, %c2_58, %c1_59, %c0_60] : memref<2x10x10x4xbf16, #tpu.memory_space<vmem>>, vector<2x8x8x4xbf16>
    %40 = vector.shape_cast %39 : vector<2x8x8x4xbf16> to vector<128x4xbf16>
    %c0_61 = arith.constant 0 : index
    %c28 = arith.constant 28 : index
    %41 = vector.load %arg7[%c0_61, %c28] : memref<128x36xbf16, #tpu.memory_space<vmem>>, vector<128x4xbf16>
    tpu.vector_store %arg7[%c0_61, %c28], %40 {strides = array<i32>} : memref<128x36xbf16, #tpu.memory_space<vmem>>, vector<128x4xbf16>,
    %c0_62 = arith.constant 0 : index
    %c2_63 = arith.constant 2 : index
    %c2_64 = arith.constant 2 : index
    %c0_65 = arith.constant 0 : index
    %42 = vector.load %arg6[%c0_62, %c2_63, %c2_64, %c0_65] : memref<2x10x10x4xbf16, #tpu.memory_space<vmem>>, vector<2x8x8x4xbf16>
    %43 = vector.shape_cast %42 : vector<2x8x8x4xbf16> to vector<128x4xbf16>
    %c0_66 = arith.constant 0 : index
    %c32 = arith.constant 32 : index
    %44 = vector.load %arg7[%c0_66, %c32] : memref<128x36xbf16, #tpu.memory_space<vmem>>, vector<128x4xbf16>
    tpu.vector_store %arg7[%c0_66, %c32], %43 {strides = array<i32>} : memref<128x36xbf16, #tpu.memory_space<vmem>>, vector<128x4xbf16>,
    %c0_67 = arith.constant 0 : index
    %c0_68 = arith.constant 0 : index
    %45 = vector.load %arg7[%c0_67, %c0_68] : memref<128x36xbf16, #tpu.memory_space<vmem>>, vector<128x36xbf16>
    %c0_69 = arith.constant 0 : index
    %c0_70 = arith.constant 0 : index
    %46 = vector.load %arg2[%c0_69, %c0_70] : memref<36x8xbf16, #tpu.memory_space<vmem>>, vector<36x8xbf16>
    %cst_71 = arith.constant dense<0.000000e+00> : vector<128x8xf32>
    %47 = tpu.matmul %45, %46, %cst_71 {dimension_numbers = #tpu.dot_dimension_numbers<[1], [0], [0], [1], [0, 0, 1, 1], [], []>} : vector<128x36xbf16>, vector<36x8xbf16>, vector<128x8xf32> -> vector<128x8xf32>
    %48 = vector.shape_cast %47 : vector<128x8xf32> to vector<2x8x8x8xf32>
    %49 = arith.truncf %48 : vector<2x8x8x8xf32> to vector<2x8x8x8xbf16>
    %c0_72 = arith.constant 0 : index
    %c0_73 = arith.constant 0 : index
    %c0_74 = arith.constant 0 : index
    %c0_75 = arith.constant 0 : index
    %50 = vector.load %arg3[%c0_72, %c0_73, %c0_74, %c0_75] : memref<2x8x8x8xbf16, #tpu.memory_space<vmem>>, vector<2x8x8x8xbf16>
    tpu.vector_store %arg3[%c0_72, %c0_73, %c0_74, %c0_75], %49 {strides = array<i32>} : memref<2x8x8x8xbf16, #tpu.memory_space<vmem>>, vector<2x8x8x8xbf16>,
    %cst_76 = arith.constant dense<0.000000e+00> : vector<8xf32>
    %51 = vector.multi_reduction <add>, %47, %cst_76 [0] : vector<128x8xf32> to vector<8xf32>
    %52 = vector.shape_cast %51 : vector<8xf32> to vector<1x1x8xf32>
    %c0_77 = arith.constant 0 : index
    %c0_78 = arith.constant 0 : index
    %c0_79 = arith.constant 0 : index
    %53 = vector.load %arg4[%c0_77, %c0_78, %c0_79] : memref<1x1x8xf32, #tpu.memory_space<vmem>>, vector<1x1x8xf32>
    tpu.vector_store %arg4[%c0_77, %c0_78, %c0_79], %52 {strides = array<i32>} : memref<1x1x8xf32, #tpu.memory_space<vmem>>, vector<1x1x8xf32>,
    %54 = arith.mulf %47, %47 : vector<128x8xf32>
    %cst_80 = arith.constant dense<0.000000e+00> : vector<8xf32>
    %55 = vector.multi_reduction <add>, %54, %cst_80 [0] : vector<128x8xf32> to vector<8xf32>
    %56 = vector.shape_cast %55 : vector<8xf32> to vector<1x1x8xf32>
    %c0_81 = arith.constant 0 : index
    %c0_82 = arith.constant 0 : index
    %c0_83 = arith.constant 0 : index
    %57 = vector.load %arg5[%c0_81, %c0_82, %c0_83] : memref<1x1x8xf32, #tpu.memory_space<vmem>>, vector<1x1x8xf32>
    tpu.vector_store %arg5[%c0_81, %c0_82, %c0_83], %56 {strides = array<i32>} : memref<1x1x8xf32, #tpu.memory_space<vmem>>, vector<1x1x8xf32>,
    return
  }
  func.func @transform_0(%arg0: i32) -> (i32, i32, i32, i32) {
    %c0_i32 = arith.constant 0 : i32
    %c0_i32_0 = arith.constant 0 : i32
    %c0_i32_1 = arith.constant 0 : i32
    %c0_i32_2 = arith.constant 0 : i32
    return %arg0, %c0_i32, %c0_i32_0, %c0_i32_1 : i32, i32, i32, i32
  }
  func.func @transform_1(%arg0: i32) -> (i32, i32) {
    %c0_i32 = arith.constant 0 : i32
    %c0_i32_0 = arith.constant 0 : i32
    %c0_i32_1 = arith.constant 0 : i32
    return %c0_i32, %c0_i32_0 : i32, i32
  }
  func.func @transform_2(%arg0: i32) -> (i32, i32, i32, i32) {
    %c0_i32 = arith.constant 0 : i32
    %c0_i32_0 = arith.constant 0 : i32
    %c0_i32_1 = arith.constant 0 : i32
    %c0_i32_2 = arith.constant 0 : i32
    return %arg0, %c0_i32, %c0_i32_0, %c0_i32_1 : i32, i32, i32, i32
  }
  func.func @transform_3(%arg0: i32) -> (i32, i32, i32) {
    %c0_i32 = arith.constant 0 : i32
    %c0_i32_0 = arith.constant 0 : i32
    %c0_i32_1 = arith.constant 0 : i32
    return %arg0, %c0_i32, %c0_i32_0 : i32, i32, i32
  }
  func.func @transform_4(%arg0: i32) -> (i32, i32, i32) {
    %c0_i32 = arith.constant 0 : i32
    %c0_i32_0 = arith.constant 0 : i32
    %c0_i32_1 = arith.constant 0 : i32
    return %arg0, %c0_i32, %c0_i32_0 : i32, i32, i32
  }
}

module attributes {stable_mosaic.version = 11 : i64} {
  func.func @_bnrelu_kernel(%arg0: i32, %arg1: memref<2x8x8x8xbf16, #tpu.memory_space<vmem>>, %arg2: memref<1x1x1x8xf32, #tpu.memory_space<vmem>>, %arg3: memref<1x1x1x8xf32, #tpu.memory_space<vmem>>, %arg4: memref<2x8x8x8xf32, #tpu.memory_space<vmem>>) attributes {dimension_semantics = [#tpu.dimension_semantics<parallel>], iteration_bounds = array<i64: 1>, scalar_prefetch = 0 : i64, scratch_operands = 0 : i64, tpu.core_type = #tpu.core_type<tc>, window_params = [{transform_indices = @transform_0, window_bounds = array<i64: 2, 8, 8, 8>}, {pipeline_mode = #tpu.pipeline_mode<synchronous>, transform_indices = @transform_1, window_bounds = array<i64: 1, 1, 1, 8>}, {pipeline_mode = #tpu.pipeline_mode<synchronous>, transform_indices = @transform_2, window_bounds = array<i64: 1, 1, 1, 8>}, {transform_indices = @transform_3, window_bounds = array<i64: 2, 8, 8, 8>}]} {
    %c0 = arith.constant 0 : index
    %c0_0 = arith.constant 0 : index
    %c0_1 = arith.constant 0 : index
    %c0_2 = arith.constant 0 : index
    %0 = vector.load %arg1[%c0, %c0_0, %c0_1, %c0_2] : memref<2x8x8x8xbf16, #tpu.memory_space<vmem>>, vector<2x8x8x8xbf16>
    %1 = arith.extf %0 : vector<2x8x8x8xbf16> to vector<2x8x8x8xf32>
    %c0_3 = arith.constant 0 : index
    %c0_4 = arith.constant 0 : index
    %c0_5 = arith.constant 0 : index
    %c0_6 = arith.constant 0 : index
    %2 = vector.load %arg2[%c0_3, %c0_4, %c0_5, %c0_6] : memref<1x1x1x8xf32, #tpu.memory_space<vmem>>, vector<1x1x1x8xf32>
    %3 = vector.broadcast %2 : vector<1x1x1x8xf32> to vector<2x8x8x8xf32>
    %4 = arith.mulf %1, %3 : vector<2x8x8x8xf32>
    %c0_7 = arith.constant 0 : index
    %c0_8 = arith.constant 0 : index
    %c0_9 = arith.constant 0 : index
    %c0_10 = arith.constant 0 : index
    %5 = vector.load %arg3[%c0_7, %c0_8, %c0_9, %c0_10] : memref<1x1x1x8xf32, #tpu.memory_space<vmem>>, vector<1x1x1x8xf32>
    %6 = vector.broadcast %5 : vector<1x1x1x8xf32> to vector<2x8x8x8xf32>
    %7 = arith.addf %4, %6 : vector<2x8x8x8xf32>
    %cst = arith.constant 0.000000e+00 : f32
    %8 = vector.broadcast %cst : f32 to vector<2x8x8x8xf32>
    %9 = arith.maximumf %7, %8 : vector<2x8x8x8xf32>
    %c0_11 = arith.constant 0 : index
    %c0_12 = arith.constant 0 : index
    %c0_13 = arith.constant 0 : index
    %c0_14 = arith.constant 0 : index
    %10 = vector.load %arg4[%c0_11, %c0_12, %c0_13, %c0_14] : memref<2x8x8x8xf32, #tpu.memory_space<vmem>>, vector<2x8x8x8xf32>
    tpu.vector_store %arg4[%c0_11, %c0_12, %c0_13, %c0_14], %9 {strides = array<i32>} : memref<2x8x8x8xf32, #tpu.memory_space<vmem>>, vector<2x8x8x8xf32>,
    return
  }
  func.func @transform_0(%arg0: i32) -> (i32, i32, i32, i32) {
    %c0_i32 = arith.constant 0 : i32
    %c0_i32_0 = arith.constant 0 : i32
    %c0_i32_1 = arith.constant 0 : i32
    %c0_i32_2 = arith.constant 0 : i32
    return %arg0, %c0_i32, %c0_i32_0, %c0_i32_1 : i32, i32, i32, i32
  }
  func.func @transform_1(%arg0: i32) -> (i32, i32, i32, i32) {
    %c0_i32 = arith.constant 0 : i32
    %c0_i32_0 = arith.constant 0 : i32
    %c0_i32_1 = arith.constant 0 : i32
    %c0_i32_2 = arith.constant 0 : i32
    %c0_i32_3 = arith.constant 0 : i32
    return %c0_i32, %c0_i32_0, %c0_i32_1, %c0_i32_2 : i32, i32, i32, i32
  }
  func.func @transform_2(%arg0: i32) -> (i32, i32, i32, i32) {
    %c0_i32 = arith.constant 0 : i32
    %c0_i32_0 = arith.constant 0 : i32
    %c0_i32_1 = arith.constant 0 : i32
    %c0_i32_2 = arith.constant 0 : i32
    %c0_i32_3 = arith.constant 0 : i32
    return %c0_i32, %c0_i32_0, %c0_i32_1, %c0_i32_2 : i32, i32, i32, i32
  }
  func.func @transform_3(%arg0: i32) -> (i32, i32, i32, i32) {
    %c0_i32 = arith.constant 0 : i32
    %c0_i32_0 = arith.constant 0 : i32
    %c0_i32_1 = arith.constant 0 : i32
    %c0_i32_2 = arith.constant 0 : i32
    return %arg0, %c0_i32, %c0_i32_0, %c0_i32_1 : i32, i32, i32, i32
  }
}

module attributes {stable_mosaic.version = 11 : i64} {
  func.func @_bnrelu_conv_kernel(%arg0: i32, %arg1: memref<2x8x8x8xbf16, #tpu.memory_space<vmem>>, %arg2: memref<1x1x1x8xf32, #tpu.memory_space<vmem>>, %arg3: memref<1x1x1x8xf32, #tpu.memory_space<vmem>>, %arg4: memref<72x8xbf16, #tpu.memory_space<vmem>>, %arg5: memref<2x8x8x8xbf16, #tpu.memory_space<vmem>>, %arg6: memref<1x1x8xf32, #tpu.memory_space<vmem>>, %arg7: memref<1x1x8xf32, #tpu.memory_space<vmem>>, %arg8: memref<2x10x10x8xbf16, #tpu.memory_space<vmem>>, %arg9: memref<128x72xbf16, #tpu.memory_space<vmem>>) attributes {dimension_semantics = [#tpu.dimension_semantics<parallel>], iteration_bounds = array<i64: 1>, scalar_prefetch = 0 : i64, scratch_operands = 2 : i64, tpu.core_type = #tpu.core_type<tc>, window_params = [{transform_indices = @transform_0, window_bounds = array<i64: 2, 8, 8, 8>}, {pipeline_mode = #tpu.pipeline_mode<synchronous>, transform_indices = @transform_1, window_bounds = array<i64: 1, 1, 1, 8>}, {pipeline_mode = #tpu.pipeline_mode<synchronous>, transform_indices = @transform_2, window_bounds = array<i64: 1, 1, 1, 8>}, {pipeline_mode = #tpu.pipeline_mode<synchronous>, transform_indices = @transform_3, window_bounds = array<i64: 72, 8>}, {transform_indices = @transform_4, window_bounds = array<i64: 2, 8, 8, 8>}, {transform_indices = @transform_5, window_bounds = array<i64: 1, 1, 8>}, {transform_indices = @transform_6, window_bounds = array<i64: 1, 1, 8>}]} {
    %cst = arith.constant 0.000000e+00 : bf16
    %0 = vector.broadcast %cst : bf16 to vector<2x1x10x8xbf16>
    %c0 = arith.constant 0 : index
    %c0_0 = arith.constant 0 : index
    %c0_1 = arith.constant 0 : index
    %c0_2 = arith.constant 0 : index
    %1 = vector.load %arg8[%c0, %c0_0, %c0_1, %c0_2] : memref<2x10x10x8xbf16, #tpu.memory_space<vmem>>, vector<2x1x10x8xbf16>
    tpu.vector_store %arg8[%c0, %c0_0, %c0_1, %c0_2], %0 {strides = array<i32>} : memref<2x10x10x8xbf16, #tpu.memory_space<vmem>>, vector<2x1x10x8xbf16>,
    %c0_3 = arith.constant 0 : index
    %c9 = arith.constant 9 : index
    %c0_4 = arith.constant 0 : index
    %c0_5 = arith.constant 0 : index
    %2 = vector.load %arg8[%c0_3, %c9, %c0_4, %c0_5] : memref<2x10x10x8xbf16, #tpu.memory_space<vmem>>, vector<2x1x10x8xbf16>
    tpu.vector_store %arg8[%c0_3, %c9, %c0_4, %c0_5], %0 {strides = array<i32>} : memref<2x10x10x8xbf16, #tpu.memory_space<vmem>>, vector<2x1x10x8xbf16>,
    %cst_6 = arith.constant 0.000000e+00 : bf16
    %3 = vector.broadcast %cst_6 : bf16 to vector<2x10x1x8xbf16>
    %c0_7 = arith.constant 0 : index
    %c0_8 = arith.constant 0 : index
    %c0_9 = arith.constant 0 : index
    %c0_10 = arith.constant 0 : index
    %4 = vector.load %arg8[%c0_7, %c0_8, %c0_9, %c0_10] : memref<2x10x10x8xbf16, #tpu.memory_space<vmem>>, vector<2x10x1x8xbf16>
    tpu.vector_store %arg8[%c0_7, %c0_8, %c0_9, %c0_10], %3 {strides = array<i32>} : memref<2x10x10x8xbf16, #tpu.memory_space<vmem>>, vector<2x10x1x8xbf16>,
    %c0_11 = arith.constant 0 : index
    %c0_12 = arith.constant 0 : index
    %c9_13 = arith.constant 9 : index
    %c0_14 = arith.constant 0 : index
    %5 = vector.load %arg8[%c0_11, %c0_12, %c9_13, %c0_14] : memref<2x10x10x8xbf16, #tpu.memory_space<vmem>>, vector<2x10x1x8xbf16>
    tpu.vector_store %arg8[%c0_11, %c0_12, %c9_13, %c0_14], %3 {strides = array<i32>} : memref<2x10x10x8xbf16, #tpu.memory_space<vmem>>, vector<2x10x1x8xbf16>,
    %c0_15 = arith.constant 0 : index
    %c0_16 = arith.constant 0 : index
    %c0_17 = arith.constant 0 : index
    %c0_18 = arith.constant 0 : index
    %6 = vector.load %arg1[%c0_15, %c0_16, %c0_17, %c0_18] : memref<2x8x8x8xbf16, #tpu.memory_space<vmem>>, vector<2x8x8x8xbf16>
    %7 = arith.extf %6 : vector<2x8x8x8xbf16> to vector<2x8x8x8xf32>
    %c0_19 = arith.constant 0 : index
    %c0_20 = arith.constant 0 : index
    %c0_21 = arith.constant 0 : index
    %c0_22 = arith.constant 0 : index
    %8 = vector.load %arg2[%c0_19, %c0_20, %c0_21, %c0_22] : memref<1x1x1x8xf32, #tpu.memory_space<vmem>>, vector<1x1x1x8xf32>
    %9 = vector.broadcast %8 : vector<1x1x1x8xf32> to vector<2x8x8x8xf32>
    %10 = arith.mulf %7, %9 : vector<2x8x8x8xf32>
    %c0_23 = arith.constant 0 : index
    %c0_24 = arith.constant 0 : index
    %c0_25 = arith.constant 0 : index
    %c0_26 = arith.constant 0 : index
    %11 = vector.load %arg3[%c0_23, %c0_24, %c0_25, %c0_26] : memref<1x1x1x8xf32, #tpu.memory_space<vmem>>, vector<1x1x1x8xf32>
    %12 = vector.broadcast %11 : vector<1x1x1x8xf32> to vector<2x8x8x8xf32>
    %13 = arith.addf %10, %12 : vector<2x8x8x8xf32>
    %cst_27 = arith.constant 0.000000e+00 : f32
    %14 = vector.broadcast %cst_27 : f32 to vector<2x8x8x8xf32>
    %15 = arith.maximumf %13, %14 : vector<2x8x8x8xf32>
    %16 = arith.truncf %15 : vector<2x8x8x8xf32> to vector<2x8x8x8xbf16>
    %c0_28 = arith.constant 0 : index
    %c1 = arith.constant 1 : index
    %c1_29 = arith.constant 1 : index
    %c0_30 = arith.constant 0 : index
    %17 = vector.load %arg8[%c0_28, %c1, %c1_29, %c0_30] : memref<2x10x10x8xbf16, #tpu.memory_space<vmem>>, vector<2x8x8x8xbf16>
    tpu.vector_store %arg8[%c0_28, %c1, %c1_29, %c0_30], %16 {strides = array<i32>} : memref<2x10x10x8xbf16, #tpu.memory_space<vmem>>, vector<2x8x8x8xbf16>,
    %c0_31 = arith.constant 0 : index
    %c0_32 = arith.constant 0 : index
    %c0_33 = arith.constant 0 : index
    %c0_34 = arith.constant 0 : index
    %18 = vector.load %arg8[%c0_31, %c0_32, %c0_33, %c0_34] : memref<2x10x10x8xbf16, #tpu.memory_space<vmem>>, vector<2x8x8x8xbf16>
    %19 = vector.shape_cast %18 : vector<2x8x8x8xbf16> to vector<128x8xbf16>
    %c0_35 = arith.constant 0 : index
    %c0_36 = arith.constant 0 : index
    %20 = vector.load %arg9[%c0_35, %c0_36] : memref<128x72xbf16, #tpu.memory_space<vmem>>, vector<128x8xbf16>
    tpu.vector_store %arg9[%c0_35, %c0_36], %19 {strides = array<i32>} : memref<128x72xbf16, #tpu.memory_space<vmem>>, vector<128x8xbf16>,
    %c0_37 = arith.constant 0 : index
    %c0_38 = arith.constant 0 : index
    %c1_39 = arith.constant 1 : index
    %c0_40 = arith.constant 0 : index
    %21 = vector.load %arg8[%c0_37, %c0_38, %c1_39, %c0_40] : memref<2x10x10x8xbf16, #tpu.memory_space<vmem>>, vector<2x8x8x8xbf16>
    %22 = vector.shape_cast %21 : vector<2x8x8x8xbf16> to vector<128x8xbf16>
    %c0_41 = arith.constant 0 : index
    %c8 = arith.constant 8 : index
    %23 = vector.load %arg9[%c0_41, %c8] : memref<128x72xbf16, #tpu.memory_space<vmem>>, vector<128x8xbf16>
    tpu.vector_store %arg9[%c0_41, %c8], %22 {strides = array<i32>} : memref<128x72xbf16, #tpu.memory_space<vmem>>, vector<128x8xbf16>,
    %c0_42 = arith.constant 0 : index
    %c0_43 = arith.constant 0 : index
    %c2 = arith.constant 2 : index
    %c0_44 = arith.constant 0 : index
    %24 = vector.load %arg8[%c0_42, %c0_43, %c2, %c0_44] : memref<2x10x10x8xbf16, #tpu.memory_space<vmem>>, vector<2x8x8x8xbf16>
    %25 = vector.shape_cast %24 : vector<2x8x8x8xbf16> to vector<128x8xbf16>
    %c0_45 = arith.constant 0 : index
    %c16 = arith.constant 16 : index
    %26 = vector.load %arg9[%c0_45, %c16] : memref<128x72xbf16, #tpu.memory_space<vmem>>, vector<128x8xbf16>
    tpu.vector_store %arg9[%c0_45, %c16], %25 {strides = array<i32>} : memref<128x72xbf16, #tpu.memory_space<vmem>>, vector<128x8xbf16>,
    %c0_46 = arith.constant 0 : index
    %c1_47 = arith.constant 1 : index
    %c0_48 = arith.constant 0 : index
    %c0_49 = arith.constant 0 : index
    %27 = vector.load %arg8[%c0_46, %c1_47, %c0_48, %c0_49] : memref<2x10x10x8xbf16, #tpu.memory_space<vmem>>, vector<2x8x8x8xbf16>
    %28 = vector.shape_cast %27 : vector<2x8x8x8xbf16> to vector<128x8xbf16>
    %c0_50 = arith.constant 0 : index
    %c24 = arith.constant 24 : index
    %29 = vector.load %arg9[%c0_50, %c24] : memref<128x72xbf16, #tpu.memory_space<vmem>>, vector<128x8xbf16>
    tpu.vector_store %arg9[%c0_50, %c24], %28 {strides = array<i32>} : memref<128x72xbf16, #tpu.memory_space<vmem>>, vector<128x8xbf16>,
    %c0_51 = arith.constant 0 : index
    %c1_52 = arith.constant 1 : index
    %c1_53 = arith.constant 1 : index
    %c0_54 = arith.constant 0 : index
    %30 = vector.load %arg8[%c0_51, %c1_52, %c1_53, %c0_54] : memref<2x10x10x8xbf16, #tpu.memory_space<vmem>>, vector<2x8x8x8xbf16>
    %31 = vector.shape_cast %30 : vector<2x8x8x8xbf16> to vector<128x8xbf16>
    %c0_55 = arith.constant 0 : index
    %c32 = arith.constant 32 : index
    %32 = vector.load %arg9[%c0_55, %c32] : memref<128x72xbf16, #tpu.memory_space<vmem>>, vector<128x8xbf16>
    tpu.vector_store %arg9[%c0_55, %c32], %31 {strides = array<i32>} : memref<128x72xbf16, #tpu.memory_space<vmem>>, vector<128x8xbf16>,
    %c0_56 = arith.constant 0 : index
    %c1_57 = arith.constant 1 : index
    %c2_58 = arith.constant 2 : index
    %c0_59 = arith.constant 0 : index
    %33 = vector.load %arg8[%c0_56, %c1_57, %c2_58, %c0_59] : memref<2x10x10x8xbf16, #tpu.memory_space<vmem>>, vector<2x8x8x8xbf16>
    %34 = vector.shape_cast %33 : vector<2x8x8x8xbf16> to vector<128x8xbf16>
    %c0_60 = arith.constant 0 : index
    %c40 = arith.constant 40 : index
    %35 = vector.load %arg9[%c0_60, %c40] : memref<128x72xbf16, #tpu.memory_space<vmem>>, vector<128x8xbf16>
    tpu.vector_store %arg9[%c0_60, %c40], %34 {strides = array<i32>} : memref<128x72xbf16, #tpu.memory_space<vmem>>, vector<128x8xbf16>,
    %c0_61 = arith.constant 0 : index
    %c2_62 = arith.constant 2 : index
    %c0_63 = arith.constant 0 : index
    %c0_64 = arith.constant 0 : index
    %36 = vector.load %arg8[%c0_61, %c2_62, %c0_63, %c0_64] : memref<2x10x10x8xbf16, #tpu.memory_space<vmem>>, vector<2x8x8x8xbf16>
    %37 = vector.shape_cast %36 : vector<2x8x8x8xbf16> to vector<128x8xbf16>
    %c0_65 = arith.constant 0 : index
    %c48 = arith.constant 48 : index
    %38 = vector.load %arg9[%c0_65, %c48] : memref<128x72xbf16, #tpu.memory_space<vmem>>, vector<128x8xbf16>
    tpu.vector_store %arg9[%c0_65, %c48], %37 {strides = array<i32>} : memref<128x72xbf16, #tpu.memory_space<vmem>>, vector<128x8xbf16>,
    %c0_66 = arith.constant 0 : index
    %c2_67 = arith.constant 2 : index
    %c1_68 = arith.constant 1 : index
    %c0_69 = arith.constant 0 : index
    %39 = vector.load %arg8[%c0_66, %c2_67, %c1_68, %c0_69] : memref<2x10x10x8xbf16, #tpu.memory_space<vmem>>, vector<2x8x8x8xbf16>
    %40 = vector.shape_cast %39 : vector<2x8x8x8xbf16> to vector<128x8xbf16>
    %c0_70 = arith.constant 0 : index
    %c56 = arith.constant 56 : index
    %41 = vector.load %arg9[%c0_70, %c56] : memref<128x72xbf16, #tpu.memory_space<vmem>>, vector<128x8xbf16>
    tpu.vector_store %arg9[%c0_70, %c56], %40 {strides = array<i32>} : memref<128x72xbf16, #tpu.memory_space<vmem>>, vector<128x8xbf16>,
    %c0_71 = arith.constant 0 : index
    %c2_72 = arith.constant 2 : index
    %c2_73 = arith.constant 2 : index
    %c0_74 = arith.constant 0 : index
    %42 = vector.load %arg8[%c0_71, %c2_72, %c2_73, %c0_74] : memref<2x10x10x8xbf16, #tpu.memory_space<vmem>>, vector<2x8x8x8xbf16>
    %43 = vector.shape_cast %42 : vector<2x8x8x8xbf16> to vector<128x8xbf16>
    %c0_75 = arith.constant 0 : index
    %c64 = arith.constant 64 : index
    %44 = vector.load %arg9[%c0_75, %c64] : memref<128x72xbf16, #tpu.memory_space<vmem>>, vector<128x8xbf16>
    tpu.vector_store %arg9[%c0_75, %c64], %43 {strides = array<i32>} : memref<128x72xbf16, #tpu.memory_space<vmem>>, vector<128x8xbf16>,
    %c0_76 = arith.constant 0 : index
    %c0_77 = arith.constant 0 : index
    %45 = vector.load %arg9[%c0_76, %c0_77] : memref<128x72xbf16, #tpu.memory_space<vmem>>, vector<128x72xbf16>
    %c0_78 = arith.constant 0 : index
    %c0_79 = arith.constant 0 : index
    %46 = vector.load %arg4[%c0_78, %c0_79] : memref<72x8xbf16, #tpu.memory_space<vmem>>, vector<72x8xbf16>
    %cst_80 = arith.constant dense<0.000000e+00> : vector<128x8xf32>
    %47 = tpu.matmul %45, %46, %cst_80 {dimension_numbers = #tpu.dot_dimension_numbers<[1], [0], [0], [1], [0, 0, 1, 1], [], []>} : vector<128x72xbf16>, vector<72x8xbf16>, vector<128x8xf32> -> vector<128x8xf32>
    %48 = vector.shape_cast %47 : vector<128x8xf32> to vector<2x8x8x8xf32>
    %49 = arith.truncf %48 : vector<2x8x8x8xf32> to vector<2x8x8x8xbf16>
    %c0_81 = arith.constant 0 : index
    %c0_82 = arith.constant 0 : index
    %c0_83 = arith.constant 0 : index
    %c0_84 = arith.constant 0 : index
    %50 = vector.load %arg5[%c0_81, %c0_82, %c0_83, %c0_84] : memref<2x8x8x8xbf16, #tpu.memory_space<vmem>>, vector<2x8x8x8xbf16>
    tpu.vector_store %arg5[%c0_81, %c0_82, %c0_83, %c0_84], %49 {strides = array<i32>} : memref<2x8x8x8xbf16, #tpu.memory_space<vmem>>, vector<2x8x8x8xbf16>,
    %cst_85 = arith.constant dense<0.000000e+00> : vector<8xf32>
    %51 = vector.multi_reduction <add>, %47, %cst_85 [0] : vector<128x8xf32> to vector<8xf32>
    %52 = vector.shape_cast %51 : vector<8xf32> to vector<1x1x8xf32>
    %c0_86 = arith.constant 0 : index
    %c0_87 = arith.constant 0 : index
    %c0_88 = arith.constant 0 : index
    %53 = vector.load %arg6[%c0_86, %c0_87, %c0_88] : memref<1x1x8xf32, #tpu.memory_space<vmem>>, vector<1x1x8xf32>
    tpu.vector_store %arg6[%c0_86, %c0_87, %c0_88], %52 {strides = array<i32>} : memref<1x1x8xf32, #tpu.memory_space<vmem>>, vector<1x1x8xf32>,
    %54 = arith.mulf %47, %47 : vector<128x8xf32>
    %cst_89 = arith.constant dense<0.000000e+00> : vector<8xf32>
    %55 = vector.multi_reduction <add>, %54, %cst_89 [0] : vector<128x8xf32> to vector<8xf32>
    %56 = vector.shape_cast %55 : vector<8xf32> to vector<1x1x8xf32>
    %c0_90 = arith.constant 0 : index
    %c0_91 = arith.constant 0 : index
    %c0_92 = arith.constant 0 : index
    %57 = vector.load %arg7[%c0_90, %c0_91, %c0_92] : memref<1x1x8xf32, #tpu.memory_space<vmem>>, vector<1x1x8xf32>
    tpu.vector_store %arg7[%c0_90, %c0_91, %c0_92], %56 {strides = array<i32>} : memref<1x1x8xf32, #tpu.memory_space<vmem>>, vector<1x1x8xf32>,
    return
  }
  func.func @transform_0(%arg0: i32) -> (i32, i32, i32, i32) {
    %c0_i32 = arith.constant 0 : i32
    %c0_i32_0 = arith.constant 0 : i32
    %c0_i32_1 = arith.constant 0 : i32
    %c0_i32_2 = arith.constant 0 : i32
    return %arg0, %c0_i32, %c0_i32_0, %c0_i32_1 : i32, i32, i32, i32
  }
  func.func @transform_1(%arg0: i32) -> (i32, i32, i32, i32) {
    %c0_i32 = arith.constant 0 : i32
    %c0_i32_0 = arith.constant 0 : i32
    %c0_i32_1 = arith.constant 0 : i32
    %c0_i32_2 = arith.constant 0 : i32
    %c0_i32_3 = arith.constant 0 : i32
    return %c0_i32, %c0_i32_0, %c0_i32_1, %c0_i32_2 : i32, i32, i32, i32
  }
  func.func @transform_2(%arg0: i32) -> (i32, i32, i32, i32) {
    %c0_i32 = arith.constant 0 : i32
    %c0_i32_0 = arith.constant 0 : i32
    %c0_i32_1 = arith.constant 0 : i32
    %c0_i32_2 = arith.constant 0 : i32
    %c0_i32_3 = arith.constant 0 : i32
    return %c0_i32, %c0_i32_0, %c0_i32_1, %c0_i32_2 : i32, i32, i32, i32
  }
  func.func @transform_3(%arg0: i32) -> (i32, i32) {
    %c0_i32 = arith.constant 0 : i32
    %c0_i32_0 = arith.constant 0 : i32
    %c0_i32_1 = arith.constant 0 : i32
    return %c0_i32, %c0_i32_0 : i32, i32
  }
  func.func @transform_4(%arg0: i32) -> (i32, i32, i32, i32) {
    %c0_i32 = arith.constant 0 : i32
    %c0_i32_0 = arith.constant 0 : i32
    %c0_i32_1 = arith.constant 0 : i32
    %c0_i32_2 = arith.constant 0 : i32
    return %arg0, %c0_i32, %c0_i32_0, %c0_i32_1 : i32, i32, i32, i32
  }
  func.func @transform_5(%arg0: i32) -> (i32, i32, i32) {
    %c0_i32 = arith.constant 0 : i32
    %c0_i32_0 = arith.constant 0 : i32
    %c0_i32_1 = arith.constant 0 : i32
    return %arg0, %c0_i32, %c0_i32_0 : i32, i32, i32
  }
  func.func @transform_6(%arg0: i32) -> (i32, i32, i32) {
    %c0_i32 = arith.constant 0 : i32
    %c0_i32_0 = arith.constant 0 : i32
    %c0_i32_1 = arith.constant 0 : i32
    return %arg0, %c0_i32, %c0_i32_0 : i32, i32, i32
  }
}

</mosaic_0001>

<llo_original>
// kernel: down_forward.5
$region0: #{down_forward.5}
  #allocation0 [shape = 'u32[]', space=smem, size = 0x4, offset = 0x4, fixed_abs, tag = 'smem constant byte address 0x4 - core index']
  #allocation1 [shape = 'u32[72,128]{1,0:T(1,128)}', space=vmem, size = 0x9000, scoped, tag = 'internal scratch']
  %s0 = inlined_call_operand.vmem [shape: bf16[2,8,8,8], index: 0, kind: input, shape index: {}]
  %s1 = inlined_call_operand.vmem [shape: f32[1,1,1,8], index: 1, kind: input, shape index: {}]
  %s2 = inlined_call_operand.vmem [shape: f32[1,1,1,8], index: 2, kind: input, shape index: {}]
  %s3 = inlined_call_operand.vmem [shape: f32[2,8,8,8], index: 3, kind: output, shape index: {}]
  %s4 = sld [smem:[#allocation0]]
  $region22: #{down_forward.5} parent=0
    _
  %s6 = ssub.s32 1, %s4
  %s7 = scalar_select 0, %s6, %s4
  // Predicated region
  $region2: #{down_forward.5} parent=0 // pred_check
    _
  $region3: #{down_forward.5} parent=0 // pred_check_branch
    %9 = sbr.rel (0) target = $region5
  $region4: #{down_forward.5} parent=0 // pred_region
    _
  $region5: #{down_forward.5} parent=0 // pred_fallthru
    _
  // Predicated region
  $region6: #{down_forward.5} parent=0 // pred_check
    _
  $region7: #{down_forward.5} parent=0 // pred_check_branch
    %11 = sbr.rel (0) target = $region9
  $region8: #{down_forward.5} parent=0 // pred_region
    _
  $region9: #{down_forward.5} parent=0 // pred_fallthru
    _
  // Predicated region
  $region10: #{down_forward.5} parent=0 // pred_check
    _
  $region11: #{down_forward.5} parent=0 // pred_check_branch
    %13 = sbr.rel (0) target = $region13
  $region12: #{down_forward.5} parent=0 // pred_region
    _
  $region13: #{down_forward.5} parent=0 // pred_fallthru
    _
  %v14 = vld [vmem:[%s0] sm:$0xf]
  %v15 = vld [vmem:[%s0 + $0x4] sm:$0xf]
  %v16 = vld [vmem:[%s0 + $0x8] sm:$0xf]
  %v17 = vld [vmem:[%s0 + $0xc] sm:$0xf]
  %v18 = vld [vmem:[%s0 + $0x10] sm:$0xf]
  %v19 = vld [vmem:[%s0 + $0x14] sm:$0xf]
  %v20 = vld [vmem:[%s0 + $0x18] sm:$0xf]
  %v21 = vld [vmem:[%s0 + $0x1c] sm:$0xf]
  %v22 = vld [vmem:[%s0 + $0x20] sm:$0xf]
  %v23 = vld [vmem:[%s0 + $0x24] sm:$0xf]
  %v24 = vld [vmem:[%s0 + $0x28] sm:$0xf]
  %v25 = vld [vmem:[%s0 + $0x2c] sm:$0xf]
  %v26 = vld [vmem:[%s0 + $0x30] sm:$0xf]
  %v27 = vld [vmem:[%s0 + $0x34] sm:$0xf]
  %v28 = vld [vmem:[%s0 + $0x38] sm:$0xf]
  %v29 = vld [vmem:[%s0 + $0x3c] sm:$0xf]
  %v30 = vunpack.c.l.bf16 %v14
  %v31 = vunpack.c.l.bf16 %v15
  %v32 = vunpack.c.l.bf16 %v16
  %v33 = vunpack.c.l.bf16 %v17
  %v34 = vunpack.c.l.bf16 %v18
  %v35 = vunpack.c.l.bf16 %v19
  %v36 = vunpack.c.l.bf16 %v20
  %v37 = vunpack.c.l.bf16 %v21
  %v38 = vunpack.c.l.bf16 %v22
  %v39 = vunpack.c.l.bf16 %v23
  %v40 = vunpack.c.l.bf16 %v24
  %v41 = vunpack.c.l.bf16 %v25
  %v42 = vunpack.c.l.bf16 %v26
  %v43 = vunpack.c.l.bf16 %v27
  %v44 = vunpack.c.l.bf16 %v28
  %v45 = vunpack.c.l.bf16 %v29
  %v46 = vld [vmem:[%s1] sm:$0x1]
  %v48 = vperm.slane %v46, 0
  %v50 = vmul.f32 %v30, %v48
  %v51 = vmul.f32 %v31, %v48
  %v52 = vmul.f32 %v32, %v48
  %v53 = vmul.f32 %v33, %v48
  %v54 = vmul.f32 %v34, %v48
  %v55 = vmul.f32 %v35, %v48
  %v56 = vmul.f32 %v36, %v48
  %v57 = vmul.f32 %v37, %v48
  %v58 = vmul.f32 %v38, %v48
  %v59 = vmul.f32 %v39, %v48
  %v60 = vmul.f32 %v40, %v48
  %v61 = vmul.f32 %v41, %v48
  %v62 = vmul.f32 %v42, %v48
  %v63 = vmul.f32 %v43, %v48
  %v64 = vmul.f32 %v44, %v48
  %v65 = vmul.f32 %v45, %v48
  %v66 = vld [vmem:[%s2] sm:$0x1]
  %v68 = vperm.slane %v66, 0
  %v70 = vadd.f32 %v50, %v68
  %v71 = vadd.f32 %v51, %v68
  %v72 = vadd.f32 %v52, %v68
  %v73 = vadd.f32 %v53, %v68
  %v74 = vadd.f32 %v54, %v68
  %v75 = vadd.f32 %v55, %v68
  %v76 = vadd.f32 %v56, %v68
  %v77 = vadd.f32 %v57, %v68
  %v78 = vadd.f32 %v58, %v68
  %v79 = vadd.f32 %v59, %v68
  %v80 = vadd.f32 %v60, %v68
  %v81 = vadd.f32 %v61, %v68
  %v82 = vadd.f32 %v62, %v68
  %v83 = vadd.f32 %v63, %v68
  %v84 = vadd.f32 %v64, %v68
  %v85 = vadd.f32 %v65, %v68
  %v86 = vmax.f32 %v70, 0.0
  %v87 = vmax.f32 %v71, 0.0
  %v88 = vmax.f32 %v72, 0.0
  %v89 = vmax.f32 %v73, 0.0
  %v90 = vmax.f32 %v74, 0.0
  %v91 = vmax.f32 %v75, 0.0
  %v92 = vmax.f32 %v76, 0.0
  %v93 = vmax.f32 %v77, 0.0
  %v94 = vmax.f32 %v78, 0.0
  %v95 = vmax.f32 %v79, 0.0
  %v96 = vmax.f32 %v80, 0.0
  %v97 = vmax.f32 %v81, 0.0
  %v98 = vmax.f32 %v82, 0.0
  %v99 = vmax.f32 %v83, 0.0
  %v100 = vmax.f32 %v84, 0.0
  %v101 = vmax.f32 %v85, 0.0
  %vm102 = vcmask 64512
  %103 = vst.msk [vmem:[%s3] sm:$0xff] %vm102, %v86
  %104 = vst.msk [vmem:[%s3 + $0x8] sm:$0xff] %vm102, %v87
  %105 = vst.msk [vmem:[%s3 + $0x10] sm:$0xff] %vm102, %v88
  %106 = vst.msk [vmem:[%s3 + $0x18] sm:$0xff] %vm102, %v89
  %107 = vst.msk [vmem:[%s3 + $0x20] sm:$0xff] %vm102, %v90
  %108 = vst.msk [vmem:[%s3 + $0x28] sm:$0xff] %vm102, %v91
  %109 = vst.msk [vmem:[%s3 + $0x30] sm:$0xff] %vm102, %v92
  %110 = vst.msk [vmem:[%s3 + $0x38] sm:$0xff] %vm102, %v93
  %111 = vst.msk [vmem:[%s3 + $0x40] sm:$0xff] %vm102, %v94
  %112 = vst.msk [vmem:[%s3 + $0x48] sm:$0xff] %vm102, %v95
  %113 = vst.msk [vmem:[%s3 + $0x50] sm:$0xff] %vm102, %v96
  %114 = vst.msk [vmem:[%s3 + $0x58] sm:$0xff] %vm102, %v97
  %115 = vst.msk [vmem:[%s3 + $0x60] sm:$0xff] %vm102, %v98
  %116 = vst.msk [vmem:[%s3 + $0x68] sm:$0xff] %vm102, %v99
  %117 = vst.msk [vmem:[%s3 + $0x70] sm:$0xff] %vm102, %v100
  %118 = vst.msk [vmem:[%s3 + $0x78] sm:$0xff] %vm102, %v101
  // Predicated region
  $region14: #{down_forward.5} parent=0 // pred_check
    _
  $region15: #{down_forward.5} parent=0 // pred_check_branch
    %120 = sbr.rel (0) target = $region17
  $region16: #{down_forward.5} parent=0 // pred_region
    _
  $region17: #{down_forward.5} parent=0 // pred_fallthru
    _
  // Predicated region
  $region18: #{down_forward.5} parent=0 // pred_check
    _
  $region19: #{down_forward.5} parent=0 // pred_check_branch
    %122 = sbr.rel (0) target = $region21
  $region20: #{down_forward.5} parent=0 // pred_region
    _
  $region21: #{down_forward.5} parent=0 // pred_fallthru
    _

// kernel: down_forward.4
$region0: #{down_forward.4}
  #allocation0 [shape = 'u32[]', space=smem, size = 0x4, offset = 0x4, fixed_abs, tag = 'smem constant byte address 0x4 - core index']
  #allocation1 [shape = 'u32[72,128]{1,0:T(1,128)}', space=vmem, size = 0x9000, scoped, tag = 'internal scratch']
  #allocation2 [shape = 'bf16[2,10,10,8]{3,2,1,0:T(8,128)(2,1)}', space=vmem, size = 0x14000, scoped, tag = 'scratch operand']
  #allocation3 [shape = 'bf16[128,72]{1,0:T(8,128)(2,1)}', space=vmem, size = 0x8000, scoped, tag = 'scratch operand']
  %s0 = inlined_call_operand.vmem [shape: bf16[2,8,8,8], index: 0, kind: input, shape index: {}]
  %s1 = inlined_call_operand.vmem [shape: f32[1,1,1,8], index: 1, kind: input, shape index: {}]
  %s2 = inlined_call_operand.vmem [shape: f32[1,1,1,8], index: 2, kind: input, shape index: {}]
  %s3 = inlined_call_operand.vmem [shape: bf16[72,8], index: 3, kind: input, shape index: {}]
  %s4 = inlined_call_operand.vmem [shape: bf16[2,8,8,8], index: 4, kind: output, shape index: {0}]
  %s5 = inlined_call_operand.vmem [shape: f32[1,1,8], index: 5, kind: output, shape index: {1}]
  %s6 = inlined_call_operand.vmem [shape: f32[1,1,8], index: 6, kind: output, shape index: {2}]
  %7 = xla_tuple %s4, %s5, %s6
  %s8 = sld [smem:[#allocation0]]
  $region42: #{down_forward.4} parent=0
    _
  %s10 = ssub.s32 1, %s8
  %s11 = scalar_select 0, %s10, %s8
  // Predicated region
  $region2: #{down_forward.4} parent=0 // pred_check
    _
  $region3: #{down_forward.4} parent=0 // pred_check_branch
    %13 = sbr.rel (0) target = $region5
  $region4: #{down_forward.4} parent=0 // pred_region
    _
  $region5: #{down_forward.4} parent=0 // pred_fallthru
    _
  // Predicated region
  $region6: #{down_forward.4} parent=0 // pred_check
    _
  $region7: #{down_forward.4} parent=0 // pred_check_branch
    %15 = sbr.rel (0) target = $region9
  $region8: #{down_forward.4} parent=0 // pred_region
    _
  $region9: #{down_forward.4} parent=0 // pred_fallthru
    _
  // Predicated region
  $region10: #{down_forward.4} parent=0 // pred_check
    _
  $region11: #{down_forward.4} parent=0 // pred_check_branch
    %17 = sbr.rel (0) target = $region13
  $region12: #{down_forward.4} parent=0 // pred_region
    _
  $region13: #{down_forward.4} parent=0 // pred_fallthru
    _
  // Predicated region
  $region14: #{down_forward.4} parent=0 // pred_check
    _
  $region15: #{down_forward.4} parent=0 // pred_check_branch
    %19 = sbr.rel (0) target = $region17
  $region16: #{down_forward.4} parent=0 // pred_region
    _
  $region17: #{down_forward.4} parent=0 // pred_fallthru
    _
  %vm21 = vcmask 60416
  %22 = vst.msk [vmem:[#allocation2] sm:$0xf] %vm21, 0
  %vm23 = vcmask 57344
  %24 = vst.msk [vmem:[#allocation2 + $0x4] sm:$0x1] %vm23, 0
  %25 = vst.msk [vmem:[#allocation2 + $0x50] sm:$0xf] %vm21, 0
  %26 = vst.msk [vmem:[#allocation2 + $0x54] sm:$0x1] %vm23, 0
  %s27 = scalar_lea.vmem [#allocation2], 72
  %28 = vst.msk [vmem:[%s27] sm:$0xf] %vm21, 0
  %29 = vst.msk [vmem:[%s27 + $0x4] sm:$0x1] %vm23, 0
  %30 = vst.msk [vmem:[%s27 + $0x50] sm:$0xf] %vm21, 0
  %31 = vst.msk [vmem:[%s27 + $0x54] sm:$0x1] %vm23, 0
  %vm32 = vcmask 57344
  %vm33 = vsmask.f32 256
  %vm34 = vmand %vm32, %vm33
  %v35 = vld [vmem:[#allocation2] sm:$0x1]
  %v36 = vsel %vm34, 0, %v35
  %37 = vst [vmem:[#allocation2] sm:$0x1] %v36
  %v38 = vld [vmem:[#allocation2 + $0x8] sm:$0x1]
  %v39 = vsel %vm34, 0, %v38
  %40 = vst [vmem:[#allocation2 + $0x8] sm:$0x1] %v39
  %v41 = vld [vmem:[#allocation2 + $0x10] sm:$0x1]
  %v42 = vsel %vm34, 0, %v41
  %43 = vst [vmem:[#allocation2 + $0x10] sm:$0x1] %v42
  %v44 = vld [vmem:[#allocation2 + $0x18] sm:$0x1]
  %v45 = vsel %vm34, 0, %v44
  %46 = vst [vmem:[#allocation2 + $0x18] sm:$0x1] %v45
  %v47 = vld [vmem:[#allocation2 + $0x20] sm:$0x1]
  %v48 = vsel %vm34, 0, %v47
  %49 = vst [vmem:[#allocation2 + $0x20] sm:$0x1] %v48
  %v50 = vld [vmem:[#allocation2 + $0x28] sm:$0x1]
  %v51 = vsel %vm34, 0, %v50
  %52 = vst [vmem:[#allocation2 + $0x28] sm:$0x1] %v51
  %v53 = vld [vmem:[#allocation2 + $0x30] sm:$0x1]
  %v54 = vsel %vm34, 0, %v53
  %55 = vst [vmem:[#allocation2 + $0x30] sm:$0x1] %v54
  %v56 = vld [vmem:[#allocation2 + $0x38] sm:$0x1]
  %v57 = vsel %vm34, 0, %v56
  %58 = vst [vmem:[#allocation2 + $0x38] sm:$0x1] %v57
  %v59 = vld [vmem:[#allocation2 + $0x40] sm:$0x1]
  %v60 = vsel %vm34, 0, %v59
  %61 = vst [vmem:[#allocation2 + $0x40] sm:$0x1] %v60
  %v62 = vld [vmem:[#allocation2 + $0x48] sm:$0x1]
  %v63 = vsel %vm34, 0, %v62
  %64 = vst [vmem:[#allocation2 + $0x48] sm:$0x1] %v63
  %v65 = vld [vmem:[#allocation2 + $0x50] sm:$0x1]
  %v66 = vsel %vm34, 0, %v65
  %67 = vst [vmem:[#allocation2 + $0x50] sm:$0x1] %v66
  %v68 = vld [vmem:[#allocation2 + $0x58] sm:$0x1]
  %v69 = vsel %vm34, 0, %v68
  %70 = vst [vmem:[#allocation2 + $0x58] sm:$0x1] %v69
  %v71 = vld [vmem:[#allocation2 + $0x60] sm:$0x1]
  %v72 = vsel %vm34, 0, %v71
  %73 = vst [vmem:[#allocation2 + $0x60] sm:$0x1] %v72
  %v74 = vld [vmem:[#allocation2 + $0x68] sm:$0x1]
  %v75 = vsel %vm34, 0, %v74
  %76 = vst [vmem:[#allocation2 + $0x68] sm:$0x1] %v75
  %v77 = vld [vmem:[#allocation2 + $0x70] sm:$0x1]
  %v78 = vsel %vm34, 0, %v77
  %79 = vst [vmem:[#allocation2 + $0x70] sm:$0x1] %v78
  %v80 = vld [vmem:[#allocation2 + $0x78] sm:$0x1]
  %v81 = vsel %vm34, 0, %v80
  %82 = vst [vmem:[#allocation2 + $0x78] sm:$0x1] %v81
  %v83 = vld [vmem:[#allocation2 + $0x80] sm:$0x1]
  %v84 = vsel %vm34, 0, %v83
  %85 = vst [vmem:[#allocation2 + $0x80] sm:$0x1] %v84
  %v86 = vld [vmem:[#allocation2 + $0x88] sm:$0x1]
  %v87 = vsel %vm34, 0, %v86
  %88 = vst [vmem:[#allocation2 + $0x88] sm:$0x1] %v87
  %v89 = vld [vmem:[#allocation2 + $0x90] sm:$0x1]
  %v90 = vsel %vm34, 0, %v89
  %91 = vst [vmem:[#allocation2 + $0x90] sm:$0x1] %v90
  %v92 = vld [vmem:[#allocation2 + $0x98] sm:$0x1]
  %v93 = vsel %vm34, 0, %v92
  %94 = vst [vmem:[#allocation2 + $0x98] sm:$0x1] %v93
  %vm95 = vsmask.f32 7938
  %vm96 = vmand %vm32, %vm95
  %v97 = vld [vmem:[#allocation2 + $0x4] sm:$0x1]
  %v98 = vsel %vm96, 0, %v97
  %99 = vst [vmem:[#allocation2 + $0x4] sm:$0x1] %v98
  %v100 = vld [vmem:[#allocation2 + $0xc] sm:$0x1]
  %v101 = vsel %vm96, 0, %v100
  %102 = vst [vmem:[#allocation2 + $0xc] sm:$0x1] %v101
  %v103 = vld [vmem:[#allocation2 + $0x14] sm:$0x1]
  %v104 = vsel %vm96, 0, %v103
  %105 = vst [vmem:[#allocation2 + $0x14] sm:$0x1] %v104
  %v106 = vld [vmem:[#allocation2 + $0x1c] sm:$0x1]
  %v107 = vsel %vm96, 0, %v106
  %108 = vst [vmem:[#allocation2 + $0x1c] sm:$0x1] %v107
  %v109 = vld [vmem:[#allocation2 + $0x24] sm:$0x1]
  %v110 = vsel %vm96, 0, %v109
  %111 = vst [vmem:[#allocation2 + $0x24] sm:$0x1] %v110
  %v112 = vld [vmem:[#allocation2 + $0x2c] sm:$0x1]
  %v113 = vsel %vm96, 0, %v112
  %114 = vst [vmem:[#allocation2 + $0x2c] sm:$0x1] %v113
  %v115 = vld [vmem:[#allocation2 + $0x34] sm:$0x1]
  %v116 = vsel %vm96, 0, %v115
  %117 = vst [vmem:[#allocation2 + $0x34] sm:$0x1] %v116
  %v118 = vld [vmem:[#allocation2 + $0x3c] sm:$0x1]
  %v119 = vsel %vm96, 0, %v118
  %120 = vst [vmem:[#allocation2 + $0x3c] sm:$0x1] %v119
  %v121 = vld [vmem:[#allocation2 + $0x44] sm:$0x1]
  %v122 = vsel %vm96, 0, %v121
  %123 = vst [vmem:[#allocation2 + $0x44] sm:$0x1] %v122
  %v124 = vld [vmem:[#allocation2 + $0x4c] sm:$0x1]
  %v125 = vsel %vm96, 0, %v124
  %126 = vst [vmem:[#allocation2 + $0x4c] sm:$0x1] %v125
  %v127 = vld [vmem:[#allocation2 + $0x54] sm:$0x1]
  %v128 = vsel %vm96, 0, %v127
  %129 = vst [vmem:[#allocation2 + $0x54] sm:$0x1] %v128
  %v130 = vld [vmem:[#allocation2 + $0x5c] sm:$0x1]
  %v131 = vsel %vm96, 0, %v130
  %132 = vst [vmem:[#allocation2 + $0x5c] sm:$0x1] %v131
  %v133 = vld [vmem:[#allocation2 + $0x64] sm:$0x1]
  %v134 = vsel %vm96, 0, %v133
  %135 = vst [vmem:[#allocation2 + $0x64] sm:$0x1] %v134
  %v136 = vld [vmem:[#allocation2 + $0x6c] sm:$0x1]
  %v137 = vsel %vm96, 0, %v136
  %138 = vst [vmem:[#allocation2 + $0x6c] sm:$0x1] %v137
  %v139 = vld [vmem:[#allocation2 + $0x74] sm:$0x1]
  %v140 = vsel %vm96, 0, %v139
  %141 = vst [vmem:[#allocation2 + $0x74] sm:$0x1] %v140
  %v142 = vld [vmem:[#allocation2 + $0x7c] sm:$0x1]
  %v143 = vsel %vm96, 0, %v142
  %144 = vst [vmem:[#allocation2 + $0x7c] sm:$0x1] %v143
  %v145 = vld [vmem:[#allocation2 + $0x84] sm:$0x1]
  %v146 = vsel %vm96, 0, %v145
  %147 = vst [vmem:[#allocation2 + $0x84] sm:$0x1] %v146
  %v148 = vld [vmem:[#allocation2 + $0x8c] sm:$0x1]
  %v149 = vsel %vm96, 0, %v148
  %150 = vst [vmem:[#allocation2 + $0x8c] sm:$0x1] %v149
  %v151 = vld [vmem:[#allocation2 + $0x94] sm:$0x1]
  %v152 = vsel %vm96, 0, %v151
  %153 = vst [vmem:[#allocation2 + $0x94] sm:$0x1] %v152
  %v154 = vld [vmem:[#allocation2 + $0x9c] sm:$0x1]
  %v155 = vsel %vm96, 0, %v154
  %156 = vst [vmem:[#allocation2 + $0x9c] sm:$0x1] %v155
  %v157 = vld [vmem:[%s0] sm:$0xf]
  %v158 = vld [vmem:[%s0 + $0x4] sm:$0xf]
  %v159 = vld [vmem:[%s0 + $0x8] sm:$0xf]
  %v160 = vld [vmem:[%s0 + $0xc] sm:$0xf]
  %v161 = vld [vmem:[%s0 + $0x10] sm:$0xf]
  %v162 = vld [vmem:[%s0 + $0x14] sm:$0xf]
  %v163 = vld [vmem:[%s0 + $0x18] sm:$0xf]
  %v164 = vld [vmem:[%s0 + $0x1c] sm:$0xf]
  %v165 = vld [vmem:[%s0 + $0x20] sm:$0xf]
  %v166 = vld [vmem:[%s0 + $0x24] sm:$0xf]
  %v167 = vld [vmem:[%s0 + $0x28] sm:$0xf]
  %v168 = vld [vmem:[%s0 + $0x2c] sm:$0xf]
  %v169 = vld [vmem:[%s0 + $0x30] sm:$0xf]
  %v170 = vld [vmem:[%s0 + $0x34] sm:$0xf]
  %v171 = vld [vmem:[%s0 + $0x38] sm:$0xf]
  %v172 = vld [vmem:[%s0 + $0x3c] sm:$0xf]
  %v173 = vunpack.c.l.bf16 %v157
  %v174 = vunpack.c.l.bf16 %v158
  %v175 = vunpack.c.l.bf16 %v159
  %v176 = vunpack.c.l.bf16 %v160
  %v177 = vunpack.c.l.bf16 %v161
  %v178 = vunpack.c.l.bf16 %v162
  %v179 = vunpack.c.l.bf16 %v163
  %v180 = vunpack.c.l.bf16 %v164
  %v181 = vunpack.c.l.bf16 %v165
  %v182 = vunpack.c.l.bf16 %v166
  %v183 = vunpack.c.l.bf16 %v167
  %v184 = vunpack.c.l.bf16 %v168
  %v185 = vunpack.c.l.bf16 %v169
  %v186 = vunpack.c.l.bf16 %v170
  %v187 = vunpack.c.l.bf16 %v171
  %v188 = vunpack.c.l.bf16 %v172
  %v189 = vld [vmem:[%s1] sm:$0x1]
  %v191 = vperm.slane %v189, 0
  %v193 = vmul.f32 %v173, %v191
  %v194 = vmul.f32 %v174, %v191
  %v195 = vmul.f32 %v175, %v191
  %v196 = vmul.f32 %v176, %v191
  %v197 = vmul.f32 %v177, %v191
  %v198 = vmul.f32 %v178, %v191
  %v199 = vmul.f32 %v179, %v191
  %v200 = vmul.f32 %v180, %v191
  %v201 = vmul.f32 %v181, %v191
  %v202 = vmul.f32 %v182, %v191
  %v203 = vmul.f32 %v183, %v191
  %v204 = vmul.f32 %v184, %v191
  %v205 = vmul.f32 %v185, %v191
  %v206 = vmul.f32 %v186, %v191
  %v207 = vmul.f32 %v187, %v191
  %v208 = vmul.f32 %v188, %v191
  %v209 = vld [vmem:[%s2] sm:$0x1]
  %v211 = vperm.slane %v209, 0
  %v213 = vadd.f32 %v193, %v211
  %v214 = vadd.f32 %v194, %v211
  %v215 = vadd.f32 %v195, %v211
  %v216 = vadd.f32 %v196, %v211
  %v217 = vadd.f32 %v197, %v211
  %v218 = vadd.f32 %v198, %v211
  %v219 = vadd.f32 %v199, %v211
  %v220 = vadd.f32 %v200, %v211
  %v221 = vadd.f32 %v201, %v211
  %v222 = vadd.f32 %v202, %v211
  %v223 = vadd.f32 %v203, %v211
  %v224 = vadd.f32 %v204, %v211
  %v225 = vadd.f32 %v205, %v211
  %v226 = vadd.f32 %v206, %v211
  %v227 = vadd.f32 %v207, %v211
  %v228 = vadd.f32 %v208, %v211
  %v229 = vmax.f32 %v213, 0.0
  %v230 = vmax.f32 %v214, 0.0
  %v231 = vmax.f32 %v215, 0.0
  %v232 = vmax.f32 %v216, 0.0
  %v233 = vmax.f32 %v217, 0.0
  %v234 = vmax.f32 %v218, 0.0
  %v235 = vmax.f32 %v219, 0.0
  %v236 = vmax.f32 %v220, 0.0
  %v237 = vmax.f32 %v221, 0.0
  %v238 = vmax.f32 %v222, 0.0
  %v239 = vmax.f32 %v223, 0.0
  %v240 = vmax.f32 %v224, 0.0
  %v241 = vmax.f32 %v225, 0.0
  %v242 = vmax.f32 %v226, 0.0
  %v243 = vmax.f32 %v227, 0.0
  %v244 = vmax.f32 %v228, 0.0
  %v245 = vpack.c.bf16 %v229, %v229
  %v246 = vpack.c.bf16 %v230, %v230
  %v247 = vpack.c.bf16 %v231, %v231
  %v248 = vpack.c.bf16 %v232, %v232
  %v249 = vpack.c.bf16 %v233, %v233
  %v250 = vpack.c.bf16 %v234, %v234
  %v251 = vpack.c.bf16 %v235, %v235
  %v252 = vpack.c.bf16 %v236, %v236
  %v253 = vpack.c.bf16 %v237, %v237
  %v254 = vpack.c.bf16 %v238, %v238
  %v255 = vpack.c.bf16 %v239, %v239
  %v256 = vpack.c.bf16 %v240, %v240
  %v257 = vpack.c.bf16 %v241, %v241
  %v258 = vpack.c.bf16 %v242, %v242
  %v259 = vpack.c.bf16 %v243, %v243
  %v260 = vpack.c.bf16 %v244, %v244
  %v262 = vshrl.u32 %v245, 16
  %v264 = vrot.slane %v262, 7
  %v265 = vshll.u32 %v245, 16
  %v267 = vor.u32 %v264, %v265
  %v268 = vrot.slane %v264, 4
  %v270 = vshrl.u32 %v246, 16
  %v272 = vrot.slane %v270, 7
  %v273 = vshll.u32 %v246, 16
  %v275 = vor.u32 %v272, %v273
  %v276 = vrot.slane %v272, 4
  %v278 = vshrl.u32 %v247, 16
  %v280 = vrot.slane %v278, 7
  %v281 = vshll.u32 %v247, 16
  %v283 = vor.u32 %v280, %v281
  %v284 = vrot.slane %v280, 4
  %v286 = vshrl.u32 %v248, 16
  %v288 = vrot.slane %v286, 7
  %v289 = vshll.u32 %v248, 16
  %v291 = vor.u32 %v288, %v289
  %v292 = vrot.slane %v288, 4
  %v294 = vshrl.u32 %v249, 16
  %v296 = vrot.slane %v294, 7
  %v297 = vshll.u32 %v249, 16
  %v299 = vor.u32 %v296, %v297
  %v300 = vrot.slane %v296, 4
  %v302 = vshrl.u32 %v250, 16
  %v304 = vrot.slane %v302, 7
  %v305 = vshll.u32 %v250, 16
  %v307 = vor.u32 %v304, %v305
  %v308 = vrot.slane %v304, 4
  %v310 = vshrl.u32 %v251, 16
  %v312 = vrot.slane %v310, 7
  %v313 = vshll.u32 %v251, 16
  %v315 = vor.u32 %v312, %v313
  %v316 = vrot.slane %v312, 4
  %v318 = vshrl.u32 %v252, 16
  %v320 = vrot.slane %v318, 7
  %v321 = vshll.u32 %v252, 16
  %v323 = vor.u32 %v320, %v321
  %v324 = vrot.slane %v320, 4
  %v326 = vshrl.u32 %v253, 16
  %v328 = vrot.slane %v326, 7
  %v329 = vshll.u32 %v253, 16
  %v331 = vor.u32 %v328, %v329
  %v332 = vrot.slane %v328, 4
  %v334 = vshrl.u32 %v254, 16
  %v336 = vrot.slane %v334, 7
  %v337 = vshll.u32 %v254, 16
  %v339 = vor.u32 %v336, %v337
  %v340 = vrot.slane %v336, 4
  %v342 = vshrl.u32 %v255, 16
  %v344 = vrot.slane %v342, 7
  %v345 = vshll.u32 %v255, 16
  %v347 = vor.u32 %v344, %v345
  %v348 = vrot.slane %v344, 4
  %v350 = vshrl.u32 %v256, 16
  %v352 = vrot.slane %v350, 7
  %v353 = vshll.u32 %v256, 16
  %v355 = vor.u32 %v352, %v353
  %v356 = vrot.slane %v352, 4
  %v358 = vshrl.u32 %v257, 16
  %v360 = vrot.slane %v358, 7
  %v361 = vshll.u32 %v257, 16
  %v363 = vor.u32 %v360, %v361
  %v364 = vrot.slane %v360, 4
  %v366 = vshrl.u32 %v258, 16
  %v368 = vrot.slane %v366, 7
  %v369 = vshll.u32 %v258, 16
  %v371 = vor.u32 %v368, %v369
  %v372 = vrot.slane %v368, 4
  %v374 = vshrl.u32 %v259, 16
  %v376 = vrot.slane %v374, 7
  %v377 = vshll.u32 %v259, 16
  %v379 = vor.u32 %v376, %v377
  %v380 = vrot.slane %v376, 4
  %v382 = vshrl.u32 %v260, 16
  %v384 = vrot.slane %v382, 7
  %v385 = vshll.u32 %v260, 16
  %v387 = vor.u32 %v384, %v385
  %v388 = vrot.slane %v384, 4
  %s421 = scalar_lea.vmem [#allocation2], 8
  %vm422 = vcmask 60416
  %vm423 = vmand %vm422, %vm95
  %v424 = vld [vmem:[%s421] sm:$0xf]
  %v425 = vsel %vm423, %v267, %v424
  %426 = vst [vmem:[%s421] sm:$0xf] %v425
  %v427 = vld [vmem:[%s421 + $0x4] sm:$0x1]
  %v428 = vsel %vm34, %v268, %v427
  %429 = vst [vmem:[%s421 + $0x4] sm:$0x1] %v428
  %v430 = vld [vmem:[%s421 + $0x8] sm:$0xf]
  %v431 = vsel %vm423, %v275, %v430
  %432 = vst [vmem:[%s421 + $0x8] sm:$0xf] %v431
  %v433 = vld [vmem:[%s421 + $0xc] sm:$0x1]
  %v434 = vsel %vm34, %v276, %v433
  %435 = vst [vmem:[%s421 + $0xc] sm:$0x1] %v434
  %v436 = vld [vmem:[%s421 + $0x10] sm:$0xf]
  %v437 = vsel %vm423, %v283, %v436
  %438 = vst [vmem:[%s421 + $0x10] sm:$0xf] %v437
  %v439 = vld [vmem:[%s421 + $0x14] sm:$0x1]
  %v440 = vsel %vm34, %v284, %v439
  %441 = vst [vmem:[%s421 + $0x14] sm:$0x1] %v440
  %v442 = vld [vmem:[%s421 + $0x18] sm:$0xf]
  %v443 = vsel %vm423, %v291, %v442
  %444 = vst [vmem:[%s421 + $0x18] sm:$0xf] %v443
  %v445 = vld [vmem:[%s421 + $0x1c] sm:$0x1]
  %v446 = vsel %vm34, %v292, %v445
  %447 = vst [vmem:[%s421 + $0x1c] sm:$0x1] %v446
  %v448 = vld [vmem:[%s421 + $0x20] sm:$0xf]
  %v449 = vsel %vm423, %v299, %v448
  %450 = vst [vmem:[%s421 + $0x20] sm:$0xf] %v449
  %v451 = vld [vmem:[%s421 + $0x24] sm:$0x1]
  %v452 = vsel %vm34, %v300, %v451
  %453 = vst [vmem:[%s421 + $0x24] sm:$0x1] %v452
  %v454 = vld [vmem:[%s421 + $0x28] sm:$0xf]
  %v455 = vsel %vm423, %v307, %v454
  %456 = vst [vmem:[%s421 + $0x28] sm:$0xf] %v455
  %v457 = vld [vmem:[%s421 + $0x2c] sm:$0x1]
  %v458 = vsel %vm34, %v308, %v457
  %459 = vst [vmem:[%s421 + $0x2c] sm:$0x1] %v458
  %v460 = vld [vmem:[%s421 + $0x30] sm:$0xf]
  %v461 = vsel %vm423, %v315, %v460
  %462 = vst [vmem:[%s421 + $0x30] sm:$0xf] %v461
  %v463 = vld [vmem:[%s421 + $0x34] sm:$0x1]
  %v464 = vsel %vm34, %v316, %v463
  %465 = vst [vmem:[%s421 + $0x34] sm:$0x1] %v464
  %v466 = vld [vmem:[%s421 + $0x38] sm:$0xf]
  %v467 = vsel %vm423, %v323, %v466
  %468 = vst [vmem:[%s421 + $0x38] sm:$0xf] %v467
  %v469 = vld [vmem:[%s421 + $0x3c] sm:$0x1]
  %v470 = vsel %vm34, %v324, %v469
  %471 = vst [vmem:[%s421 + $0x3c] sm:$0x1] %v470
  %v472 = vld [vmem:[%s421 + $0x50] sm:$0xf]
  %v473 = vsel %vm423, %v331, %v472
  %474 = vst [vmem:[%s421 + $0x50] sm:$0xf] %v473
  %v475 = vld [vmem:[%s421 + $0x54] sm:$0x1]
  %v476 = vsel %vm34, %v332, %v475
  %477 = vst [vmem:[%s421 + $0x54] sm:$0x1] %v476
  %v478 = vld [vmem:[%s421 + $0x58] sm:$0xf]
  %v479 = vsel %vm423, %v339, %v478
  %480 = vst [vmem:[%s421 + $0x58] sm:$0xf] %v479
  %v481 = vld [vmem:[%s421 + $0x5c] sm:$0x1]
  %v482 = vsel %vm34, %v340, %v481
  %483 = vst [vmem:[%s421 + $0x5c] sm:$0x1] %v482
  %v484 = vld [vmem:[%s421 + $0x60] sm:$0xf]
  %v485 = vsel %vm423, %v347, %v484
  %486 = vst [vmem:[%s421 + $0x60] sm:$0xf] %v485
  %v487 = vld [vmem:[%s421 + $0x64] sm:$0x1]
  %v488 = vsel %vm34, %v348, %v487
  %489 = vst [vmem:[%s421 + $0x64] sm:$0x1] %v488
  %v490 = vld [vmem:[%s421 + $0x68] sm:$0xf]
  %v491 = vsel %vm423, %v355, %v490
  %492 = vst [vmem:[%s421 + $0x68] sm:$0xf] %v491
  %v493 = vld [vmem:[%s421 + $0x6c] sm:$0x1]
  %v494 = vsel %vm34, %v356, %v493
  %495 = vst [vmem:[%s421 + $0x6c] sm:$0x1] %v494
  %v496 = vld [vmem:[%s421 + $0x70] sm:$0xf]
  %v497 = vsel %vm423, %v363, %v496
  %498 = vst [vmem:[%s421 + $0x70] sm:$0xf] %v497
  %v499 = vld [vmem:[%s421 + $0x74] sm:$0x1]
  %v500 = vsel %vm34, %v364, %v499
  %501 = vst [vmem:[%s421 + $0x74] sm:$0x1] %v500
  %v502 = vld [vmem:[%s421 + $0x78] sm:$0xf]
  %v503 = vsel %vm423, %v371, %v502
  %504 = vst [vmem:[%s421 + $0x78] sm:$0xf] %v503
  %v505 = vld [vmem:[%s421 + $0x7c] sm:$0x1]
  %v506 = vsel %vm34, %v372, %v505
  %507 = vst [vmem:[%s421 + $0x7c] sm:$0x1] %v506
  %v508 = vld [vmem:[%s421 + $0x80] sm:$0xf]
  %v509 = vsel %vm423, %v379, %v508
  %510 = vst [vmem:[%s421 + $0x80] sm:$0xf] %v509
  %v511 = vld [vmem:[%s421 + $0x84] sm:$0x1]
  %v512 = vsel %vm34, %v380, %v511
  %513 = vst [vmem:[%s421 + $0x84] sm:$0x1] %v512
  %v514 = vld [vmem:[%s421 + $0x88] sm:$0xf]
  %v515 = vsel %vm423, %v387, %v514
  %516 = vst [vmem:[%s421 + $0x88] sm:$0xf] %v515
  %v517 = vld [vmem:[%s421 + $0x8c] sm:$0x1]
  %v518 = vsel %vm34, %v388, %v517
  %519 = vst [vmem:[%s421 + $0x8c] sm:$0x1] %v518
  %v520 = vld [vmem:[#allocation2] sm:$0xf]
  %v521 = vld [vmem:[#allocation2 + $0x8] sm:$0xf]
  %v522 = vld [vmem:[#allocation2 + $0x10] sm:$0xf]
  %v523 = vld [vmem:[#allocation2 + $0x18] sm:$0xf]
  %v524 = vld [vmem:[#allocation2 + $0x20] sm:$0xf]
  %v525 = vld [vmem:[#allocation2 + $0x28] sm:$0xf]
  %v526 = vld [vmem:[#allocation2 + $0x30] sm:$0xf]
  %v527 = vld [vmem:[#allocation2 + $0x38] sm:$0xf]
  %v528 = vld [vmem:[#allocation2 + $0x50] sm:$0xf]
  %v529 = vld [vmem:[#allocation2 + $0x58] sm:$0xf]
  %v530 = vld [vmem:[#allocation2 + $0x60] sm:$0xf]
  %v531 = vld [vmem:[#allocation2 + $0x68] sm:$0xf]
  %v532 = vld [vmem:[#allocation2 + $0x70] sm:$0xf]
  %v533 = vld [vmem:[#allocation2 + $0x78] sm:$0xf]
  %v534 = vld [vmem:[#allocation2 + $0x80] sm:$0xf]
  %v535 = vld [vmem:[#allocation2 + $0x88] sm:$0xf]
  %536 = vst.msk [vmem:[#allocation3] sm:$0xf] %vm21, %v520
  %537 = vst.msk [vmem:[#allocation3 + $0x4] sm:$0xf] %vm21, %v521
  %538 = vst.msk [vmem:[#allocation3 + $0x8] sm:$0xf] %vm21, %v522
  %539 = vst.msk [vmem:[#allocation3 + $0xc] sm:$0xf] %vm21, %v523
  %540 = vst.msk [vmem:[#allocation3 + $0x10] sm:$0xf] %vm21, %v524
  %541 = vst.msk [vmem:[#allocation3 + $0x14] sm:$0xf] %vm21, %v525
  %542 = vst.msk [vmem:[#allocation3 + $0x18] sm:$0xf] %vm21, %v526
  %543 = vst.msk [vmem:[#allocation3 + $0x1c] sm:$0xf] %vm21, %v527
  %544 = vst.msk [vmem:[#allocation3 + $0x20] sm:$0xf] %vm21, %v528
  %545 = vst.msk [vmem:[#allocation3 + $0x24] sm:$0xf] %vm21, %v529
  %546 = vst.msk [vmem:[#allocation3 + $0x28] sm:$0xf] %vm21, %v530
  %547 = vst.msk [vmem:[#allocation3 + $0x2c] sm:$0xf] %vm21, %v531
  %548 = vst.msk [vmem:[#allocation3 + $0x30] sm:$0xf] %vm21, %v532
  %549 = vst.msk [vmem:[#allocation3 + $0x34] sm:$0xf] %vm21, %v533
  %550 = vst.msk [vmem:[#allocation3 + $0x38] sm:$0xf] %vm21, %v534
  %551 = vst.msk [vmem:[#allocation3 + $0x3c] sm:$0xf] %vm21, %v535
  %v552 = vld [vmem:[#allocation2] sm:$0xf]
  %v553 = vld [vmem:[#allocation2 + $0x4] sm:$0x1]
  %v554 = vld [vmem:[#allocation2 + $0x8] sm:$0xf]
  %v555 = vld [vmem:[#allocation2 + $0xc] sm:$0x1]
  %v556 = vld [vmem:[#allocation2 + $0x10] sm:$0xf]
  %v557 = vld [vmem:[#allocation2 + $0x14] sm:$0x1]
  %v558 = vld [vmem:[#allocation2 + $0x18] sm:$0xf]
  %v559 = vld [vmem:[#allocation2 + $0x1c] sm:$0x1]
  %v560 = vld [vmem:[#allocation2 + $0x20] sm:$0xf]
  %v561 = vld [vmem:[#allocation2 + $0x24] sm:$0x1]
  %v562 = vld [vmem:[#allocation2 + $0x28] sm:$0xf]
  %v563 = vld [vmem:[#allocation2 + $0x2c] sm:$0x1]
  %v564 = vld [vmem:[#allocation2 + $0x30] sm:$0xf]
  %v565 = vld [vmem:[#allocation2 + $0x34] sm:$0x1]
  %v566 = vld [vmem:[#allocation2 + $0x38] sm:$0xf]
  %v567 = vld [vmem:[#allocation2 + $0x3c] sm:$0x1]
  %v568 = vld [vmem:[#allocation2 + $0x50] sm:$0xf]
  %v569 = vld [vmem:[#allocation2 + $0x54] sm:$0x1]
  %v570 = vld [vmem:[#allocation2 + $0x58] sm:$0xf]
  %v571 = vld [vmem:[#allocation2 + $0x5c] sm:$0x1]
  %v572 = vld [vmem:[#allocation2 + $0x60] sm:$0xf]
  %v573 = vld [vmem:[#allocation2 + $0x64] sm:$0x1]
  %v574 = vld [vmem:[#allocation2 + $0x68] sm:$0xf]
  %v575 = vld [vmem:[#allocation2 + $0x6c] sm:$0x1]
  %v576 = vld [vmem:[#allocation2 + $0x70] sm:$0xf]
  %v577 = vld [vmem:[#allocation2 + $0x74] sm:$0x1]
  %v578 = vld [vmem:[#allocation2 + $0x78] sm:$0xf]
  %v579 = vld [vmem:[#allocation2 + $0x7c] sm:$0x1]
  %v580 = vld [vmem:[#allocation2 + $0x80] sm:$0xf]
  %v581 = vld [vmem:[#allocation2 + $0x84] sm:$0x1]
  %v582 = vld [vmem:[#allocation2 + $0x88] sm:$0xf]
  %v583 = vld [vmem:[#allocation2 + $0x8c] sm:$0x1]
  %vm584 = vsmask.f32 3328
  %vm585 = vsmask.f32 7440
  %vm586 = vmor %vm584, %vm585
  %v588 = vshrl.u32 %v552, 16
  %v590 = vrot.slane %v588, 4
  %v591 = vshll.u32 %v552, 16
  %v593 = vrot.slane %v591, 5
  %v594 = vor.u32 %v590, %v593
  %v595 = vrot.slane %v594, 4
  %v597 = vshll.u32 %v553, 16
  %v599 = vrot.slane %v597, 5
  %v600 = vsel %vm586, %v595, %v599
  %v602 = vshrl.u32 %v554, 16
  %v604 = vrot.slane %v602, 4
  %v605 = vshll.u32 %v554, 16
  %v607 = vrot.slane %v605, 5
  %v608 = vor.u32 %v604, %v607
  %v609 = vrot.slane %v608, 4
  %v611 = vshll.u32 %v555, 16
  %v613 = vrot.slane %v611, 5
  %v614 = vsel %vm586, %v609, %v613
  %v616 = vshrl.u32 %v556, 16
  %v618 = vrot.slane %v616, 4
  %v619 = vshll.u32 %v556, 16
  %v621 = vrot.slane %v619, 5
  %v622 = vor.u32 %v618, %v621
  %v623 = vrot.slane %v622, 4
  %v625 = vshll.u32 %v557, 16
  %v627 = vrot.slane %v625, 5
  %v628 = vsel %vm586, %v623, %v627
  %v630 = vshrl.u32 %v558, 16
  %v632 = vrot.slane %v630, 4
  %v633 = vshll.u32 %v558, 16
  %v635 = vrot.slane %v633, 5
  %v636 = vor.u32 %v632, %v635
  %v637 = vrot.slane %v636, 4
  %v639 = vshll.u32 %v559, 16
  %v641 = vrot.slane %v639, 5
  %v642 = vsel %vm586, %v637, %v641
  %v644 = vshrl.u32 %v560, 16
  %v646 = vrot.slane %v644, 4
  %v647 = vshll.u32 %v560, 16
  %v649 = vrot.slane %v647, 5
  %v650 = vor.u32 %v646, %v649
  %v651 = vrot.slane %v650, 4
  %v653 = vshll.u32 %v561, 16
  %v655 = vrot.slane %v653, 5
  %v656 = vsel %vm586, %v651, %v655
  %v658 = vshrl.u32 %v562, 16
  %v660 = vrot.slane %v658, 4
  %v661 = vshll.u32 %v562, 16
  %v663 = vrot.slane %v661, 5
  %v664 = vor.u32 %v660, %v663
  %v665 = vrot.slane %v664, 4
  %v667 = vshll.u32 %v563, 16
  %v669 = vrot.slane %v667, 5
  %v670 = vsel %vm586, %v665, %v669
  %v672 = vshrl.u32 %v564, 16
  %v674 = vrot.slane %v672, 4
  %v675 = vshll.u32 %v564, 16
  %v677 = vrot.slane %v675, 5
  %v678 = vor.u32 %v674, %v677
  %v679 = vrot.slane %v678, 4
  %v681 = vshll.u32 %v565, 16
  %v683 = vrot.slane %v681, 5
  %v684 = vsel %vm586, %v679, %v683
  %v686 = vshrl.u32 %v566, 16
  %v688 = vrot.slane %v686, 4
  %v689 = vshll.u32 %v566, 16
  %v691 = vrot.slane %v689, 5
  %v692 = vor.u32 %v688, %v691
  %v693 = vrot.slane %v692, 4
  %v695 = vshll.u32 %v567, 16
  %v697 = vrot.slane %v695, 5
  %v698 = vsel %vm586, %v693, %v697
  %v700 = vshrl.u32 %v568, 16
  %v702 = vrot.slane %v700, 4
  %v703 = vshll.u32 %v568, 16
  %v705 = vrot.slane %v703, 5
  %v706 = vor.u32 %v702, %v705
  %v707 = vrot.slane %v706, 4
  %v709 = vshll.u32 %v569, 16
  %v711 = vrot.slane %v709, 5
  %v712 = vsel %vm586, %v707, %v711
  %v714 = vshrl.u32 %v570, 16
  %v716 = vrot.slane %v714, 4
  %v717 = vshll.u32 %v570, 16
  %v719 = vrot.slane %v717, 5
  %v720 = vor.u32 %v716, %v719
  %v721 = vrot.slane %v720, 4
  %v723 = vshll.u32 %v571, 16
  %v725 = vrot.slane %v723, 5
  %v726 = vsel %vm586, %v721, %v725
  %v728 = vshrl.u32 %v572, 16
  %v730 = vrot.slane %v728, 4
  %v731 = vshll.u32 %v572, 16
  %v733 = vrot.slane %v731, 5
  %v734 = vor.u32 %v730, %v733
  %v735 = vrot.slane %v734, 4
  %v737 = vshll.u32 %v573, 16
  %v739 = vrot.slane %v737, 5
  %v740 = vsel %vm586, %v735, %v739
  %v742 = vshrl.u32 %v574, 16
  %v744 = vrot.slane %v742, 4
  %v745 = vshll.u32 %v574, 16
  %v747 = vrot.slane %v745, 5
  %v748 = vor.u32 %v744, %v747
  %v749 = vrot.slane %v748, 4
  %v751 = vshll.u32 %v575, 16
  %v753 = vrot.slane %v751, 5
  %v754 = vsel %vm586, %v749, %v753
  %v756 = vshrl.u32 %v576, 16
  %v758 = vrot.slane %v756, 4
  %v759 = vshll.u32 %v576, 16
  %v761 = vrot.slane %v759, 5
  %v762 = vor.u32 %v758, %v761
  %v763 = vrot.slane %v762, 4
  %v765 = vshll.u32 %v577, 16
  %v767 = vrot.slane %v765, 5
  %v768 = vsel %vm586, %v763, %v767
  %v770 = vshrl.u32 %v578, 16
  %v772 = vrot.slane %v770, 4
  %v773 = vshll.u32 %v578, 16
  %v775 = vrot.slane %v773, 5
  %v776 = vor.u32 %v772, %v775
  %v777 = vrot.slane %v776, 4
  %v779 = vshll.u32 %v579, 16
  %v781 = vrot.slane %v779, 5
  %v782 = vsel %vm586, %v777, %v781
  %v784 = vshrl.u32 %v580, 16
  %v786 = vrot.slane %v784, 4
  %v787 = vshll.u32 %v580, 16
  %v789 = vrot.slane %v787, 5
  %v790 = vor.u32 %v786, %v789
  %v791 = vrot.slane %v790, 4
  %v793 = vshll.u32 %v581, 16
  %v795 = vrot.slane %v793, 5
  %v796 = vsel %vm586, %v791, %v795
  %v798 = vshrl.u32 %v582, 16
  %v800 = vrot.slane %v798, 4
  %v801 = vshll.u32 %v582, 16
  %v803 = vrot.slane %v801, 5
  %v804 = vor.u32 %v800, %v803
  %v805 = vrot.slane %v804, 4
  %v807 = vshll.u32 %v583, 16
  %v809 = vrot.slane %v807, 5
  %v810 = vsel %vm586, %v805, %v809
  %811 = vrot.lane.b32.xlu0 %v600, 8
  %v812 = vpop.permute.xlu0 %811
  %813 = vrot.lane.b32.xlu0 %v614, 8
  %v814 = vpop.permute.xlu0 %813
  %815 = vrot.lane.b32.xlu0 %v628, 8
  %v816 = vpop.permute.xlu0 %815
  %817 = vrot.lane.b32.xlu0 %v642, 8
  %v818 = vpop.permute.xlu0 %817
  %819 = vrot.lane.b32.xlu0 %v656, 8
  %v820 = vpop.permute.xlu0 %819
  %821 = vrot.lane.b32.xlu0 %v670, 8
  %v822 = vpop.permute.xlu0 %821
  %823 = vrot.lane.b32.xlu0 %v684, 8
  %v824 = vpop.permute.xlu0 %823
  %825 = vrot.lane.b32.xlu0 %v698, 8
  %v826 = vpop.permute.xlu0 %825
  %827 = vrot.lane.b32.xlu0 %v712, 8
  %v828 = vpop.permute.xlu0 %827
  %829 = vrot.lane.b32.xlu0 %v726, 8
  %v830 = vpop.permute.xlu0 %829
  %831 = vrot.lane.b32.xlu0 %v740, 8
  %v832 = vpop.permute.xlu0 %831
  %833 = vrot.lane.b32.xlu0 %v754, 8
  %v834 = vpop.permute.xlu0 %833
  %835 = vrot.lane.b32.xlu0 %v768, 8
  %v836 = vpop.permute.xlu0 %835
  %837 = vrot.lane.b32.xlu0 %v782, 8
  %v838 = vpop.permute.xlu0 %837
  %839 = vrot.lane.b32.xlu0 %v796, 8
  %v840 = vpop.permute.xlu0 %839
  %841 = vrot.lane.b32.xlu0 %v810, 8
  %v842 = vpop.permute.xlu0 %841
  %vm859 = vcmask 126016
  %860 = vst.msk [vmem:[#allocation3] sm:$0xf] %vm859, %v812
  %861 = vst.msk [vmem:[#allocation3 + $0x4] sm:$0xf] %vm859, %v814
  %862 = vst.msk [vmem:[#allocation3 + $0x8] sm:$0xf] %vm859, %v816
  %863 = vst.msk [vmem:[#allocation3 + $0xc] sm:$0xf] %vm859, %v818
  %864 = vst.msk [vmem:[#allocation3 + $0x10] sm:$0xf] %vm859, %v820
  %865 = vst.msk [vmem:[#allocation3 + $0x14] sm:$0xf] %vm859, %v822
  %866 = vst.msk [vmem:[#allocation3 + $0x18] sm:$0xf] %vm859, %v824
  %867 = vst.msk [vmem:[#allocation3 + $0x1c] sm:$0xf] %vm859, %v826
  %868 = vst.msk [vmem:[#allocation3 + $0x20] sm:$0xf] %vm859, %v828
  %869 = vst.msk [vmem:[#allocation3 + $0x24] sm:$0xf] %vm859, %v830
  %870 = vst.msk [vmem:[#allocation3 + $0x28] sm:$0xf] %vm859, %v832
  %871 = vst.msk [vmem:[#allocation3 + $0x2c] sm:$0xf] %vm859, %v834
  %872 = vst.msk [vmem:[#allocation3 + $0x30] sm:$0xf] %vm859, %v836
  %873 = vst.msk [vmem:[#allocation3 + $0x34] sm:$0xf] %vm859, %v838
  %874 = vst.msk [vmem:[#allocation3 + $0x38] sm:$0xf] %vm859, %v840
  %875 = vst.msk [vmem:[#allocation3 + $0x3c] sm:$0xf] %vm859, %v842
  %v876 = vld [vmem:[#allocation2] sm:$0xe]
  %v877 = vld [vmem:[#allocation2 + $0x4] sm:$0x1]
  %v878 = vld [vmem:[#allocation2 + $0x8] sm:$0xe]
  %v879 = vld [vmem:[#allocation2 + $0xc] sm:$0x1]
  %v880 = vld [vmem:[#allocation2 + $0x10] sm:$0xe]
  %v881 = vld [vmem:[#allocation2 + $0x14] sm:$0x1]
  %v882 = vld [vmem:[#allocation2 + $0x18] sm:$0xe]
  %v883 = vld [vmem:[#allocation2 + $0x1c] sm:$0x1]
  %v884 = vld [vmem:[#allocation2 + $0x20] sm:$0xe]
  %v885 = vld [vmem:[#allocation2 + $0x24] sm:$0x1]
  %v886 = vld [vmem:[#allocation2 + $0x28] sm:$0xe]
  %v887 = vld [vmem:[#allocation2 + $0x2c] sm:$0x1]
  %v888 = vld [vmem:[#allocation2 + $0x30] sm:$0xe]
  %v889 = vld [vmem:[#allocation2 + $0x34] sm:$0x1]
  %v890 = vld [vmem:[#allocation2 + $0x38] sm:$0xe]
  %v891 = vld [vmem:[#allocation2 + $0x3c] sm:$0x1]
  %v892 = vld [vmem:[#allocation2 + $0x50] sm:$0xe]
  %v893 = vld [vmem:[#allocation2 + $0x54] sm:$0x1]
  %v894 = vld [vmem:[#allocation2 + $0x58] sm:$0xe]
  %v895 = vld [vmem:[#allocation2 + $0x5c] sm:$0x1]
  %v896 = vld [vmem:[#allocation2 + $0x60] sm:$0xe]
  %v897 = vld [vmem:[#allocation2 + $0x64] sm:$0x1]
  %v898 = vld [vmem:[#allocation2 + $0x68] sm:$0xe]
  %v899 = vld [vmem:[#allocation2 + $0x6c] sm:$0x1]
  %v900 = vld [vmem:[#allocation2 + $0x70] sm:$0xe]
  %v901 = vld [vmem:[#allocation2 + $0x74] sm:$0x1]
  %v902 = vld [vmem:[#allocation2 + $0x78] sm:$0xe]
  %v903 = vld [vmem:[#allocation2 + $0x7c] sm:$0x1]
  %v904 = vld [vmem:[#allocation2 + $0x80] sm:$0xe]
  %v905 = vld [vmem:[#allocation2 + $0x84] sm:$0x1]
  %v906 = vld [vmem:[#allocation2 + $0x88] sm:$0xe]
  %v907 = vld [vmem:[#allocation2 + $0x8c] sm:$0x1]
  %vm940 = vcmask 1042432
  %vm941 = vcmask 1046532
  %vm942 = vmor %vm940, %vm941
  %v943 = vrot.slane %v876, 5
  %v944 = vrot.slane %v943, 4
  %v945 = vrot.slane %v877, 5
  %v946 = vsel %vm942, %v944, %v945
  %v947 = vrot.slane %v878, 5
  %v948 = vrot.slane %v947, 4
  %v949 = vrot.slane %v879, 5
  %v950 = vsel %vm942, %v948, %v949
  %v951 = vrot.slane %v880, 5
  %v952 = vrot.slane %v951, 4
  %v953 = vrot.slane %v881, 5
  %v954 = vsel %vm942, %v952, %v953
  %v955 = vrot.slane %v882, 5
  %v956 = vrot.slane %v955, 4
  %v957 = vrot.slane %v883, 5
  %v958 = vsel %vm942, %v956, %v957
  %v959 = vrot.slane %v884, 5
  %v960 = vrot.slane %v959, 4
  %v961 = vrot.slane %v885, 5
  %v962 = vsel %vm942, %v960, %v961
  %v963 = vrot.slane %v886, 5
  %v964 = vrot.slane %v963, 4
  %v965 = vrot.slane %v887, 5
  %v966 = vsel %vm942, %v964, %v965
  %v967 = vrot.slane %v888, 5
  %v968 = vrot.slane %v967, 4
  %v969 = vrot.slane %v889, 5
  %v970 = vsel %vm942, %v968, %v969
  %v971 = vrot.slane %v890, 5
  %v972 = vrot.slane %v971, 4
  %v973 = vrot.slane %v891, 5
  %v974 = vsel %vm942, %v972, %v973
  %v975 = vrot.slane %v892, 5
  %v976 = vrot.slane %v975, 4
  %v977 = vrot.slane %v893, 5
  %v978 = vsel %vm942, %v976, %v977
  %v979 = vrot.slane %v894, 5
  %v980 = vrot.slane %v979, 4
  %v981 = vrot.slane %v895, 5
  %v982 = vsel %vm942, %v980, %v981
  %v983 = vrot.slane %v896, 5
  %v984 = vrot.slane %v983, 4
  %v985 = vrot.slane %v897, 5
  %v986 = vsel %vm942, %v984, %v985
  %v987 = vrot.slane %v898, 5
  %v988 = vrot.slane %v987, 4
  %v989 = vrot.slane %v899, 5
  %v990 = vsel %vm942, %v988, %v989
  %v991 = vrot.slane %v900, 5
  %v992 = vrot.slane %v991, 4
  %v993 = vrot.slane %v901, 5
  %v994 = vsel %vm942, %v992, %v993
  %v995 = vrot.slane %v902, 5
  %v996 = vrot.slane %v995, 4
  %v997 = vrot.slane %v903, 5
  %v998 = vsel %vm942, %v996, %v997
  %v999 = vrot.slane %v904, 5
  %v1000 = vrot.slane %v999, 4
  %v1001 = vrot.slane %v905, 5
  %v1002 = vsel %vm942, %v1000, %v1001
  %v1003 = vrot.slane %v906, 5
  %v1004 = vrot.slane %v1003, 4
  %v1005 = vrot.slane %v907, 5
  %v1006 = vsel %vm942, %v1004, %v1005
  %1007 = vrot.lane.b32.xlu0 %v946, 16
  %v1008 = vpop.permute.xlu0 %1007
  %1009 = vrot.lane.b32.xlu0 %v950, 16
  %v1010 = vpop.permute.xlu0 %1009
  %1011 = vrot.lane.b32.xlu0 %v954, 16
  %v1012 = vpop.permute.xlu0 %1011
  %1013 = vrot.lane.b32.xlu0 %v958, 16
  %v1014 = vpop.permute.xlu0 %1013
  %1015 = vrot.lane.b32.xlu0 %v962, 16
  %v1016 = vpop.permute.xlu0 %1015
  %1017 = vrot.lane.b32.xlu0 %v966, 16
  %v1018 = vpop.permute.xlu0 %1017
  %1019 = vrot.lane.b32.xlu0 %v970, 16
  %v1020 = vpop.permute.xlu0 %1019
  %1021 = vrot.lane.b32.xlu0 %v974, 16
  %v1022 = vpop.permute.xlu0 %1021
  %1023 = vrot.lane.b32.xlu0 %v978, 16
  %v1024 = vpop.permute.xlu0 %1023
  %1025 = vrot.lane.b32.xlu0 %v982, 16
  %v1026 = vpop.permute.xlu0 %1025
  %1027 = vrot.lane.b32.xlu0 %v986, 16
  %v1028 = vpop.permute.xlu0 %1027
  %1029 = vrot.lane.b32.xlu0 %v990, 16
  %v1030 = vpop.permute.xlu0 %1029
  %1031 = vrot.lane.b32.xlu0 %v994, 16
  %v1032 = vpop.permute.xlu0 %1031
  %1033 = vrot.lane.b32.xlu0 %v998, 16
  %v1034 = vpop.permute.xlu0 %1033
  %1035 = vrot.lane.b32.xlu0 %v1002, 16
  %v1036 = vpop.permute.xlu0 %1035
  %1037 = vrot.lane.b32.xlu0 %v1006, 16
  %v1038 = vpop.permute.xlu0 %1037
  %vm1055 = vcmask 191616
  %1056 = vst.msk [vmem:[#allocation3] sm:$0xf] %vm1055, %v1008
  %1057 = vst.msk [vmem:[#allocation3 + $0x4] sm:$0xf] %vm1055, %v1010
  %1058 = vst.msk [vmem:[#allocation3 + $0x8] sm:$0xf] %vm1055, %v1012
  %1059 = vst.msk [vmem:[#allocation3 + $0xc] sm:$0xf] %vm1055, %v1014
  %1060 = vst.msk [vmem:[#allocation3 + $0x10] sm:$0xf] %vm1055, %v1016
  %1061 = vst.msk [vmem:[#allocation3 + $0x14] sm:$0xf] %vm1055, %v1018
  %1062 = vst.msk [vmem:[#allocation3 + $0x18] sm:$0xf] %vm1055, %v1020
  %1063 = vst.msk [vmem:[#allocation3 + $0x1c] sm:$0xf] %vm1055, %v1022
  %1064 = vst.msk [vmem:[#allocation3 + $0x20] sm:$0xf] %vm1055, %v1024
  %1065 = vst.msk [vmem:[#allocation3 + $0x24] sm:$0xf] %vm1055, %v1026
  %1066 = vst.msk [vmem:[#allocation3 + $0x28] sm:$0xf] %vm1055, %v1028
  %1067 = vst.msk [vmem:[#allocation3 + $0x2c] sm:$0xf] %vm1055, %v1030
  %1068 = vst.msk [vmem:[#allocation3 + $0x30] sm:$0xf] %vm1055, %v1032
  %1069 = vst.msk [vmem:[#allocation3 + $0x34] sm:$0xf] %vm1055, %v1034
  %1070 = vst.msk [vmem:[#allocation3 + $0x38] sm:$0xf] %vm1055, %v1036
  %1071 = vst.msk [vmem:[#allocation3 + $0x3c] sm:$0xf] %vm1055, %v1038
  %v1072 = vld [vmem:[%s421] sm:$0xf]
  %v1073 = vld [vmem:[%s421 + $0x8] sm:$0xf]
  %v1074 = vld [vmem:[%s421 + $0x10] sm:$0xf]
  %v1075 = vld [vmem:[%s421 + $0x18] sm:$0xf]
  %v1076 = vld [vmem:[%s421 + $0x20] sm:$0xf]
  %v1077 = vld [vmem:[%s421 + $0x28] sm:$0xf]
  %v1078 = vld [vmem:[%s421 + $0x30] sm:$0xf]
  %v1079 = vld [vmem:[%s421 + $0x38] sm:$0xf]
  %v1080 = vld [vmem:[%s421 + $0x50] sm:$0xf]
  %v1081 = vld [vmem:[%s421 + $0x58] sm:$0xf]
  %v1082 = vld [vmem:[%s421 + $0x60] sm:$0xf]
  %v1083 = vld [vmem:[%s421 + $0x68] sm:$0xf]
  %v1084 = vld [vmem:[%s421 + $0x70] sm:$0xf]
  %v1085 = vld [vmem:[%s421 + $0x78] sm:$0xf]
  %v1086 = vld [vmem:[%s421 + $0x80] sm:$0xf]
  %v1087 = vld [vmem:[%s421 + $0x88] sm:$0xf]
  %1104 = vrot.lane.b32.xlu0 %v1072, 24
  %v1105 = vpop.permute.xlu0 %1104
  %1106 = vrot.lane.b32.xlu0 %v1073, 24
  %v1107 = vpop.permute.xlu0 %1106
  %1108 = vrot.lane.b32.xlu0 %v1074, 24
  %v1109 = vpop.permute.xlu0 %1108
  %1110 = vrot.lane.b32.xlu0 %v1075, 24
  %v1111 = vpop.permute.xlu0 %1110
  %1112 = vrot.lane.b32.xlu0 %v1076, 24
  %v1113 = vpop.permute.xlu0 %1112
  %1114 = vrot.lane.b32.xlu0 %v1077, 24
  %v1115 = vpop.permute.xlu0 %1114
  %1116 = vrot.lane.b32.xlu0 %v1078, 24
  %v1117 = vpop.permute.xlu0 %1116
  %1118 = vrot.lane.b32.xlu0 %v1079, 24
  %v1119 = vpop.permute.xlu0 %1118
  %1120 = vrot.lane.b32.xlu0 %v1080, 24
  %v1121 = vpop.permute.xlu0 %1120
  %1122 = vrot.lane.b32.xlu0 %v1081, 24
  %v1123 = vpop.permute.xlu0 %1122
  %1124 = vrot.lane.b32.xlu0 %v1082, 24
  %v1125 = vpop.permute.xlu0 %1124
  %1126 = vrot.lane.b32.xlu0 %v1083, 24
  %v1127 = vpop.permute.xlu0 %1126
  %1128 = vrot.lane.b32.xlu0 %v1084, 24
  %v1129 = vpop.permute.xlu0 %1128
  %1130 = vrot.lane.b32.xlu0 %v1085, 24
  %v1131 = vpop.permute.xlu0 %1130
  %1132 = vrot.lane.b32.xlu0 %v1086, 24
  %v1133 = vpop.permute.xlu0 %1132
  %1134 = vrot.lane.b32.xlu0 %v1087, 24
  %v1135 = vpop.permute.xlu0 %1134
  %vm1152 = vcmask 257216
  %1153 = vst.msk [vmem:[#allocation3] sm:$0xf] %vm1152, %v1105
  %1154 = vst.msk [vmem:[#allocation3 + $0x4] sm:$0xf] %vm1152, %v1107
  %1155 = vst.msk [vmem:[#allocation3 + $0x8] sm:$0xf] %vm1152, %v1109
  %1156 = vst.msk [vmem:[#allocation3 + $0xc] sm:$0xf] %vm1152, %v1111
  %1157 = vst.msk [vmem:[#allocation3 + $0x10] sm:$0xf] %vm1152, %v1113
  %1158 = vst.msk [vmem:[#allocation3 + $0x14] sm:$0xf] %vm1152, %v1115
  %1159 = vst.msk [vmem:[#allocation3 + $0x18] sm:$0xf] %vm1152, %v1117
  %1160 = vst.msk [vmem:[#allocation3 + $0x1c] sm:$0xf] %vm1152, %v1119
  %1161 = vst.msk [vmem:[#allocation3 + $0x20] sm:$0xf] %vm1152, %v1121
  %1162 = vst.msk [vmem:[#allocation3 + $0x24] sm:$0xf] %vm1152, %v1123
  %1163 = vst.msk [vmem:[#allocation3 + $0x28] sm:$0xf] %vm1152, %v1125
  %1164 = vst.msk [vmem:[#allocation3 + $0x2c] sm:$0xf] %vm1152, %v1127
  %1165 = vst.msk [vmem:[#allocation3 + $0x30] sm:$0xf] %vm1152, %v1129
  %1166 = vst.msk [vmem:[#allocation3 + $0x34] sm:$0xf] %vm1152, %v1131
  %1167 = vst.msk [vmem:[#allocation3 + $0x38] sm:$0xf] %vm1152, %v1133
  %1168 = vst.msk [vmem:[#allocation3 + $0x3c] sm:$0xf] %vm1152, %v1135
  %v1169 = vld [vmem:[%s421] sm:$0xf]
  %v1170 = vld [vmem:[%s421 + $0x4] sm:$0x1]
  %v1171 = vld [vmem:[%s421 + $0x8] sm:$0xf]
  %v1172 = vld [vmem:[%s421 + $0xc] sm:$0x1]
  %v1173 = vld [vmem:[%s421 + $0x10] sm:$0xf]
  %v1174 = vld [vmem:[%s421 + $0x14] sm:$0x1]
  %v1175 = vld [vmem:[%s421 + $0x18] sm:$0xf]
  %v1176 = vld [vmem:[%s421 + $0x1c] sm:$0x1]
  %v1177 = vld [vmem:[%s421 + $0x20] sm:$0xf]
  %v1178 = vld [vmem:[%s421 + $0x24] sm:$0x1]
  %v1179 = vld [vmem:[%s421 + $0x28] sm:$0xf]
  %v1180 = vld [vmem:[%s421 + $0x2c] sm:$0x1]
  %v1181 = vld [vmem:[%s421 + $0x30] sm:$0xf]
  %v1182 = vld [vmem:[%s421 + $0x34] sm:$0x1]
  %v1183 = vld [vmem:[%s421 + $0x38] sm:$0xf]
  %v1184 = vld [vmem:[%s421 + $0x3c] sm:$0x1]
  %v1185 = vld [vmem:[%s421 + $0x50] sm:$0xf]
  %v1186 = vld [vmem:[%s421 + $0x54] sm:$0x1]
  %v1187 = vld [vmem:[%s421 + $0x58] sm:$0xf]
  %v1188 = vld [vmem:[%s421 + $0x5c] sm:$0x1]
  %v1189 = vld [vmem:[%s421 + $0x60] sm:$0xf]
  %v1190 = vld [vmem:[%s421 + $0x64] sm:$0x1]
  %v1191 = vld [vmem:[%s421 + $0x68] sm:$0xf]
  %v1192 = vld [vmem:[%s421 + $0x6c] sm:$0x1]
  %v1193 = vld [vmem:[%s421 + $0x70] sm:$0xf]
  %v1194 = vld [vmem:[%s421 + $0x74] sm:$0x1]
  %v1195 = vld [vmem:[%s421 + $0x78] sm:$0xf]
  %v1196 = vld [vmem:[%s421 + $0x7c] sm:$0x1]
  %v1197 = vld [vmem:[%s421 + $0x80] sm:$0xf]
  %v1198 = vld [vmem:[%s421 + $0x84] sm:$0x1]
  %v1199 = vld [vmem:[%s421 + $0x88] sm:$0xf]
  %v1200 = vld [vmem:[%s421 + $0x8c] sm:$0x1]
  %v1202 = vshrl.u32 %v1169, 16
  %v1204 = vrot.slane %v1202, 4
  %v1205 = vshll.u32 %v1169, 16
  %v1207 = vrot.slane %v1205, 5
  %v1208 = vor.u32 %v1204, %v1207
  %v1209 = vrot.slane %v1208, 4
  %v1211 = vshll.u32 %v1170, 16
  %v1213 = vrot.slane %v1211, 5
  %v1214 = vsel %vm586, %v1209, %v1213
  %v1216 = vshrl.u32 %v1171, 16
  %v1218 = vrot.slane %v1216, 4
  %v1219 = vshll.u32 %v1171, 16
  %v1221 = vrot.slane %v1219, 5
  %v1222 = vor.u32 %v1218, %v1221
  %v1223 = vrot.slane %v1222, 4
  %v1225 = vshll.u32 %v1172, 16
  %v1227 = vrot.slane %v1225, 5
  %v1228 = vsel %vm586, %v1223, %v1227
  %v1230 = vshrl.u32 %v1173, 16
  %v1232 = vrot.slane %v1230, 4
  %v1233 = vshll.u32 %v1173, 16
  %v1235 = vrot.slane %v1233, 5
  %v1236 = vor.u32 %v1232, %v1235
  %v1237 = vrot.slane %v1236, 4
  %v1239 = vshll.u32 %v1174, 16
  %v1241 = vrot.slane %v1239, 5
  %v1242 = vsel %vm586, %v1237, %v1241
  %v1244 = vshrl.u32 %v1175, 16
  %v1246 = vrot.slane %v1244, 4
  %v1247 = vshll.u32 %v1175, 16
  %v1249 = vrot.slane %v1247, 5
  %v1250 = vor.u32 %v1246, %v1249
  %v1251 = vrot.slane %v1250, 4
  %v1253 = vshll.u32 %v1176, 16
  %v1255 = vrot.slane %v1253, 5
  %v1256 = vsel %vm586, %v1251, %v1255
  %v1258 = vshrl.u32 %v1177, 16
  %v1260 = vrot.slane %v1258, 4
  %v1261 = vshll.u32 %v1177, 16
  %v1263 = vrot.slane %v1261, 5
  %v1264 = vor.u32 %v1260, %v1263
  %v1265 = vrot.slane %v1264, 4
  %v1267 = vshll.u32 %v1178, 16
  %v1269 = vrot.slane %v1267, 5
  %v1270 = vsel %vm586, %v1265, %v1269
  %v1272 = vshrl.u32 %v1179, 16
  %v1274 = vrot.slane %v1272, 4
  %v1275 = vshll.u32 %v1179, 16
  %v1277 = vrot.slane %v1275, 5
  %v1278 = vor.u32 %v1274, %v1277
  %v1279 = vrot.slane %v1278, 4
  %v1281 = vshll.u32 %v1180, 16
  %v1283 = vrot.slane %v1281, 5
  %v1284 = vsel %vm586, %v1279, %v1283
  %v1286 = vshrl.u32 %v1181, 16
  %v1288 = vrot.slane %v1286, 4
  %v1289 = vshll.u32 %v1181, 16
  %v1291 = vrot.slane %v1289, 5
  %v1292 = vor.u32 %v1288, %v1291
  %v1293 = vrot.slane %v1292, 4
  %v1295 = vshll.u32 %v1182, 16
  %v1297 = vrot.slane %v1295, 5
  %v1298 = vsel %vm586, %v1293, %v1297
  %v1300 = vshrl.u32 %v1183, 16
  %v1302 = vrot.slane %v1300, 4
  %v1303 = vshll.u32 %v1183, 16
  %v1305 = vrot.slane %v1303, 5
  %v1306 = vor.u32 %v1302, %v1305
  %v1307 = vrot.slane %v1306, 4
  %v1309 = vshll.u32 %v1184, 16
  %v1311 = vrot.slane %v1309, 5
  %v1312 = vsel %vm586, %v1307, %v1311
  %v1314 = vshrl.u32 %v1185, 16
  %v1316 = vrot.slane %v1314, 4
  %v1317 = vshll.u32 %v1185, 16
  %v1319 = vrot.slane %v1317, 5
  %v1320 = vor.u32 %v1316, %v1319
  %v1321 = vrot.slane %v1320, 4
  %v1323 = vshll.u32 %v1186, 16
  %v1325 = vrot.slane %v1323, 5
  %v1326 = vsel %vm586, %v1321, %v1325
  %v1328 = vshrl.u32 %v1187, 16
  %v1330 = vrot.slane %v1328, 4
  %v1331 = vshll.u32 %v1187, 16
  %v1333 = vrot.slane %v1331, 5
  %v1334 = vor.u32 %v1330, %v1333
  %v1335 = vrot.slane %v1334, 4
  %v1337 = vshll.u32 %v1188, 16
  %v1339 = vrot.slane %v1337, 5
  %v1340 = vsel %vm586, %v1335, %v1339
  %v1342 = vshrl.u32 %v1189, 16
  %v1344 = vrot.slane %v1342, 4
  %v1345 = vshll.u32 %v1189, 16
  %v1347 = vrot.slane %v1345, 5
  %v1348 = vor.u32 %v1344, %v1347
  %v1349 = vrot.slane %v1348, 4
  %v1351 = vshll.u32 %v1190, 16
  %v1353 = vrot.slane %v1351, 5
  %v1354 = vsel %vm586, %v1349, %v1353
  %v1356 = vshrl.u32 %v1191, 16
  %v1358 = vrot.slane %v1356, 4
  %v1359 = vshll.u32 %v1191, 16
  %v1361 = vrot.slane %v1359, 5
  %v1362 = vor.u32 %v1358, %v1361
  %v1363 = vrot.slane %v1362, 4
  %v1365 = vshll.u32 %v1192, 16
  %v1367 = vrot.slane %v1365, 5
  %v1368 = vsel %vm586, %v1363, %v1367
  %v1370 = vshrl.u32 %v1193, 16
  %v1372 = vrot.slane %v1370, 4
  %v1373 = vshll.u32 %v1193, 16
  %v1375 = vrot.slane %v1373, 5
  %v1376 = vor.u32 %v1372, %v1375
  %v1377 = vrot.slane %v1376, 4
  %v1379 = vshll.u32 %v1194, 16
  %v1381 = vrot.slane %v1379, 5
  %v1382 = vsel %vm586, %v1377, %v1381
  %v1384 = vshrl.u32 %v1195, 16
  %v1386 = vrot.slane %v1384, 4
  %v1387 = vshll.u32 %v1195, 16
  %v1389 = vrot.slane %v1387, 5
  %v1390 = vor.u32 %v1386, %v1389
  %v1391 = vrot.slane %v1390, 4
  %v1393 = vshll.u32 %v1196, 16
  %v1395 = vrot.slane %v1393, 5
  %v1396 = vsel %vm586, %v1391, %v1395
  %v1398 = vshrl.u32 %v1197, 16
  %v1400 = vrot.slane %v1398, 4
  %v1401 = vshll.u32 %v1197, 16
  %v1403 = vrot.slane %v1401, 5
  %v1404 = vor.u32 %v1400, %v1403
  %v1405 = vrot.slane %v1404, 4
  %v1407 = vshll.u32 %v1198, 16
  %v1409 = vrot.slane %v1407, 5
  %v1410 = vsel %vm586, %v1405, %v1409
  %v1412 = vshrl.u32 %v1199, 16
  %v1414 = vrot.slane %v1412, 4
  %v1415 = vshll.u32 %v1199, 16
  %v1417 = vrot.slane %v1415, 5
  %v1418 = vor.u32 %v1414, %v1417
  %v1419 = vrot.slane %v1418, 4
  %v1421 = vshll.u32 %v1200, 16
  %v1423 = vrot.slane %v1421, 5
  %v1424 = vsel %vm586, %v1419, %v1423
  %1425 = vrot.lane.b32.xlu0 %v1214, 32
  %v1426 = vpop.permute.xlu0 %1425
  %1427 = vrot.lane.b32.xlu0 %v1228, 32
  %v1428 = vpop.permute.xlu0 %1427
  %1429 = vrot.lane.b32.xlu0 %v1242, 32
  %v1430 = vpop.permute.xlu0 %1429
  %1431 = vrot.lane.b32.xlu0 %v1256, 32
  %v1432 = vpop.permute.xlu0 %1431
  %1433 = vrot.lane.b32.xlu0 %v1270, 32
  %v1434 = vpop.permute.xlu0 %1433
  %1435 = vrot.lane.b32.xlu0 %v1284, 32
  %v1436 = vpop.permute.xlu0 %1435
  %1437 = vrot.lane.b32.xlu0 %v1298, 32
  %v1438 = vpop.permute.xlu0 %1437
  %1439 = vrot.lane.b32.xlu0 %v1312, 32
  %v1440 = vpop.permute.xlu0 %1439
  %1441 = vrot.lane.b32.xlu0 %v1326, 32
  %v1442 = vpop.permute.xlu0 %1441
  %1443 = vrot.lane.b32.xlu0 %v1340, 32
  %v1444 = vpop.permute.xlu0 %1443
  %1445 = vrot.lane.b32.xlu0 %v1354, 32
  %v1446 = vpop.permute.xlu0 %1445
  %1447 = vrot.lane.b32.xlu0 %v1368, 32
  %v1448 = vpop.permute.xlu0 %1447
  %1449 = vrot.lane.b32.xlu0 %v1382, 32
  %v1450 = vpop.permute.xlu0 %1449
  %1451 = vrot.lane.b32.xlu0 %v1396, 32
  %v1452 = vpop.permute.xlu0 %1451
  %1453 = vrot.lane.b32.xlu0 %v1410, 32
  %v1454 = vpop.permute.xlu0 %1453
  %1455 = vrot.lane.b32.xlu0 %v1424, 32
  %v1456 = vpop.permute.xlu0 %1455
  %vm1473 = vcmask 322816
  %1474 = vst.msk [vmem:[#allocation3] sm:$0xf] %vm1473, %v1426
  %1475 = vst.msk [vmem:[#allocation3 + $0x4] sm:$0xf] %vm1473, %v1428
  %1476 = vst.msk [vmem:[#allocation3 + $0x8] sm:$0xf] %vm1473, %v1430
  %1477 = vst.msk [vmem:[#allocation3 + $0xc] sm:$0xf] %vm1473, %v1432
  %1478 = vst.msk [vmem:[#allocation3 + $0x10] sm:$0xf] %vm1473, %v1434
  %1479 = vst.msk [vmem:[#allocation3 + $0x14] sm:$0xf] %vm1473, %v1436
  %1480 = vst.msk [vmem:[#allocation3 + $0x18] sm:$0xf] %vm1473, %v1438
  %1481 = vst.msk [vmem:[#allocation3 + $0x1c] sm:$0xf] %vm1473, %v1440
  %1482 = vst.msk [vmem:[#allocation3 + $0x20] sm:$0xf] %vm1473, %v1442
  %1483 = vst.msk [vmem:[#allocation3 + $0x24] sm:$0xf] %vm1473, %v1444
  %1484 = vst.msk [vmem:[#allocation3 + $0x28] sm:$0xf] %vm1473, %v1446
  %1485 = vst.msk [vmem:[#allocation3 + $0x2c] sm:$0xf] %vm1473, %v1448
  %1486 = vst.msk [vmem:[#allocation3 + $0x30] sm:$0xf] %vm1473, %v1450
  %1487 = vst.msk [vmem:[#allocation3 + $0x34] sm:$0xf] %vm1473, %v1452
  %1488 = vst.msk [vmem:[#allocation3 + $0x38] sm:$0xf] %vm1473, %v1454
  %1489 = vst.msk [vmem:[#allocation3 + $0x3c] sm:$0xf] %vm1473, %v1456
  %v1490 = vld [vmem:[%s421] sm:$0xe]
  %v1491 = vld [vmem:[%s421 + $0x4] sm:$0x1]
  %v1492 = vld [vmem:[%s421 + $0x8] sm:$0xe]
  %v1493 = vld [vmem:[%s421 + $0xc] sm:$0x1]
  %v1494 = vld [vmem:[%s421 + $0x10] sm:$0xe]
  %v1495 = vld [vmem:[%s421 + $0x14] sm:$0x1]
  %v1496 = vld [vmem:[%s421 + $0x18] sm:$0xe]
  %v1497 = vld [vmem:[%s421 + $0x1c] sm:$0x1]
  %v1498 = vld [vmem:[%s421 + $0x20] sm:$0xe]
  %v1499 = vld [vmem:[%s421 + $0x24] sm:$0x1]
  %v1500 = vld [vmem:[%s421 + $0x28] sm:$0xe]
  %v1501 = vld [vmem:[%s421 + $0x2c] sm:$0x1]
  %v1502 = vld [vmem:[%s421 + $0x30] sm:$0xe]
  %v1503 = vld [vmem:[%s421 + $0x34] sm:$0x1]
  %v1504 = vld [vmem:[%s421 + $0x38] sm:$0xe]
  %v1505 = vld [vmem:[%s421 + $0x3c] sm:$0x1]
  %v1506 = vld [vmem:[%s421 + $0x50] sm:$0xe]
  %v1507 = vld [vmem:[%s421 + $0x54] sm:$0x1]
  %v1508 = vld [vmem:[%s421 + $0x58] sm:$0xe]
  %v1509 = vld [vmem:[%s421 + $0x5c] sm:$0x1]
  %v1510 = vld [vmem:[%s421 + $0x60] sm:$0xe]
  %v1511 = vld [vmem:[%s421 + $0x64] sm:$0x1]
  %v1512 = vld [vmem:[%s421 + $0x68] sm:$0xe]
  %v1513 = vld [vmem:[%s421 + $0x6c] sm:$0x1]
  %v1514 = vld [vmem:[%s421 + $0x70] sm:$0xe]
  %v1515 = vld [vmem:[%s421 + $0x74] sm:$0x1]
  %v1516 = vld [vmem:[%s421 + $0x78] sm:$0xe]
  %v1517 = vld [vmem:[%s421 + $0x7c] sm:$0x1]
  %v1518 = vld [vmem:[%s421 + $0x80] sm:$0xe]
  %v1519 = vld [vmem:[%s421 + $0x84] sm:$0x1]
  %v1520 = vld [vmem:[%s421 + $0x88] sm:$0xe]
  %v1521 = vld [vmem:[%s421 + $0x8c] sm:$0x1]
  %v1554 = vrot.slane %v1490, 5
  %v1555 = vrot.slane %v1554, 4
  %v1556 = vrot.slane %v1491, 5
  %v1557 = vsel %vm942, %v1555, %v1556
  %v1558 = vrot.slane %v1492, 5
  %v1559 = vrot.slane %v1558, 4
  %v1560 = vrot.slane %v1493, 5
  %v1561 = vsel %vm942, %v1559, %v1560
  %v1562 = vrot.slane %v1494, 5
  %v1563 = vrot.slane %v1562, 4
  %v1564 = vrot.slane %v1495, 5
  %v1565 = vsel %vm942, %v1563, %v1564
  %v1566 = vrot.slane %v1496, 5
  %v1567 = vrot.slane %v1566, 4
  %v1568 = vrot.slane %v1497, 5
  %v1569 = vsel %vm942, %v1567, %v1568
  %v1570 = vrot.slane %v1498, 5
  %v1571 = vrot.slane %v1570, 4
  %v1572 = vrot.slane %v1499, 5
  %v1573 = vsel %vm942, %v1571, %v1572
  %v1574 = vrot.slane %v1500, 5
  %v1575 = vrot.slane %v1574, 4
  %v1576 = vrot.slane %v1501, 5
  %v1577 = vsel %vm942, %v1575, %v1576
  %v1578 = vrot.slane %v1502, 5
  %v1579 = vrot.slane %v1578, 4
  %v1580 = vrot.slane %v1503, 5
  %v1581 = vsel %vm942, %v1579, %v1580
  %v1582 = vrot.slane %v1504, 5
  %v1583 = vrot.slane %v1582, 4
  %v1584 = vrot.slane %v1505, 5
  %v1585 = vsel %vm942, %v1583, %v1584
  %v1586 = vrot.slane %v1506, 5
  %v1587 = vrot.slane %v1586, 4
  %v1588 = vrot.slane %v1507, 5
  %v1589 = vsel %vm942, %v1587, %v1588
  %v1590 = vrot.slane %v1508, 5
  %v1591 = vrot.slane %v1590, 4
  %v1592 = vrot.slane %v1509, 5
  %v1593 = vsel %vm942, %v1591, %v1592
  %v1594 = vrot.slane %v1510, 5
  %v1595 = vrot.slane %v1594, 4
  %v1596 = vrot.slane %v1511, 5
  %v1597 = vsel %vm942, %v1595, %v1596
  %v1598 = vrot.slane %v1512, 5
  %v1599 = vrot.slane %v1598, 4
  %v1600 = vrot.slane %v1513, 5
  %v1601 = vsel %vm942, %v1599, %v1600
  %v1602 = vrot.slane %v1514, 5
  %v1603 = vrot.slane %v1602, 4
  %v1604 = vrot.slane %v1515, 5
  %v1605 = vsel %vm942, %v1603, %v1604
  %v1606 = vrot.slane %v1516, 5
  %v1607 = vrot.slane %v1606, 4
  %v1608 = vrot.slane %v1517, 5
  %v1609 = vsel %vm942, %v1607, %v1608
  %v1610 = vrot.slane %v1518, 5
  %v1611 = vrot.slane %v1610, 4
  %v1612 = vrot.slane %v1519, 5
  %v1613 = vsel %vm942, %v1611, %v1612
  %v1614 = vrot.slane %v1520, 5
  %v1615 = vrot.slane %v1614, 4
  %v1616 = vrot.slane %v1521, 5
  %v1617 = vsel %vm942, %v1615, %v1616
  %1618 = vrot.lane.b32.xlu0 %v1557, 40
  %v1619 = vpop.permute.xlu0 %1618
  %1620 = vrot.lane.b32.xlu0 %v1561, 40
  %v1621 = vpop.permute.xlu0 %1620
  %1622 = vrot.lane.b32.xlu0 %v1565, 40
  %v1623 = vpop.permute.xlu0 %1622
  %1624 = vrot.lane.b32.xlu0 %v1569, 40
  %v1625 = vpop.permute.xlu0 %1624
  %1626 = vrot.lane.b32.xlu0 %v1573, 40
  %v1627 = vpop.permute.xlu0 %1626
  %1628 = vrot.lane.b32.xlu0 %v1577, 40
  %v1629 = vpop.permute.xlu0 %1628
  %1630 = vrot.lane.b32.xlu0 %v1581, 40
  %v1631 = vpop.permute.xlu0 %1630
  %1632 = vrot.lane.b32.xlu0 %v1585, 40
  %v1633 = vpop.permute.xlu0 %1632
  %1634 = vrot.lane.b32.xlu0 %v1589, 40
  %v1635 = vpop.permute.xlu0 %1634
  %1636 = vrot.lane.b32.xlu0 %v1593, 40
  %v1637 = vpop.permute.xlu0 %1636
  %1638 = vrot.lane.b32.xlu0 %v1597, 40
  %v1639 = vpop.permute.xlu0 %1638
  %1640 = vrot.lane.b32.xlu0 %v1601, 40
  %v1641 = vpop.permute.xlu0 %1640
  %1642 = vrot.lane.b32.xlu0 %v1605, 40
  %v1643 = vpop.permute.xlu0 %1642
  %1644 = vrot.lane.b32.xlu0 %v1609, 40
  %v1645 = vpop.permute.xlu0 %1644
  %1646 = vrot.lane.b32.xlu0 %v1613, 40
  %v1647 = vpop.permute.xlu0 %1646
  %1648 = vrot.lane.b32.xlu0 %v1617, 40
  %v1649 = vpop.permute.xlu0 %1648
  %vm1666 = vcmask 388416
  %1667 = vst.msk [vmem:[#allocation3] sm:$0xf] %vm1666, %v1619
  %1668 = vst.msk [vmem:[#allocation3 + $0x4] sm:$0xf] %vm1666, %v1621
  %1669 = vst.msk [vmem:[#allocation3 + $0x8] sm:$0xf] %vm1666, %v1623
  %1670 = vst.msk [vmem:[#allocation3 + $0xc] sm:$0xf] %vm1666, %v1625
  %1671 = vst.msk [vmem:[#allocation3 + $0x10] sm:$0xf] %vm1666, %v1627
  %1672 = vst.msk [vmem:[#allocation3 + $0x14] sm:$0xf] %vm1666, %v1629
  %1673 = vst.msk [vmem:[#allocation3 + $0x18] sm:$0xf] %vm1666, %v1631
  %1674 = vst.msk [vmem:[#allocation3 + $0x1c] sm:$0xf] %vm1666, %v1633
  %1675 = vst.msk [vmem:[#allocation3 + $0x20] sm:$0xf] %vm1666, %v1635
  %1676 = vst.msk [vmem:[#allocation3 + $0x24] sm:$0xf] %vm1666, %v1637
  %1677 = vst.msk [vmem:[#allocation3 + $0x28] sm:$0xf] %vm1666, %v1639
  %1678 = vst.msk [vmem:[#allocation3 + $0x2c] sm:$0xf] %vm1666, %v1641
  %1679 = vst.msk [vmem:[#allocation3 + $0x30] sm:$0xf] %vm1666, %v1643
  %1680 = vst.msk [vmem:[#allocation3 + $0x34] sm:$0xf] %vm1666, %v1645
  %1681 = vst.msk [vmem:[#allocation3 + $0x38] sm:$0xf] %vm1666, %v1647
  %1682 = vst.msk [vmem:[#allocation3 + $0x3c] sm:$0xf] %vm1666, %v1649
  %s1683 = scalar_lea.vmem [#allocation2], 16
  %v1684 = vld [vmem:[%s1683] sm:$0xf]
  %v1685 = vld [vmem:[%s1683 + $0x8] sm:$0xf]
  %v1686 = vld [vmem:[%s1683 + $0x10] sm:$0xf]
  %v1687 = vld [vmem:[%s1683 + $0x18] sm:$0xf]
  %v1688 = vld [vmem:[%s1683 + $0x20] sm:$0xf]
  %v1689 = vld [vmem:[%s1683 + $0x28] sm:$0xf]
  %v1690 = vld [vmem:[%s1683 + $0x30] sm:$0xf]
  %v1691 = vld [vmem:[%s1683 + $0x38] sm:$0xf]
  %v1692 = vld [vmem:[%s1683 + $0x50] sm:$0xf]
  %v1693 = vld [vmem:[%s1683 + $0x58] sm:$0xf]
  %v1694 = vld [vmem:[%s1683 + $0x60] sm:$0xf]
  %v1695 = vld [vmem:[%s1683 + $0x68] sm:$0xf]
  %v1696 = vld [vmem:[%s1683 + $0x70] sm:$0xf]
  %v1697 = vld [vmem:[%s1683 + $0x78] sm:$0xf]
  %v1698 = vld [vmem:[%s1683 + $0x80] sm:$0xf]
  %v1699 = vld [vmem:[%s1683 + $0x88] sm:$0xf]
  %1716 = vrot.lane.b32.xlu0 %v1684, 48
  %v1717 = vpop.permute.xlu0 %1716
  %1718 = vrot.lane.b32.xlu0 %v1685, 48
  %v1719 = vpop.permute.xlu0 %1718
  %1720 = vrot.lane.b32.xlu0 %v1686, 48
  %v1721 = vpop.permute.xlu0 %1720
  %1722 = vrot.lane.b32.xlu0 %v1687, 48
  %v1723 = vpop.permute.xlu0 %1722
  %1724 = vrot.lane.b32.xlu0 %v1688, 48
  %v1725 = vpop.permute.xlu0 %1724
  %1726 = vrot.lane.b32.xlu0 %v1689, 48
  %v1727 = vpop.permute.xlu0 %1726
  %1728 = vrot.lane.b32.xlu0 %v1690, 48
  %v1729 = vpop.permute.xlu0 %1728
  %1730 = vrot.lane.b32.xlu0 %v1691, 48
  %v1731 = vpop.permute.xlu0 %1730
  %1732 = vrot.lane.b32.xlu0 %v1692, 48
  %v1733 = vpop.permute.xlu0 %1732
  %1734 = vrot.lane.b32.xlu0 %v1693, 48
  %v1735 = vpop.permute.xlu0 %1734
  %1736 = vrot.lane.b32.xlu0 %v1694, 48
  %v1737 = vpop.permute.xlu0 %1736
  %1738 = vrot.lane.b32.xlu0 %v1695, 48
  %v1739 = vpop.permute.xlu0 %1738
  %1740 = vrot.lane.b32.xlu0 %v1696, 48
  %v1741 = vpop.permute.xlu0 %1740
  %1742 = vrot.lane.b32.xlu0 %v1697, 48
  %v1743 = vpop.permute.xlu0 %1742
  %1744 = vrot.lane.b32.xlu0 %v1698, 48
  %v1745 = vpop.permute.xlu0 %1744
  %1746 = vrot.lane.b32.xlu0 %v1699, 48
  %v1747 = vpop.permute.xlu0 %1746
  %vm1764 = vcmask 454016
  %1765 = vst.msk [vmem:[#allocation3] sm:$0xf] %vm1764, %v1717
  %1766 = vst.msk [vmem:[#allocation3 + $0x4] sm:$0xf] %vm1764, %v1719
  %1767 = vst.msk [vmem:[#allocation3 + $0x8] sm:$0xf] %vm1764, %v1721
  %1768 = vst.msk [vmem:[#allocation3 + $0xc] sm:$0xf] %vm1764, %v1723
  %1769 = vst.msk [vmem:[#allocation3 + $0x10] sm:$0xf] %vm1764, %v1725
  %1770 = vst.msk [vmem:[#allocation3 + $0x14] sm:$0xf] %vm1764, %v1727
  %1771 = vst.msk [vmem:[#allocation3 + $0x18] sm:$0xf] %vm1764, %v1729
  %1772 = vst.msk [vmem:[#allocation3 + $0x1c] sm:$0xf] %vm1764, %v1731
  %1773 = vst.msk [vmem:[#allocation3 + $0x20] sm:$0xf] %vm1764, %v1733
  %1774 = vst.msk [vmem:[#allocation3 + $0x24] sm:$0xf] %vm1764, %v1735
  %1775 = vst.msk [vmem:[#allocation3 + $0x28] sm:$0xf] %vm1764, %v1737
  %1776 = vst.msk [vmem:[#allocation3 + $0x2c] sm:$0xf] %vm1764, %v1739
  %1777 = vst.msk [vmem:[#allocation3 + $0x30] sm:$0xf] %vm1764, %v1741
  %1778 = vst.msk [vmem:[#allocation3 + $0x34] sm:$0xf] %vm1764, %v1743
  %1779 = vst.msk [vmem:[#allocation3 + $0x38] sm:$0xf] %vm1764, %v1745
  %1780 = vst.msk [vmem:[#allocation3 + $0x3c] sm:$0xf] %vm1764, %v1747
  %v1781 = vld [vmem:[%s1683] sm:$0xf]
  %v1782 = vld [vmem:[%s1683 + $0x4] sm:$0x1]
  %v1783 = vld [vmem:[%s1683 + $0x8] sm:$0xf]
  %v1784 = vld [vmem:[%s1683 + $0xc] sm:$0x1]
  %v1785 = vld [vmem:[%s1683 + $0x10] sm:$0xf]
  %v1786 = vld [vmem:[%s1683 + $0x14] sm:$0x1]
  %v1787 = vld [vmem:[%s1683 + $0x18] sm:$0xf]
  %v1788 = vld [vmem:[%s1683 + $0x1c] sm:$0x1]
  %v1789 = vld [vmem:[%s1683 + $0x20] sm:$0xf]
  %v1790 = vld [vmem:[%s1683 + $0x24] sm:$0x1]
  %v1791 = vld [vmem:[%s1683 + $0x28] sm:$0xf]
  %v1792 = vld [vmem:[%s1683 + $0x2c] sm:$0x1]
  %v1793 = vld [vmem:[%s1683 + $0x30] sm:$0xf]
  %v1794 = vld [vmem:[%s1683 + $0x34] sm:$0x1]
  %v1795 = vld [vmem:[%s1683 + $0x38] sm:$0xf]
  %v1796 = vld [vmem:[%s1683 + $0x3c] sm:$0x1]
  %v1797 = vld [vmem:[%s1683 + $0x50] sm:$0xf]
  %v1798 = vld [vmem:[%s1683 + $0x54] sm:$0x1]
  %v1799 = vld [vmem:[%s1683 + $0x58] sm:$0xf]
  %v1800 = vld [vmem:[%s1683 + $0x5c] sm:$0x1]
  %v1801 = vld [vmem:[%s1683 + $0x60] sm:$0xf]
  %v1802 = vld [vmem:[%s1683 + $0x64] sm:$0x1]
  %v1803 = vld [vmem:[%s1683 + $0x68] sm:$0xf]
  %v1804 = vld [vmem:[%s1683 + $0x6c] sm:$0x1]
  %v1805 = vld [vmem:[%s1683 + $0x70] sm:$0xf]
  %v1806 = vld [vmem:[%s1683 + $0x74] sm:$0x1]
  %v1807 = vld [vmem:[%s1683 + $0x78] sm:$0xf]
  %v1808 = vld [vmem:[%s1683 + $0x7c] sm:$0x1]
  %v1809 = vld [vmem:[%s1683 + $0x80] sm:$0xf]
  %v1810 = vld [vmem:[%s1683 + $0x84] sm:$0x1]
  %v1811 = vld [vmem:[%s1683 + $0x88] sm:$0xf]
  %v1812 = vld [vmem:[%s1683 + $0x8c] sm:$0x1]
  %v1814 = vshrl.u32 %v1781, 16
  %v1816 = vrot.slane %v1814, 4
  %v1817 = vshll.u32 %v1781, 16
  %v1819 = vrot.slane %v1817, 5
  %v1820 = vor.u32 %v1816, %v1819
  %v1821 = vrot.slane %v1820, 4
  %v1823 = vshll.u32 %v1782, 16
  %v1825 = vrot.slane %v1823, 5
  %v1826 = vsel %vm586, %v1821, %v1825
  %v1828 = vshrl.u32 %v1783, 16
  %v1830 = vrot.slane %v1828, 4
  %v1831 = vshll.u32 %v1783, 16
  %v1833 = vrot.slane %v1831, 5
  %v1834 = vor.u32 %v1830, %v1833
  %v1835 = vrot.slane %v1834, 4
  %v1837 = vshll.u32 %v1784, 16
  %v1839 = vrot.slane %v1837, 5
  %v1840 = vsel %vm586, %v1835, %v1839
  %v1842 = vshrl.u32 %v1785, 16
  %v1844 = vrot.slane %v1842, 4
  %v1845 = vshll.u32 %v1785, 16
  %v1847 = vrot.slane %v1845, 5
  %v1848 = vor.u32 %v1844, %v1847
  %v1849 = vrot.slane %v1848, 4
  %v1851 = vshll.u32 %v1786, 16
  %v1853 = vrot.slane %v1851, 5
  %v1854 = vsel %vm586, %v1849, %v1853
  %v1856 = vshrl.u32 %v1787, 16
  %v1858 = vrot.slane %v1856, 4
  %v1859 = vshll.u32 %v1787, 16
  %v1861 = vrot.slane %v1859, 5
  %v1862 = vor.u32 %v1858, %v1861
  %v1863 = vrot.slane %v1862, 4
  %v1865 = vshll.u32 %v1788, 16
  %v1867 = vrot.slane %v1865, 5
  %v1868 = vsel %vm586, %v1863, %v1867
  %v1870 = vshrl.u32 %v1789, 16
  %v1872 = vrot.slane %v1870, 4
  %v1873 = vshll.u32 %v1789, 16
  %v1875 = vrot.slane %v1873, 5
  %v1876 = vor.u32 %v1872, %v1875
  %v1877 = vrot.slane %v1876, 4
  %v1879 = vshll.u32 %v1790, 16
  %v1881 = vrot.slane %v1879, 5
  %v1882 = vsel %vm586, %v1877, %v1881
  %v1884 = vshrl.u32 %v1791, 16
  %v1886 = vrot.slane %v1884, 4
  %v1887 = vshll.u32 %v1791, 16
  %v1889 = vrot.slane %v1887, 5
  %v1890 = vor.u32 %v1886, %v1889
  %v1891 = vrot.slane %v1890, 4
  %v1893 = vshll.u32 %v1792, 16
  %v1895 = vrot.slane %v1893, 5
  %v1896 = vsel %vm586, %v1891, %v1895
  %v1898 = vshrl.u32 %v1793, 16
  %v1900 = vrot.slane %v1898, 4
  %v1901 = vshll.u32 %v1793, 16
  %v1903 = vrot.slane %v1901, 5
  %v1904 = vor.u32 %v1900, %v1903
  %v1905 = vrot.slane %v1904, 4
  %v1907 = vshll.u32 %v1794, 16
  %v1909 = vrot.slane %v1907, 5
  %v1910 = vsel %vm586, %v1905, %v1909
  %v1912 = vshrl.u32 %v1795, 16
  %v1914 = vrot.slane %v1912, 4
  %v1915 = vshll.u32 %v1795, 16
  %v1917 = vrot.slane %v1915, 5
  %v1918 = vor.u32 %v1914, %v1917
  %v1919 = vrot.slane %v1918, 4
  %v1921 = vshll.u32 %v1796, 16
  %v1923 = vrot.slane %v1921, 5
  %v1924 = vsel %vm586, %v1919, %v1923
  %v1926 = vshrl.u32 %v1797, 16
  %v1928 = vrot.slane %v1926, 4
  %v1929 = vshll.u32 %v1797, 16
  %v1931 = vrot.slane %v1929, 5
  %v1932 = vor.u32 %v1928, %v1931
  %v1933 = vrot.slane %v1932, 4
  %v1935 = vshll.u32 %v1798, 16
  %v1937 = vrot.slane %v1935, 5
  %v1938 = vsel %vm586, %v1933, %v1937
  %v1940 = vshrl.u32 %v1799, 16
  %v1942 = vrot.slane %v1940, 4
  %v1943 = vshll.u32 %v1799, 16
  %v1945 = vrot.slane %v1943, 5
  %v1946 = vor.u32 %v1942, %v1945
  %v1947 = vrot.slane %v1946, 4
  %v1949 = vshll.u32 %v1800, 16
  %v1951 = vrot.slane %v1949, 5
  %v1952 = vsel %vm586, %v1947, %v1951
  %v1954 = vshrl.u32 %v1801, 16
  %v1956 = vrot.slane %v1954, 4
  %v1957 = vshll.u32 %v1801, 16
  %v1959 = vrot.slane %v1957, 5
  %v1960 = vor.u32 %v1956, %v1959
  %v1961 = vrot.slane %v1960, 4
  %v1963 = vshll.u32 %v1802, 16
  %v1965 = vrot.slane %v1963, 5
  %v1966 = vsel %vm586, %v1961, %v1965
  %v1968 = vshrl.u32 %v1803, 16
  %v1970 = vrot.slane %v1968, 4
  %v1971 = vshll.u32 %v1803, 16
  %v1973 = vrot.slane %v1971, 5
  %v1974 = vor.u32 %v1970, %v1973
  %v1975 = vrot.slane %v1974, 4
  %v1977 = vshll.u32 %v1804, 16
  %v1979 = vrot.slane %v1977, 5
  %v1980 = vsel %vm586, %v1975, %v1979
  %v1982 = vshrl.u32 %v1805, 16
  %v1984 = vrot.slane %v1982, 4
  %v1985 = vshll.u32 %v1805, 16
  %v1987 = vrot.slane %v1985, 5
  %v1988 = vor.u32 %v1984, %v1987
  %v1989 = vrot.slane %v1988, 4
  %v1991 = vshll.u32 %v1806, 16
  %v1993 = vrot.slane %v1991, 5
  %v1994 = vsel %vm586, %v1989, %v1993
  %v1996 = vshrl.u32 %v1807, 16
  %v1998 = vrot.slane %v1996, 4
  %v1999 = vshll.u32 %v1807, 16
  %v2001 = vrot.slane %v1999, 5
  %v2002 = vor.u32 %v1998, %v2001
  %v2003 = vrot.slane %v2002, 4
  %v2005 = vshll.u32 %v1808, 16
  %v2007 = vrot.slane %v2005, 5
  %v2008 = vsel %vm586, %v2003, %v2007
  %v2010 = vshrl.u32 %v1809, 16
  %v2012 = vrot.slane %v2010, 4
  %v2013 = vshll.u32 %v1809, 16
  %v2015 = vrot.slane %v2013, 5
  %v2016 = vor.u32 %v2012, %v2015
  %v2017 = vrot.slane %v2016, 4
  %v2019 = vshll.u32 %v1810, 16
  %v2021 = vrot.slane %v2019, 5
  %v2022 = vsel %vm586, %v2017, %v2021
  %v2024 = vshrl.u32 %v1811, 16
  %v2026 = vrot.slane %v2024, 4
  %v2027 = vshll.u32 %v1811, 16
  %v2029 = vrot.slane %v2027, 5
  %v2030 = vor.u32 %v2026, %v2029
  %v2031 = vrot.slane %v2030, 4
  %v2033 = vshll.u32 %v1812, 16
  %v2035 = vrot.slane %v2033, 5
  %v2036 = vsel %vm586, %v2031, %v2035
  %2037 = vrot.lane.b32.xlu0 %v1826, 56
  %v2038 = vpop.permute.xlu0 %2037
  %2039 = vrot.lane.b32.xlu0 %v1840, 56
  %v2040 = vpop.permute.xlu0 %2039
  %2041 = vrot.lane.b32.xlu0 %v1854, 56
  %v2042 = vpop.permute.xlu0 %2041
  %2043 = vrot.lane.b32.xlu0 %v1868, 56
  %v2044 = vpop.permute.xlu0 %2043
  %2045 = vrot.lane.b32.xlu0 %v1882, 56
  %v2046 = vpop.permute.xlu0 %2045
  %2047 = vrot.lane.b32.xlu0 %v1896, 56
  %v2048 = vpop.permute.xlu0 %2047
  %2049 = vrot.lane.b32.xlu0 %v1910, 56
  %v2050 = vpop.permute.xlu0 %2049
  %2051 = vrot.lane.b32.xlu0 %v1924, 56
  %v2052 = vpop.permute.xlu0 %2051
  %2053 = vrot.lane.b32.xlu0 %v1938, 56
  %v2054 = vpop.permute.xlu0 %2053
  %2055 = vrot.lane.b32.xlu0 %v1952, 56
  %v2056 = vpop.permute.xlu0 %2055
  %2057 = vrot.lane.b32.xlu0 %v1966, 56
  %v2058 = vpop.permute.xlu0 %2057
  %2059 = vrot.lane.b32.xlu0 %v1980, 56
  %v2060 = vpop.permute.xlu0 %2059
  %2061 = vrot.lane.b32.xlu0 %v1994, 56
  %v2062 = vpop.permute.xlu0 %2061
  %2063 = vrot.lane.b32.xlu0 %v2008, 56
  %v2064 = vpop.permute.xlu0 %2063
  %2065 = vrot.lane.b32.xlu0 %v2022, 56
  %v2066 = vpop.permute.xlu0 %2065
  %2067 = vrot.lane.b32.xlu0 %v2036, 56
  %v2068 = vpop.permute.xlu0 %2067
  %vm2085 = vcmask 519616
  %2086 = vst.msk [vmem:[#allocation3] sm:$0xf] %vm2085, %v2038
  %2087 = vst.msk [vmem:[#allocation3 + $0x4] sm:$0xf] %vm2085, %v2040
  %2088 = vst.msk [vmem:[#allocation3 + $0x8] sm:$0xf] %vm2085, %v2042
  %2089 = vst.msk [vmem:[#allocation3 + $0xc] sm:$0xf] %vm2085, %v2044
  %2090 = vst.msk [vmem:[#allocation3 + $0x10] sm:$0xf] %vm2085, %v2046
  %2091 = vst.msk [vmem:[#allocation3 + $0x14] sm:$0xf] %vm2085, %v2048
  %2092 = vst.msk [vmem:[#allocation3 + $0x18] sm:$0xf] %vm2085, %v2050
  %2093 = vst.msk [vmem:[#allocation3 + $0x1c] sm:$0xf] %vm2085, %v2052
  %2094 = vst.msk [vmem:[#allocation3 + $0x20] sm:$0xf] %vm2085, %v2054
  %2095 = vst.msk [vmem:[#allocation3 + $0x24] sm:$0xf] %vm2085, %v2056
  %2096 = vst.msk [vmem:[#allocation3 + $0x28] sm:$0xf] %vm2085, %v2058
  %2097 = vst.msk [vmem:[#allocation3 + $0x2c] sm:$0xf] %vm2085, %v2060
  %2098 = vst.msk [vmem:[#allocation3 + $0x30] sm:$0xf] %vm2085, %v2062
  %2099 = vst.msk [vmem:[#allocation3 + $0x34] sm:$0xf] %vm2085, %v2064
  %2100 = vst.msk [vmem:[#allocation3 + $0x38] sm:$0xf] %vm2085, %v2066
  %2101 = vst.msk [vmem:[#allocation3 + $0x3c] sm:$0xf] %vm2085, %v2068
  %v2102 = vld [vmem:[%s1683] sm:$0xe]
  %v2103 = vld [vmem:[%s1683 + $0x4] sm:$0x1]
  %v2104 = vld [vmem:[%s1683 + $0x8] sm:$0xe]
  %v2105 = vld [vmem:[%s1683 + $0xc] sm:$0x1]
  %v2106 = vld [vmem:[%s1683 + $0x10] sm:$0xe]
  %v2107 = vld [vmem:[%s1683 + $0x14] sm:$0x1]
  %v2108 = vld [vmem:[%s1683 + $0x18] sm:$0xe]
  %v2109 = vld [vmem:[%s1683 + $0x1c] sm:$0x1]
  %v2110 = vld [vmem:[%s1683 + $0x20] sm:$0xe]
  %v2111 = vld [vmem:[%s1683 + $0x24] sm:$0x1]
  %v2112 = vld [vmem:[%s1683 + $0x28] sm:$0xe]
  %v2113 = vld [vmem:[%s1683 + $0x2c] sm:$0x1]
  %v2114 = vld [vmem:[%s1683 + $0x30] sm:$0xe]
  %v2115 = vld [vmem:[%s1683 + $0x34] sm:$0x1]
  %v2116 = vld [vmem:[%s1683 + $0x38] sm:$0xe]
  %v2117 = vld [vmem:[%s1683 + $0x3c] sm:$0x1]
  %v2118 = vld [vmem:[%s1683 + $0x50] sm:$0xe]
  %v2119 = vld [vmem:[%s1683 + $0x54] sm:$0x1]
  %v2120 = vld [vmem:[%s1683 + $0x58] sm:$0xe]
  %v2121 = vld [vmem:[%s1683 + $0x5c] sm:$0x1]
  %v2122 = vld [vmem:[%s1683 + $0x60] sm:$0xe]
  %v2123 = vld [vmem:[%s1683 + $0x64] sm:$0x1]
  %v2124 = vld [vmem:[%s1683 + $0x68] sm:$0xe]
  %v2125 = vld [vmem:[%s1683 + $0x6c] sm:$0x1]
  %v2126 = vld [vmem:[%s1683 + $0x70] sm:$0xe]
  %v2127 = vld [vmem:[%s1683 + $0x74] sm:$0x1]
  %v2128 = vld [vmem:[%s1683 + $0x78] sm:$0xe]
  %v2129 = vld [vmem:[%s1683 + $0x7c] sm:$0x1]
  %v2130 = vld [vmem:[%s1683 + $0x80] sm:$0xe]
  %v2131 = vld [vmem:[%s1683 + $0x84] sm:$0x1]
  %v2132 = vld [vmem:[%s1683 + $0x88] sm:$0xe]
  %v2133 = vld [vmem:[%s1683 + $0x8c] sm:$0x1]
  %v2166 = vrot.slane %v2102, 5
  %v2167 = vrot.slane %v2166, 4
  %v2168 = vrot.slane %v2103, 5
  %v2169 = vsel %vm942, %v2167, %v2168
  %v2170 = vrot.slane %v2104, 5
  %v2171 = vrot.slane %v2170, 4
  %v2172 = vrot.slane %v2105, 5
  %v2173 = vsel %vm942, %v2171, %v2172
  %v2174 = vrot.slane %v2106, 5
  %v2175 = vrot.slane %v2174, 4
  %v2176 = vrot.slane %v2107, 5
  %v2177 = vsel %vm942, %v2175, %v2176
  %v2178 = vrot.slane %v2108, 5
  %v2179 = vrot.slane %v2178, 4
  %v2180 = vrot.slane %v2109, 5
  %v2181 = vsel %vm942, %v2179, %v2180
  %v2182 = vrot.slane %v2110, 5
  %v2183 = vrot.slane %v2182, 4
  %v2184 = vrot.slane %v2111, 5
  %v2185 = vsel %vm942, %v2183, %v2184
  %v2186 = vrot.slane %v2112, 5
  %v2187 = vrot.slane %v2186, 4
  %v2188 = vrot.slane %v2113, 5
  %v2189 = vsel %vm942, %v2187, %v2188
  %v2190 = vrot.slane %v2114, 5
  %v2191 = vrot.slane %v2190, 4
  %v2192 = vrot.slane %v2115, 5
  %v2193 = vsel %vm942, %v2191, %v2192
  %v2194 = vrot.slane %v2116, 5
  %v2195 = vrot.slane %v2194, 4
  %v2196 = vrot.slane %v2117, 5
  %v2197 = vsel %vm942, %v2195, %v2196
  %v2198 = vrot.slane %v2118, 5
  %v2199 = vrot.slane %v2198, 4
  %v2200 = vrot.slane %v2119, 5
  %v2201 = vsel %vm942, %v2199, %v2200
  %v2202 = vrot.slane %v2120, 5
  %v2203 = vrot.slane %v2202, 4
  %v2204 = vrot.slane %v2121, 5
  %v2205 = vsel %vm942, %v2203, %v2204
  %v2206 = vrot.slane %v2122, 5
  %v2207 = vrot.slane %v2206, 4
  %v2208 = vrot.slane %v2123, 5
  %v2209 = vsel %vm942, %v2207, %v2208
  %v2210 = vrot.slane %v2124, 5
  %v2211 = vrot.slane %v2210, 4
  %v2212 = vrot.slane %v2125, 5
  %v2213 = vsel %vm942, %v2211, %v2212
  %v2214 = vrot.slane %v2126, 5
  %v2215 = vrot.slane %v2214, 4
  %v2216 = vrot.slane %v2127, 5
  %v2217 = vsel %vm942, %v2215, %v2216
  %v2218 = vrot.slane %v2128, 5
  %v2219 = vrot.slane %v2218, 4
  %v2220 = vrot.slane %v2129, 5
  %v2221 = vsel %vm942, %v2219, %v2220
  %v2222 = vrot.slane %v2130, 5
  %v2223 = vrot.slane %v2222, 4
  %v2224 = vrot.slane %v2131, 5
  %v2225 = vsel %vm942, %v2223, %v2224
  %v2226 = vrot.slane %v2132, 5
  %v2227 = vrot.slane %v2226, 4
  %v2228 = vrot.slane %v2133, 5
  %v2229 = vsel %vm942, %v2227, %v2228
  %2230 = vrot.lane.b32.xlu0 %v2169, 64
  %v2231 = vpop.permute.xlu0 %2230
  %2232 = vrot.lane.b32.xlu0 %v2173, 64
  %v2233 = vpop.permute.xlu0 %2232
  %2234 = vrot.lane.b32.xlu0 %v2177, 64
  %v2235 = vpop.permute.xlu0 %2234
  %2236 = vrot.lane.b32.xlu0 %v2181, 64
  %v2237 = vpop.permute.xlu0 %2236
  %2238 = vrot.lane.b32.xlu0 %v2185, 64
  %v2239 = vpop.permute.xlu0 %2238
  %2240 = vrot.lane.b32.xlu0 %v2189, 64
  %v2241 = vpop.permute.xlu0 %2240
  %2242 = vrot.lane.b32.xlu0 %v2193, 64
  %v2243 = vpop.permute.xlu0 %2242
  %2244 = vrot.lane.b32.xlu0 %v2197, 64
  %v2245 = vpop.permute.xlu0 %2244
  %2246 = vrot.lane.b32.xlu0 %v2201, 64
  %v2247 = vpop.permute.xlu0 %2246
  %2248 = vrot.lane.b32.xlu0 %v2205, 64
  %v2249 = vpop.permute.xlu0 %2248
  %2250 = vrot.lane.b32.xlu0 %v2209, 64
  %v2251 = vpop.permute.xlu0 %2250
  %2252 = vrot.lane.b32.xlu0 %v2213, 64
  %v2253 = vpop.permute.xlu0 %2252
  %2254 = vrot.lane.b32.xlu0 %v2217, 64
  %v2255 = vpop.permute.xlu0 %2254
  %2256 = vrot.lane.b32.xlu0 %v2221, 64
  %v2257 = vpop.permute.xlu0 %2256
  %2258 = vrot.lane.b32.xlu0 %v2225, 64
  %v2259 = vpop.permute.xlu0 %2258
  %2260 = vrot.lane.b32.xlu0 %v2229, 64
  %v2261 = vpop.permute.xlu0 %2260
  %vm2278 = vcmask 585216
  %2279 = vst.msk [vmem:[#allocation3] sm:$0xf] %vm2278, %v2231
  %2280 = vst.msk [vmem:[#allocation3 + $0x4] sm:$0xf] %vm2278, %v2233
  %2281 = vst.msk [vmem:[#allocation3 + $0x8] sm:$0xf] %vm2278, %v2235
  %2282 = vst.msk [vmem:[#allocation3 + $0xc] sm:$0xf] %vm2278, %v2237
  %2283 = vst.msk [vmem:[#allocation3 + $0x10] sm:$0xf] %vm2278, %v2239
  %2284 = vst.msk [vmem:[#allocation3 + $0x14] sm:$0xf] %vm2278, %v2241
  %2285 = vst.msk [vmem:[#allocation3 + $0x18] sm:$0xf] %vm2278, %v2243
  %2286 = vst.msk [vmem:[#allocation3 + $0x1c] sm:$0xf] %vm2278, %v2245
  %2287 = vst.msk [vmem:[#allocation3 + $0x20] sm:$0xf] %vm2278, %v2247
  %2288 = vst.msk [vmem:[#allocation3 + $0x24] sm:$0xf] %vm2278, %v2249
  %2289 = vst.msk [vmem:[#allocation3 + $0x28] sm:$0xf] %vm2278, %v2251
  %2290 = vst.msk [vmem:[#allocation3 + $0x2c] sm:$0xf] %vm2278, %v2253
  %2291 = vst.msk [vmem:[#allocation3 + $0x30] sm:$0xf] %vm2278, %v2255
  %2292 = vst.msk [vmem:[#allocation3 + $0x34] sm:$0xf] %vm2278, %v2257
  %2293 = vst.msk [vmem:[#allocation3 + $0x38] sm:$0xf] %vm2278, %v2259
  %2294 = vst.msk [vmem:[#allocation3 + $0x3c] sm:$0xf] %vm2278, %v2261
  %v2295 = vld [vmem:[#allocation3] sm:$0xf]
  %v2296 = vld [vmem:[#allocation3 + $0x4] sm:$0xf]
  %v2297 = vld [vmem:[#allocation3 + $0x8] sm:$0xf]
  %v2298 = vld [vmem:[#allocation3 + $0xc] sm:$0xf]
  %v2299 = vld [vmem:[#allocation3 + $0x10] sm:$0xf]
  %v2300 = vld [vmem:[#allocation3 + $0x14] sm:$0xf]
  %v2301 = vld [vmem:[#allocation3 + $0x18] sm:$0xf]
  %v2302 = vld [vmem:[#allocation3 + $0x1c] sm:$0xf]
  %v2303 = vld [vmem:[#allocation3 + $0x20] sm:$0xf]
  %v2304 = vld [vmem:[#allocation3 + $0x24] sm:$0xf]
  %v2305 = vld [vmem:[#allocation3 + $0x28] sm:$0xf]
  %v2306 = vld [vmem:[#allocation3 + $0x2c] sm:$0xf]
  %v2307 = vld [vmem:[#allocation3 + $0x30] sm:$0xf]
  %v2308 = vld [vmem:[#allocation3 + $0x34] sm:$0xf]
  %v2309 = vld [vmem:[#allocation3 + $0x38] sm:$0xf]
  %v2310 = vld [vmem:[#allocation3 + $0x3c] sm:$0xf]
  %v2311 = vld [vmem:[%s3] sm:$0xf]
  %v2312 = vld [vmem:[%s3 + $0x4] sm:$0xf]
  %v2313 = vld [vmem:[%s3 + $0x8] sm:$0xf]
  %v2314 = vld [vmem:[%s3 + $0xc] sm:$0xf]
  %v2315 = vld [vmem:[%s3 + $0x10] sm:$0xf]
  %v2316 = vld [vmem:[%s3 + $0x14] sm:$0xf]
  %v2317 = vld [vmem:[%s3 + $0x18] sm:$0xf]
  %v2318 = vld [vmem:[%s3 + $0x1c] sm:$0xf]
  %v2319 = vld [vmem:[%s3 + $0x20] sm:$0xf]
  %v2336 = vunpack.c.l.b16 %v2295
  %v2337 = vunpack.c.l.b16 %v2296
  %v2338 = vunpack.c.l.b16 %v2297
  %v2339 = vunpack.c.l.b16 %v2298
  %v2340 = vunpack.c.l.b16 %v2299
  %v2341 = vunpack.c.l.b16 %v2300
  %v2342 = vunpack.c.l.b16 %v2301
  %v2343 = vunpack.c.l.b16 %v2302
  %v2344 = vunpack.c.l.b16 %v2303
  %v2345 = vunpack.c.l.b16 %v2304
  %v2346 = vunpack.c.l.b16 %v2305
  %v2347 = vunpack.c.l.b16 %v2306
  %v2348 = vunpack.c.l.b16 %v2307
  %v2349 = vunpack.c.l.b16 %v2308
  %v2350 = vunpack.c.l.b16 %v2309
  %v2351 = vunpack.c.l.b16 %v2310
  %v2352 = vpack.c.b16 %v2337, %v2336
  %v2353 = vpack.c.b16 %v2339, %v2338
  %v2354 = vpack.c.b16 %v2341, %v2340
  %v2355 = vpack.c.b16 %v2343, %v2342
  %v2356 = vpack.c.b16 %v2345, %v2344
  %v2357 = vpack.c.b16 %v2347, %v2346
  %v2358 = vpack.c.b16 %v2349, %v2348
  %v2359 = vpack.c.b16 %v2351, %v2350
  %v2369 = vunpack.c.l.b16 %v2311
  %v2370 = vunpack.c.l.b16 %v2312
  %v2371 = vunpack.c.l.b16 %v2313
  %v2372 = vunpack.c.l.b16 %v2314
  %v2373 = vunpack.c.l.b16 %v2315
  %v2374 = vunpack.c.l.b16 %v2316
  %v2375 = vunpack.c.l.b16 %v2317
  %v2376 = vunpack.c.l.b16 %v2318
  %v2377 = vunpack.c.l.b16 %v2319
  %v2378 = vpack.c.b16 %v2370, %v2369
  %v2379 = vpack.c.b16 %v2372, %v2371
  %v2380 = vpack.c.b16 %v2374, %v2373
  %v2381 = vpack.c.b16 %v2376, %v2375
  %v2382 = vpack.c.b16 %v2377, %v2377
  %vm2387 = vcmask 588800
  %v2389 = vsel %vm2387, %v2352, 0
  %v2392 = vsel %vm2387, %v2353, 0
  %v2395 = vsel %vm2387, %v2354, 0
  %v2398 = vsel %vm2387, %v2355, 0
  %v2401 = vsel %vm2387, %v2356, 0
  %v2404 = vsel %vm2387, %v2357, 0
  %v2407 = vsel %vm2387, %v2358, 0
  %v2410 = vsel %vm2387, %v2359, 0
  %vm2412 = vcmask 1043456
  %v2414 = vsel %vm2412, %v2382, 0
  %2416 = vmatpush.bf16.msra.mxu0 0
  %2417 = vmatpush.bf16.msra.mxu0 0
  %2418 = vmatpush.bf16.msra.mxu0 0
  %2419 = vmatpush.bf16.msra.mxu0 %v2414
  %2420 = vmatpush.bf16.msra.mxu0 %v2381
  %2421 = vmatpush.bf16.msra.mxu0 %v2380
  %2422 = vmatpush.bf16.msra.mxu0 %v2379
  %2423 = vmatpush.bf16.msra.mxu0 %v2378
  %2424 = vmatmul.bf16.gmra.mxu0 %v2389
  %v2425 = vpop.f32.mrf.mxu0
  %v2426 = vadd.f32 0.0, %v2425
  %v2427 = vpop.f32.mrf.mxu0
  %v2428 = vadd.f32 0.0, %v2427
  %2429 = vmatmul.bf16.gmra.mxu0 %v2392
  %v2430 = vpop.f32.mrf.mxu0
  %v2431 = vadd.f32 0.0, %v2430
  %v2432 = vpop.f32.mrf.mxu0
  %v2433 = vadd.f32 0.0, %v2432
  %2434 = vmatmul.bf16.gmra.mxu0 %v2395
  %v2435 = vpop.f32.mrf.mxu0
  %v2436 = vadd.f32 0.0, %v2435
  %v2437 = vpop.f32.mrf.mxu0
  %v2438 = vadd.f32 0.0, %v2437
  %2439 = vmatmul.bf16.gmra.mxu0 %v2398
  %v2440 = vpop.f32.mrf.mxu0
  %v2441 = vadd.f32 0.0, %v2440
  %v2442 = vpop.f32.mrf.mxu0
  %v2443 = vadd.f32 0.0, %v2442
  %2444 = vmatmul.bf16.gmra.mxu0 %v2401
  %v2445 = vpop.f32.mrf.mxu0
  %v2446 = vadd.f32 0.0, %v2445
  %v2447 = vpop.f32.mrf.mxu0
  %v2448 = vadd.f32 0.0, %v2447
  %2449 = vmatmul.bf16.gmra.mxu0 %v2404
  %v2450 = vpop.f32.mrf.mxu0
  %v2451 = vadd.f32 0.0, %v2450
  %v2452 = vpop.f32.mrf.mxu0
  %v2453 = vadd.f32 0.0, %v2452
  %2454 = vmatmul.bf16.gmra.mxu0 %v2407
  %v2455 = vpop.f32.mrf.mxu0
  %v2456 = vadd.f32 0.0, %v2455
  %v2457 = vpop.f32.mrf.mxu0
  %v2458 = vadd.f32 0.0, %v2457
  %2459 = vmatmul.bf16.gmra.mxu0 %v2410
  %v2460 = vpop.f32.mrf.mxu0
  %v2461 = vadd.f32 0.0, %v2460
  %v2462 = vpop.f32.mrf.mxu0
  %v2463 = vadd.f32 0.0, %v2462
  %2464 = vdwg.mxu0
  %v2465 = vpack.c.bf16 %v2426, %v2426
  %v2466 = vpack.c.bf16 %v2428, %v2428
  %v2467 = vpack.c.bf16 %v2431, %v2431
  %v2468 = vpack.c.bf16 %v2433, %v2433
  %v2469 = vpack.c.bf16 %v2436, %v2436
  %v2470 = vpack.c.bf16 %v2438, %v2438
  %v2471 = vpack.c.bf16 %v2441, %v2441
  %v2472 = vpack.c.bf16 %v2443, %v2443
  %v2473 = vpack.c.bf16 %v2446, %v2446
  %v2474 = vpack.c.bf16 %v2448, %v2448
  %v2475 = vpack.c.bf16 %v2451, %v2451
  %v2476 = vpack.c.bf16 %v2453, %v2453
  %v2477 = vpack.c.bf16 %v2456, %v2456
  %v2478 = vpack.c.bf16 %v2458, %v2458
  %v2479 = vpack.c.bf16 %v2461, %v2461
  %v2480 = vpack.c.bf16 %v2463, %v2463
  %2481 = vst.msk [vmem:[%s4] sm:$0xf] %vm21, %v2465
  %2482 = vst.msk [vmem:[%s4 + $0x4] sm:$0xf] %vm21, %v2466
  %2483 = vst.msk [vmem:[%s4 + $0x8] sm:$0xf] %vm21, %v2467
  %2484 = vst.msk [vmem:[%s4 + $0xc] sm:$0xf] %vm21, %v2468
  %2485 = vst.msk [vmem:[%s4 + $0x10] sm:$0xf] %vm21, %v2469
  %2486 = vst.msk [vmem:[%s4 + $0x14] sm:$0xf] %vm21, %v2470
  %2487 = vst.msk [vmem:[%s4 + $0x18] sm:$0xf] %vm21, %v2471
  %2488 = vst.msk [vmem:[%s4 + $0x1c] sm:$0xf] %vm21, %v2472
  %2489 = vst.msk [vmem:[%s4 + $0x20] sm:$0xf] %vm21, %v2473
  %2490 = vst.msk [vmem:[%s4 + $0x24] sm:$0xf] %vm21, %v2474
  %2491 = vst.msk [vmem:[%s4 + $0x28] sm:$0xf] %vm21, %v2475
  %2492 = vst.msk [vmem:[%s4 + $0x2c] sm:$0xf] %vm21, %v2476
  %2493 = vst.msk [vmem:[%s4 + $0x30] sm:$0xf] %vm21, %v2477
  %2494 = vst.msk [vmem:[%s4 + $0x34] sm:$0xf] %vm21, %v2478
  %2495 = vst.msk [vmem:[%s4 + $0x38] sm:$0xf] %vm21, %v2479
  %2496 = vst.msk [vmem:[%s4 + $0x3c] sm:$0xf] %vm21, %v2480
  %vm2497 = vcmask 64512
  %v2498 = vsel %vm2497, %v2426, 0.0
  %v2499 = vsel %vm2497, %v2428, 0.0
  %v2500 = vadd.f32 %v2498, %v2499
  %v2501 = vsel %vm2497, %v2431, 0.0
  %v2502 = vadd.f32 %v2500, %v2501
  %v2503 = vsel %vm2497, %v2433, 0.0
  %v2504 = vadd.f32 %v2502, %v2503
  %v2505 = vsel %vm2497, %v2436, 0.0
  %v2506 = vadd.f32 %v2504, %v2505
  %v2507 = vsel %vm2497, %v2438, 0.0
  %v2508 = vadd.f32 %v2506, %v2507
  %v2509 = vsel %vm2497, %v2441, 0.0
  %v2510 = vadd.f32 %v2508, %v2509
  %v2511 = vsel %vm2497, %v2443, 0.0
  %v2512 = vadd.f32 %v2510, %v2511
  %v2513 = vsel %vm2497, %v2446, 0.0
  %v2514 = vadd.f32 %v2512, %v2513
  %v2515 = vsel %vm2497, %v2448, 0.0
  %v2516 = vadd.f32 %v2514, %v2515
  %v2517 = vsel %vm2497, %v2451, 0.0
  %v2518 = vadd.f32 %v2516, %v2517
  %v2519 = vsel %vm2497, %v2453, 0.0
  %v2520 = vadd.f32 %v2518, %v2519
  %v2521 = vsel %vm2497, %v2456, 0.0
  %v2522 = vadd.f32 %v2520, %v2521
  %v2523 = vsel %vm2497, %v2458, 0.0
  %v2524 = vadd.f32 %v2522, %v2523
  %v2525 = vsel %vm2497, %v2461, 0.0
  %v2526 = vadd.f32 %v2524, %v2525
  %v2527 = vsel %vm2497, %v2463, 0.0
  %v2528 = vadd.f32 %v2526, %v2527
  %v2529 = vrot.slane %v2528, 4
  %v2530 = vadd.f32 %v2528, %v2529
  %v2531 = vrot.slane %v2530, 2
  %v2532 = vadd.f32 %v2530, %v2531
  %v2533 = vrot.slane %v2532, 1
  %v2534 = vadd.f32 %v2532, %v2533
  %2535 = vst.msk [vmem:[%s5] sm:$0x1] %vm23, %v2534
  %v2536 = vmul.f32 %v2426, %v2426
  %v2537 = vmul.f32 %v2428, %v2428
  %v2538 = vmul.f32 %v2431, %v2431
  %v2539 = vmul.f32 %v2433, %v2433
  %v2540 = vmul.f32 %v2436, %v2436
  %v2541 = vmul.f32 %v2438, %v2438
  %v2542 = vmul.f32 %v2441, %v2441
  %v2543 = vmul.f32 %v2443, %v2443
  %v2544 = vmul.f32 %v2446, %v2446
  %v2545 = vmul.f32 %v2448, %v2448
  %v2546 = vmul.f32 %v2451, %v2451
  %v2547 = vmul.f32 %v2453, %v2453
  %v2548 = vmul.f32 %v2456, %v2456
  %v2549 = vmul.f32 %v2458, %v2458
  %v2550 = vmul.f32 %v2461, %v2461
  %v2551 = vmul.f32 %v2463, %v2463
  %v2552 = vsel %vm2497, %v2536, 0.0
  %v2553 = vsel %vm2497, %v2537, 0.0
  %v2554 = vadd.f32 %v2552, %v2553
  %v2555 = vsel %vm2497, %v2538, 0.0
  %v2556 = vadd.f32 %v2554, %v2555
  %v2557 = vsel %vm2497, %v2539, 0.0
  %v2558 = vadd.f32 %v2556, %v2557
  %v2559 = vsel %vm2497, %v2540, 0.0
  %v2560 = vadd.f32 %v2558, %v2559
  %v2561 = vsel %vm2497, %v2541, 0.0
  %v2562 = vadd.f32 %v2560, %v2561
  %v2563 = vsel %vm2497, %v2542, 0.0
  %v2564 = vadd.f32 %v2562, %v2563
  %v2565 = vsel %vm2497, %v2543, 0.0
  %v2566 = vadd.f32 %v2564, %v2565
  %v2567 = vsel %vm2497, %v2544, 0.0
  %v2568 = vadd.f32 %v2566, %v2567
  %v2569 = vsel %vm2497, %v2545, 0.0
  %v2570 = vadd.f32 %v2568, %v2569
  %v2571 = vsel %vm2497, %v2546, 0.0
  %v2572 = vadd.f32 %v2570, %v2571
  %v2573 = vsel %vm2497, %v2547, 0.0
  %v2574 = vadd.f32 %v2572, %v2573
  %v2575 = vsel %vm2497, %v2548, 0.0
  %v2576 = vadd.f32 %v2574, %v2575
  %v2577 = vsel %vm2497, %v2549, 0.0
  %v2578 = vadd.f32 %v2576, %v2577
  %v2579 = vsel %vm2497, %v2550, 0.0
  %v2580 = vadd.f32 %v2578, %v2579
  %v2581 = vsel %vm2497, %v2551, 0.0
  %v2582 = vadd.f32 %v2580, %v2581
  %v2583 = vrot.slane %v2582, 4
  %v2584 = vadd.f32 %v2582, %v2583
  %v2585 = vrot.slane %v2584, 2
  %v2586 = vadd.f32 %v2584, %v2585
  %v2587 = vrot.slane %v2586, 1
  %v2588 = vadd.f32 %v2586, %v2587
  %2589 = vst.msk [vmem:[%s6] sm:$0x1] %vm23, %v2588
  // Predicated region
  $region18: #{down_forward.4} parent=0 // pred_check
    _
  $region19: #{down_forward.4} parent=0 // pred_check_branch
    %2591 = sbr.rel (0) target = $region21
  $region20: #{down_forward.4} parent=0 // pred_region
    _
  $region21: #{down_forward.4} parent=0 // pred_fallthru
    _
  // Predicated region
  $region22: #{down_forward.4} parent=0 // pred_check
    _
  $region23: #{down_forward.4} parent=0 // pred_check_branch
    %2593 = sbr.rel (0) target = $region25
  $region24: #{down_forward.4} parent=0 // pred_region
    _
  $region25: #{down_forward.4} parent=0 // pred_fallthru
    _
  // Predicated region
  $region26: #{down_forward.4} parent=0 // pred_check
    _
  $region27: #{down_forward.4} parent=0 // pred_check_branch
    %2595 = sbr.rel (0) target = $region29
  $region28: #{down_forward.4} parent=0 // pred_region
    _
  $region29: #{down_forward.4} parent=0 // pred_fallthru
    _
  // Predicated region
  $region30: #{down_forward.4} parent=0 // pred_check
    _
  $region31: #{down_forward.4} parent=0 // pred_check_branch
    %2597 = sbr.rel (0) target = $region33
  $region32: #{down_forward.4} parent=0 // pred_region
    _
  $region33: #{down_forward.4} parent=0 // pred_fallthru
    _
  // Predicated region
  $region34: #{down_forward.4} parent=0 // pred_check
    _
  $region35: #{down_forward.4} parent=0 // pred_check_branch
    %2599 = sbr.rel (0) target = $region37
  $region36: #{down_forward.4} parent=0 // pred_region
    _
  $region37: #{down_forward.4} parent=0 // pred_fallthru
    _
  // Predicated region
  $region38: #{down_forward.4} parent=0 // pred_check
    _
  $region39: #{down_forward.4} parent=0 // pred_check_branch
    %2601 = sbr.rel (0) target = $region41
  $region40: #{down_forward.4} parent=0 // pred_region
    _
  $region41: #{down_forward.4} parent=0 // pred_fallthru
    _

// kernel: down_forward.3
$region0: #{down_forward.3}
  #allocation0 [shape = 'u32[]', space=smem, size = 0x4, offset = 0x4, fixed_abs, tag = 'smem constant byte address 0x4 - core index']
  #allocation1 [shape = 'u32[72,128]{1,0:T(1,128)}', space=vmem, size = 0x9000, scoped, tag = 'internal scratch']
  #allocation2 [shape = 'bf16[2,10,10,4]{3,2,1,0:T(8,128)(2,1)}', space=vmem, size = 0x14000, scoped, tag = 'scratch operand']
  #allocation3 [shape = 'bf16[128,36]{1,0:T(8,128)(2,1)}', space=vmem, size = 0x8000, scoped, tag = 'scratch operand']
  %s0 = inlined_call_operand.vmem [shape: bf16[2,16,8,8], index: 0, kind: input, shape index: {}]
  %s1 = inlined_call_operand.vmem [shape: bf16[36,8], index: 1, kind: input, shape index: {}]
  %s2 = inlined_call_operand.vmem [shape: bf16[2,8,8,8], index: 2, kind: output, shape index: {0}]
  %s3 = inlined_call_operand.vmem [shape: f32[1,1,8], index: 3, kind: output, shape index: {1}]
  %s4 = inlined_call_operand.vmem [shape: f32[1,1,8], index: 4, kind: output, shape index: {2}]
  %5 = xla_tuple %s2, %s3, %s4
  %s6 = sld [smem:[#allocation0]]
  $region34: #{down_forward.3} parent=0
    _
  %s8 = ssub.s32 1, %s6
  %s9 = scalar_select 0, %s8, %s6
  // Predicated region
  $region2: #{down_forward.3} parent=0 // pred_check
    _
  $region3: #{down_forward.3} parent=0 // pred_check_branch
    %11 = sbr.rel (0) target = $region5
  $region4: #{down_forward.3} parent=0 // pred_region
    _
  $region5: #{down_forward.3} parent=0 // pred_fallthru
    _
  // Predicated region
  $region6: #{down_forward.3} parent=0 // pred_check
    _
  $region7: #{down_forward.3} parent=0 // pred_check_branch
    %13 = sbr.rel (0) target = $region9
  $region8: #{down_forward.3} parent=0 // pred_region
    _
  $region9: #{down_forward.3} parent=0 // pred_fallthru
    _
  %vm15 = vcmask 27648
  %16 = vst.msk [vmem:[#allocation2] sm:$0xf] %vm15, 0
  %vm17 = vcmask 24576
  %18 = vst.msk [vmem:[#allocation2 + $0x4] sm:$0x1] %vm17, 0
  %19 = vst.msk [vmem:[#allocation2 + $0x50] sm:$0xf] %vm15, 0
  %20 = vst.msk [vmem:[#allocation2 + $0x54] sm:$0x1] %vm17, 0
  %s21 = scalar_lea.vmem [#allocation2], 72
  %22 = vst.msk [vmem:[%s21] sm:$0xf] %vm15, 0
  %23 = vst.msk [vmem:[%s21 + $0x4] sm:$0x1] %vm17, 0
  %24 = vst.msk [vmem:[%s21 + $0x50] sm:$0xf] %vm15, 0
  %25 = vst.msk [vmem:[%s21 + $0x54] sm:$0x1] %vm17, 0
  %vm26 = vcmask 24576
  %vm27 = vsmask.f32 256
  %vm28 = vmand %vm26, %vm27
  %v29 = vld [vmem:[#allocation2] sm:$0x1]
  %v30 = vsel %vm28, 0, %v29
  %31 = vst [vmem:[#allocation2] sm:$0x1] %v30
  %v32 = vld [vmem:[#allocation2 + $0x8] sm:$0x1]
  %v33 = vsel %vm28, 0, %v32
  %34 = vst [vmem:[#allocation2 + $0x8] sm:$0x1] %v33
  %v35 = vld [vmem:[#allocation2 + $0x10] sm:$0x1]
  %v36 = vsel %vm28, 0, %v35
  %37 = vst [vmem:[#allocation2 + $0x10] sm:$0x1] %v36
  %v38 = vld [vmem:[#allocation2 + $0x18] sm:$0x1]
  %v39 = vsel %vm28, 0, %v38
  %40 = vst [vmem:[#allocation2 + $0x18] sm:$0x1] %v39
  %v41 = vld [vmem:[#allocation2 + $0x20] sm:$0x1]
  %v42 = vsel %vm28, 0, %v41
  %43 = vst [vmem:[#allocation2 + $0x20] sm:$0x1] %v42
  %v44 = vld [vmem:[#allocation2 + $0x28] sm:$0x1]
  %v45 = vsel %vm28, 0, %v44
  %46 = vst [vmem:[#allocation2 + $0x28] sm:$0x1] %v45
  %v47 = vld [vmem:[#allocation2 + $0x30] sm:$0x1]
  %v48 = vsel %vm28, 0, %v47
  %49 = vst [vmem:[#allocation2 + $0x30] sm:$0x1] %v48
  %v50 = vld [vmem:[#allocation2 + $0x38] sm:$0x1]
  %v51 = vsel %vm28, 0, %v50
  %52 = vst [vmem:[#allocation2 + $0x38] sm:$0x1] %v51
  %v53 = vld [vmem:[#allocation2 + $0x40] sm:$0x1]
  %v54 = vsel %vm28, 0, %v53
  %55 = vst [vmem:[#allocation2 + $0x40] sm:$0x1] %v54
  %v56 = vld [vmem:[#allocation2 + $0x48] sm:$0x1]
  %v57 = vsel %vm28, 0, %v56
  %58 = vst [vmem:[#allocation2 + $0x48] sm:$0x1] %v57
  %v59 = vld [vmem:[#allocation2 + $0x50] sm:$0x1]
  %v60 = vsel %vm28, 0, %v59
  %61 = vst [vmem:[#allocation2 + $0x50] sm:$0x1] %v60
  %v62 = vld [vmem:[#allocation2 + $0x58] sm:$0x1]
  %v63 = vsel %vm28, 0, %v62
  %64 = vst [vmem:[#allocation2 + $0x58] sm:$0x1] %v63
  %v65 = vld [vmem:[#allocation2 + $0x60] sm:$0x1]
  %v66 = vsel %vm28, 0, %v65
  %67 = vst [vmem:[#allocation2 + $0x60] sm:$0x1] %v66
  %v68 = vld [vmem:[#allocation2 + $0x68] sm:$0x1]
  %v69 = vsel %vm28, 0, %v68
  %70 = vst [vmem:[#allocation2 + $0x68] sm:$0x1] %v69
  %v71 = vld [vmem:[#allocation2 + $0x70] sm:$0x1]
  %v72 = vsel %vm28, 0, %v71
  %73 = vst [vmem:[#allocation2 + $0x70] sm:$0x1] %v72
  %v74 = vld [vmem:[#allocation2 + $0x78] sm:$0x1]
  %v75 = vsel %vm28, 0, %v74
  %76 = vst [vmem:[#allocation2 + $0x78] sm:$0x1] %v75
  %v77 = vld [vmem:[#allocation2 + $0x80] sm:$0x1]
  %v78 = vsel %vm28, 0, %v77
  %79 = vst [vmem:[#allocation2 + $0x80] sm:$0x1] %v78
  %v80 = vld [vmem:[#allocation2 + $0x88] sm:$0x1]
  %v81 = vsel %vm28, 0, %v80
  %82 = vst [vmem:[#allocation2 + $0x88] sm:$0x1] %v81
  %v83 = vld [vmem:[#allocation2 + $0x90] sm:$0x1]
  %v84 = vsel %vm28, 0, %v83
  %85 = vst [vmem:[#allocation2 + $0x90] sm:$0x1] %v84
  %v86 = vld [vmem:[#allocation2 + $0x98] sm:$0x1]
  %v87 = vsel %vm28, 0, %v86
  %88 = vst [vmem:[#allocation2 + $0x98] sm:$0x1] %v87
  %vm89 = vsmask.f32 7938
  %vm90 = vmand %vm26, %vm89
  %v91 = vld [vmem:[#allocation2 + $0x4] sm:$0x1]
  %v92 = vsel %vm90, 0, %v91
  %93 = vst [vmem:[#allocation2 + $0x4] sm:$0x1] %v92
  %v94 = vld [vmem:[#allocation2 + $0xc] sm:$0x1]
  %v95 = vsel %vm90, 0, %v94
  %96 = vst [vmem:[#allocation2 + $0xc] sm:$0x1] %v95
  %v97 = vld [vmem:[#allocation2 + $0x14] sm:$0x1]
  %v98 = vsel %vm90, 0, %v97
  %99 = vst [vmem:[#allocation2 + $0x14] sm:$0x1] %v98
  %v100 = vld [vmem:[#allocation2 + $0x1c] sm:$0x1]
  %v101 = vsel %vm90, 0, %v100
  %102 = vst [vmem:[#allocation2 + $0x1c] sm:$0x1] %v101
  %v103 = vld [vmem:[#allocation2 + $0x24] sm:$0x1]
  %v104 = vsel %vm90, 0, %v103
  %105 = vst [vmem:[#allocation2 + $0x24] sm:$0x1] %v104
  %v106 = vld [vmem:[#allocation2 + $0x2c] sm:$0x1]
  %v107 = vsel %vm90, 0, %v106
  %108 = vst [vmem:[#allocation2 + $0x2c] sm:$0x1] %v107
  %v109 = vld [vmem:[#allocation2 + $0x34] sm:$0x1]
  %v110 = vsel %vm90, 0, %v109
  %111 = vst [vmem:[#allocation2 + $0x34] sm:$0x1] %v110
  %v112 = vld [vmem:[#allocation2 + $0x3c] sm:$0x1]
  %v113 = vsel %vm90, 0, %v112
  %114 = vst [vmem:[#allocation2 + $0x3c] sm:$0x1] %v113
  %v115 = vld [vmem:[#allocation2 + $0x44] sm:$0x1]
  %v116 = vsel %vm90, 0, %v115
  %117 = vst [vmem:[#allocation2 + $0x44] sm:$0x1] %v116
  %v118 = vld [vmem:[#allocation2 + $0x4c] sm:$0x1]
  %v119 = vsel %vm90, 0, %v118
  %120 = vst [vmem:[#allocation2 + $0x4c] sm:$0x1] %v119
  %v121 = vld [vmem:[#allocation2 + $0x54] sm:$0x1]
  %v122 = vsel %vm90, 0, %v121
  %123 = vst [vmem:[#allocation2 + $0x54] sm:$0x1] %v122
  %v124 = vld [vmem:[#allocation2 + $0x5c] sm:$0x1]
  %v125 = vsel %vm90, 0, %v124
  %126 = vst [vmem:[#allocation2 + $0x5c] sm:$0x1] %v125
  %v127 = vld [vmem:[#allocation2 + $0x64] sm:$0x1]
  %v128 = vsel %vm90, 0, %v127
  %129 = vst [vmem:[#allocation2 + $0x64] sm:$0x1] %v128
  %v130 = vld [vmem:[#allocation2 + $0x6c] sm:$0x1]
  %v131 = vsel %vm90, 0, %v130
  %132 = vst [vmem:[#allocation2 + $0x6c] sm:$0x1] %v131
  %v133 = vld [vmem:[#allocation2 + $0x74] sm:$0x1]
  %v134 = vsel %vm90, 0, %v133
  %135 = vst [vmem:[#allocation2 + $0x74] sm:$0x1] %v134
  %v136 = vld [vmem:[#allocation2 + $0x7c] sm:$0x1]
  %v137 = vsel %vm90, 0, %v136
  %138 = vst [vmem:[#allocation2 + $0x7c] sm:$0x1] %v137
  %v139 = vld [vmem:[#allocation2 + $0x84] sm:$0x1]
  %v140 = vsel %vm90, 0, %v139
  %141 = vst [vmem:[#allocation2 + $0x84] sm:$0x1] %v140
  %v142 = vld [vmem:[#allocation2 + $0x8c] sm:$0x1]
  %v143 = vsel %vm90, 0, %v142
  %144 = vst [vmem:[#allocation2 + $0x8c] sm:$0x1] %v143
  %v145 = vld [vmem:[#allocation2 + $0x94] sm:$0x1]
  %v146 = vsel %vm90, 0, %v145
  %147 = vst [vmem:[#allocation2 + $0x94] sm:$0x1] %v146
  %v148 = vld [vmem:[#allocation2 + $0x9c] sm:$0x1]
  %v149 = vsel %vm90, 0, %v148
  %150 = vst [vmem:[#allocation2 + $0x9c] sm:$0x1] %v149
  %v151 = vld [vmem:[%s0] sm:$0xf]
  %v152 = vld [vmem:[%s0 + $0x4] sm:$0xf]
  %v153 = vld [vmem:[%s0 + $0x8] sm:$0xf]
  %v154 = vld [vmem:[%s0 + $0xc] sm:$0xf]
  %v155 = vld [vmem:[%s0 + $0x10] sm:$0xf]
  %v156 = vld [vmem:[%s0 + $0x14] sm:$0xf]
  %v157 = vld [vmem:[%s0 + $0x18] sm:$0xf]
  %v158 = vld [vmem:[%s0 + $0x1c] sm:$0xf]
  %v159 = vld [vmem:[%s0 + $0x20] sm:$0xf]
  %v160 = vld [vmem:[%s0 + $0x24] sm:$0xf]
  %v161 = vld [vmem:[%s0 + $0x28] sm:$0xf]
  %v162 = vld [vmem:[%s0 + $0x2c] sm:$0xf]
  %v163 = vld [vmem:[%s0 + $0x30] sm:$0xf]
  %v164 = vld [vmem:[%s0 + $0x34] sm:$0xf]
  %v165 = vld [vmem:[%s0 + $0x38] sm:$0xf]
  %v166 = vld [vmem:[%s0 + $0x3c] sm:$0xf]
  %v167 = vld [vmem:[%s0 + $0x40] sm:$0xf]
  %v168 = vld [vmem:[%s0 + $0x44] sm:$0xf]
  %v169 = vld [vmem:[%s0 + $0x48] sm:$0xf]
  %v170 = vld [vmem:[%s0 + $0x4c] sm:$0xf]
  %v171 = vld [vmem:[%s0 + $0x50] sm:$0xf]
  %v172 = vld [vmem:[%s0 + $0x54] sm:$0xf]
  %v173 = vld [vmem:[%s0 + $0x58] sm:$0xf]
  %v174 = vld [vmem:[%s0 + $0x5c] sm:$0xf]
  %v175 = vld [vmem:[%s0 + $0x60] sm:$0xf]
  %v176 = vld [vmem:[%s0 + $0x64] sm:$0xf]
  %v177 = vld [vmem:[%s0 + $0x68] sm:$0xf]
  %v178 = vld [vmem:[%s0 + $0x6c] sm:$0xf]
  %v179 = vld [vmem:[%s0 + $0x70] sm:$0xf]
  %v180 = vld [vmem:[%s0 + $0x74] sm:$0xf]
  %v181 = vld [vmem:[%s0 + $0x78] sm:$0xf]
  %v182 = vld [vmem:[%s0 + $0x7c] sm:$0xf]
  %v183 = vunpack.c.l.bf16 %v151
  %v184 = vunpack.c.l.bf16 %v152
  %v185 = vunpack.c.l.bf16 %v153
  %v186 = vunpack.c.l.bf16 %v154
  %v187 = vunpack.c.l.bf16 %v155
  %v188 = vunpack.c.l.bf16 %v156
  %v189 = vunpack.c.l.bf16 %v157
  %v190 = vunpack.c.l.bf16 %v158
  %v191 = vunpack.c.l.bf16 %v159
  %v192 = vunpack.c.l.bf16 %v160
  %v193 = vunpack.c.l.bf16 %v161
  %v194 = vunpack.c.l.bf16 %v162
  %v195 = vunpack.c.l.bf16 %v163
  %v196 = vunpack.c.l.bf16 %v164
  %v197 = vunpack.c.l.bf16 %v165
  %v198 = vunpack.c.l.bf16 %v166
  %v199 = vunpack.c.l.bf16 %v167
  %v200 = vunpack.c.l.bf16 %v168
  %v201 = vunpack.c.l.bf16 %v169
  %v202 = vunpack.c.l.bf16 %v170
  %v203 = vunpack.c.l.bf16 %v171
  %v204 = vunpack.c.l.bf16 %v172
  %v205 = vunpack.c.l.bf16 %v173
  %v206 = vunpack.c.l.bf16 %v174
  %v207 = vunpack.c.l.bf16 %v175
  %v208 = vunpack.c.l.bf16 %v176
  %v209 = vunpack.c.l.bf16 %v177
  %v210 = vunpack.c.l.bf16 %v178
  %v211 = vunpack.c.l.bf16 %v179
  %v212 = vunpack.c.l.bf16 %v180
  %v213 = vunpack.c.l.bf16 %v181
  %v214 = vunpack.c.l.bf16 %v182
  %247 = vrot.lane.b32.xlu0 %v183, 124
  %v248 = vpop.permute.xlu0 %247
  %249 = vrot.lane.b32.xlu0 %v184, 124
  %v250 = vpop.permute.xlu0 %249
  %251 = vrot.lane.b32.xlu0 %v185, 124
  %v252 = vpop.permute.xlu0 %251
  %253 = vrot.lane.b32.xlu0 %v186, 124
  %v254 = vpop.permute.xlu0 %253
  %255 = vrot.lane.b32.xlu0 %v187, 124
  %v256 = vpop.permute.xlu0 %255
  %257 = vrot.lane.b32.xlu0 %v188, 124
  %v258 = vpop.permute.xlu0 %257
  %259 = vrot.lane.b32.xlu0 %v189, 124
  %v260 = vpop.permute.xlu0 %259
  %261 = vrot.lane.b32.xlu0 %v190, 124
  %v262 = vpop.permute.xlu0 %261
  %263 = vrot.lane.b32.xlu0 %v191, 124
  %v264 = vpop.permute.xlu0 %263
  %265 = vrot.lane.b32.xlu0 %v192, 124
  %v266 = vpop.permute.xlu0 %265
  %267 = vrot.lane.b32.xlu0 %v193, 124
  %v268 = vpop.permute.xlu0 %267
  %269 = vrot.lane.b32.xlu0 %v194, 124
  %v270 = vpop.permute.xlu0 %269
  %271 = vrot.lane.b32.xlu0 %v195, 124
  %v272 = vpop.permute.xlu0 %271
  %273 = vrot.lane.b32.xlu0 %v196, 124
  %v274 = vpop.permute.xlu0 %273
  %275 = vrot.lane.b32.xlu0 %v197, 124
  %v276 = vpop.permute.xlu0 %275
  %277 = vrot.lane.b32.xlu0 %v198, 124
  %v278 = vpop.permute.xlu0 %277
  %279 = vrot.lane.b32.xlu0 %v199, 124
  %v280 = vpop.permute.xlu0 %279
  %281 = vrot.lane.b32.xlu0 %v200, 124
  %v282 = vpop.permute.xlu0 %281
  %283 = vrot.lane.b32.xlu0 %v201, 124
  %v284 = vpop.permute.xlu0 %283
  %285 = vrot.lane.b32.xlu0 %v202, 124
  %v286 = vpop.permute.xlu0 %285
  %287 = vrot.lane.b32.xlu0 %v203, 124
  %v288 = vpop.permute.xlu0 %287
  %289 = vrot.lane.b32.xlu0 %v204, 124
  %v290 = vpop.permute.xlu0 %289
  %291 = vrot.lane.b32.xlu0 %v205, 124
  %v292 = vpop.permute.xlu0 %291
  %293 = vrot.lane.b32.xlu0 %v206, 124
  %v294 = vpop.permute.xlu0 %293
  %295 = vrot.lane.b32.xlu0 %v207, 124
  %v296 = vpop.permute.xlu0 %295
  %297 = vrot.lane.b32.xlu0 %v208, 124
  %v298 = vpop.permute.xlu0 %297
  %299 = vrot.lane.b32.xlu0 %v209, 124
  %v300 = vpop.permute.xlu0 %299
  %301 = vrot.lane.b32.xlu0 %v210, 124
  %v302 = vpop.permute.xlu0 %301
  %303 = vrot.lane.b32.xlu0 %v211, 124
  %v304 = vpop.permute.xlu0 %303
  %305 = vrot.lane.b32.xlu0 %v212, 124
  %v306 = vpop.permute.xlu0 %305
  %307 = vrot.lane.b32.xlu0 %v213, 124
  %v308 = vpop.permute.xlu0 %307
  %309 = vrot.lane.b32.xlu0 %v214, 124
  %v310 = vpop.permute.xlu0 %309
  %v343 = vmax.f32 %v183, %v248
  %v344 = vmax.f32 %v184, %v250
  %v345 = vmax.f32 %v185, %v252
  %v346 = vmax.f32 %v186, %v254
  %v347 = vmax.f32 %v187, %v256
  %v348 = vmax.f32 %v188, %v258
  %v349 = vmax.f32 %v189, %v260
  %v350 = vmax.f32 %v190, %v262
  %v351 = vmax.f32 %v191, %v264
  %v352 = vmax.f32 %v192, %v266
  %v353 = vmax.f32 %v193, %v268
  %v354 = vmax.f32 %v194, %v270
  %v355 = vmax.f32 %v195, %v272
  %v356 = vmax.f32 %v196, %v274
  %v357 = vmax.f32 %v197, %v276
  %v358 = vmax.f32 %v198, %v278
  %v359 = vmax.f32 %v199, %v280
  %v360 = vmax.f32 %v200, %v282
  %v361 = vmax.f32 %v201, %v284
  %v362 = vmax.f32 %v202, %v286
  %v363 = vmax.f32 %v203, %v288
  %v364 = vmax.f32 %v204, %v290
  %v365 = vmax.f32 %v205, %v292
  %v366 = vmax.f32 %v206, %v294
  %v367 = vmax.f32 %v207, %v296
  %v368 = vmax.f32 %v208, %v298
  %v369 = vmax.f32 %v209, %v300
  %v370 = vmax.f32 %v210, %v302
  %v371 = vmax.f32 %v211, %v304
  %v372 = vmax.f32 %v212, %v306
  %v373 = vmax.f32 %v213, %v308
  %v374 = vmax.f32 %v214, %v310
  %v375 = vpack.c.bf16 %v343, %v343
  %v376 = vpack.c.bf16 %v344, %v344
  %v377 = vpack.c.bf16 %v345, %v345
  %v378 = vpack.c.bf16 %v346, %v346
  %v379 = vpack.c.bf16 %v347, %v347
  %v380 = vpack.c.bf16 %v348, %v348
  %v381 = vpack.c.bf16 %v349, %v349
  %v382 = vpack.c.bf16 %v350, %v350
  %v383 = vpack.c.bf16 %v351, %v351
  %v384 = vpack.c.bf16 %v352, %v352
  %v385 = vpack.c.bf16 %v353, %v353
  %v386 = vpack.c.bf16 %v354, %v354
  %v387 = vpack.c.bf16 %v355, %v355
  %v388 = vpack.c.bf16 %v356, %v356
  %v389 = vpack.c.bf16 %v357, %v357
  %v390 = vpack.c.bf16 %v358, %v358
  %v391 = vpack.c.bf16 %v359, %v359
  %v392 = vpack.c.bf16 %v360, %v360
  %v393 = vpack.c.bf16 %v361, %v361
  %v394 = vpack.c.bf16 %v362, %v362
  %v395 = vpack.c.bf16 %v363, %v363
  %v396 = vpack.c.bf16 %v364, %v364
  %v397 = vpack.c.bf16 %v365, %v365
  %v398 = vpack.c.bf16 %v366, %v366
  %v399 = vpack.c.bf16 %v367, %v367
  %v400 = vpack.c.bf16 %v368, %v368
  %v401 = vpack.c.bf16 %v369, %v369
  %v402 = vpack.c.bf16 %v370, %v370
  %v403 = vpack.c.bf16 %v371, %v371
  %v404 = vpack.c.bf16 %v372, %v372
  %v405 = vpack.c.bf16 %v373, %v373
  %v406 = vpack.c.bf16 %v374, %v374
  %v407 = vunpack.c.l.bf16 %v375
  %v408 = vunpack.c.l.bf16 %v377
  %v409 = vunpack.c.l.bf16 %v379
  %v410 = vunpack.c.l.bf16 %v381
  %v411 = vunpack.c.l.bf16 %v383
  %v412 = vunpack.c.l.bf16 %v385
  %v413 = vunpack.c.l.bf16 %v387
  %v414 = vunpack.c.l.bf16 %v389
  %v415 = vunpack.c.l.bf16 %v391
  %v416 = vunpack.c.l.bf16 %v393
  %v417 = vunpack.c.l.bf16 %v395
  %v418 = vunpack.c.l.bf16 %v397
  %v419 = vunpack.c.l.bf16 %v399
  %v420 = vunpack.c.l.bf16 %v401
  %v421 = vunpack.c.l.bf16 %v403
  %v422 = vunpack.c.l.bf16 %v405
  %v423 = vunpack.c.l.bf16 %v376
  %v424 = vunpack.c.l.bf16 %v378
  %v425 = vunpack.c.l.bf16 %v380
  %v426 = vunpack.c.l.bf16 %v382
  %v427 = vunpack.c.l.bf16 %v384
  %v428 = vunpack.c.l.bf16 %v386
  %v429 = vunpack.c.l.bf16 %v388
  %v430 = vunpack.c.l.bf16 %v390
  %v431 = vunpack.c.l.bf16 %v392
  %v432 = vunpack.c.l.bf16 %v394
  %v433 = vunpack.c.l.bf16 %v396
  %v434 = vunpack.c.l.bf16 %v398
  %v435 = vunpack.c.l.bf16 %v400
  %v436 = vunpack.c.l.bf16 %v402
  %v437 = vunpack.c.l.bf16 %v404
  %v438 = vunpack.c.l.bf16 %v406
  %v439 = vmax.f32 %v407, %v423
  %v440 = vmax.f32 %v408, %v424
  %v441 = vmax.f32 %v409, %v425
  %v442 = vmax.f32 %v410, %v426
  %v443 = vmax.f32 %v411, %v427
  %v444 = vmax.f32 %v412, %v428
  %v445 = vmax.f32 %v413, %v429
  %v446 = vmax.f32 %v414, %v430
  %v447 = vmax.f32 %v415, %v431
  %v448 = vmax.f32 %v416, %v432
  %v449 = vmax.f32 %v417, %v433
  %v450 = vmax.f32 %v418, %v434
  %v451 = vmax.f32 %v419, %v435
  %v452 = vmax.f32 %v420, %v436
  %v453 = vmax.f32 %v421, %v437
  %v454 = vmax.f32 %v422, %v438
  %v455 = vpack.c.bf16 %v439, %v439
  %v456 = vpack.c.bf16 %v440, %v440
  %v457 = vpack.c.bf16 %v441, %v441
  %v458 = vpack.c.bf16 %v442, %v442
  %v459 = vpack.c.bf16 %v443, %v443
  %v460 = vpack.c.bf16 %v444, %v444
  %v461 = vpack.c.bf16 %v445, %v445
  %v462 = vpack.c.bf16 %v446, %v446
  %v463 = vpack.c.bf16 %v447, %v447
  %v464 = vpack.c.bf16 %v448, %v448
  %v465 = vpack.c.bf16 %v449, %v449
  %v466 = vpack.c.bf16 %v450, %v450
  %v467 = vpack.c.bf16 %v451, %v451
  %v468 = vpack.c.bf16 %v452, %v452
  %v469 = vpack.c.bf16 %v453, %v453
  %v470 = vpack.c.bf16 %v454, %v454
  %v472 = vshrl.u32 %v455, 16
  %v474 = vrot.slane %v472, 7
  %v475 = vshll.u32 %v455, 16
  %v477 = vor.u32 %v474, %v475
  %v478 = vrot.slane %v474, 4
  %v480 = vshrl.u32 %v456, 16
  %v482 = vrot.slane %v480, 7
  %v483 = vshll.u32 %v456, 16
  %v485 = vor.u32 %v482, %v483
  %v486 = vrot.slane %v482, 4
  %v488 = vshrl.u32 %v457, 16
  %v490 = vrot.slane %v488, 7
  %v491 = vshll.u32 %v457, 16
  %v493 = vor.u32 %v490, %v491
  %v494 = vrot.slane %v490, 4
  %v496 = vshrl.u32 %v458, 16
  %v498 = vrot.slane %v496, 7
  %v499 = vshll.u32 %v458, 16
  %v501 = vor.u32 %v498, %v499
  %v502 = vrot.slane %v498, 4
  %v504 = vshrl.u32 %v459, 16
  %v506 = vrot.slane %v504, 7
  %v507 = vshll.u32 %v459, 16
  %v509 = vor.u32 %v506, %v507
  %v510 = vrot.slane %v506, 4
  %v512 = vshrl.u32 %v460, 16
  %v514 = vrot.slane %v512, 7
  %v515 = vshll.u32 %v460, 16
  %v517 = vor.u32 %v514, %v515
  %v518 = vrot.slane %v514, 4
  %v520 = vshrl.u32 %v461, 16
  %v522 = vrot.slane %v520, 7
  %v523 = vshll.u32 %v461, 16
  %v525 = vor.u32 %v522, %v523
  %v526 = vrot.slane %v522, 4
  %v528 = vshrl.u32 %v462, 16
  %v530 = vrot.slane %v528, 7
  %v531 = vshll.u32 %v462, 16
  %v533 = vor.u32 %v530, %v531
  %v534 = vrot.slane %v530, 4
  %v536 = vshrl.u32 %v463, 16
  %v538 = vrot.slane %v536, 7
  %v539 = vshll.u32 %v463, 16
  %v541 = vor.u32 %v538, %v539
  %v542 = vrot.slane %v538, 4
  %v544 = vshrl.u32 %v464, 16
  %v546 = vrot.slane %v544, 7
  %v547 = vshll.u32 %v464, 16
  %v549 = vor.u32 %v546, %v547
  %v550 = vrot.slane %v546, 4
  %v552 = vshrl.u32 %v465, 16
  %v554 = vrot.slane %v552, 7
  %v555 = vshll.u32 %v465, 16
  %v557 = vor.u32 %v554, %v555
  %v558 = vrot.slane %v554, 4
  %v560 = vshrl.u32 %v466, 16
  %v562 = vrot.slane %v560, 7
  %v563 = vshll.u32 %v466, 16
  %v565 = vor.u32 %v562, %v563
  %v566 = vrot.slane %v562, 4
  %v568 = vshrl.u32 %v467, 16
  %v570 = vrot.slane %v568, 7
  %v571 = vshll.u32 %v467, 16
  %v573 = vor.u32 %v570, %v571
  %v574 = vrot.slane %v570, 4
  %v576 = vshrl.u32 %v468, 16
  %v578 = vrot.slane %v576, 7
  %v579 = vshll.u32 %v468, 16
  %v581 = vor.u32 %v578, %v579
  %v582 = vrot.slane %v578, 4
  %v584 = vshrl.u32 %v469, 16
  %v586 = vrot.slane %v584, 7
  %v587 = vshll.u32 %v469, 16
  %v589 = vor.u32 %v586, %v587
  %v590 = vrot.slane %v586, 4
  %v592 = vshrl.u32 %v470, 16
  %v594 = vrot.slane %v592, 7
  %v595 = vshll.u32 %v470, 16
  %v597 = vor.u32 %v594, %v595
  %v598 = vrot.slane %v594, 4
  %s631 = scalar_lea.vmem [#allocation2], 8
  %vm632 = vcmask 27648
  %vm633 = vmand %vm632, %vm89
  %v634 = vld [vmem:[%s631] sm:$0xf]
  %v635 = vsel %vm633, %v477, %v634
  %636 = vst [vmem:[%s631] sm:$0xf] %v635
  %v637 = vld [vmem:[%s631 + $0x4] sm:$0x1]
  %v638 = vsel %vm28, %v478, %v637
  %639 = vst [vmem:[%s631 + $0x4] sm:$0x1] %v638
  %v640 = vld [vmem:[%s631 + $0x8] sm:$0xf]
  %v641 = vsel %vm633, %v485, %v640
  %642 = vst [vmem:[%s631 + $0x8] sm:$0xf] %v641
  %v643 = vld [vmem:[%s631 + $0xc] sm:$0x1]
  %v644 = vsel %vm28, %v486, %v643
  %645 = vst [vmem:[%s631 + $0xc] sm:$0x1] %v644
  %v646 = vld [vmem:[%s631 + $0x10] sm:$0xf]
  %v647 = vsel %vm633, %v493, %v646
  %648 = vst [vmem:[%s631 + $0x10] sm:$0xf] %v647
  %v649 = vld [vmem:[%s631 + $0x14] sm:$0x1]
  %v650 = vsel %vm28, %v494, %v649
  %651 = vst [vmem:[%s631 + $0x14] sm:$0x1] %v650
  %v652 = vld [vmem:[%s631 + $0x18] sm:$0xf]
  %v653 = vsel %vm633, %v501, %v652
  %654 = vst [vmem:[%s631 + $0x18] sm:$0xf] %v653
  %v655 = vld [vmem:[%s631 + $0x1c] sm:$0x1]
  %v656 = vsel %vm28, %v502, %v655
  %657 = vst [vmem:[%s631 + $0x1c] sm:$0x1] %v656
  %v658 = vld [vmem:[%s631 + $0x20] sm:$0xf]
  %v659 = vsel %vm633, %v509, %v658
  %660 = vst [vmem:[%s631 + $0x20] sm:$0xf] %v659
  %v661 = vld [vmem:[%s631 + $0x24] sm:$0x1]
  %v662 = vsel %vm28, %v510, %v661
  %663 = vst [vmem:[%s631 + $0x24] sm:$0x1] %v662
  %v664 = vld [vmem:[%s631 + $0x28] sm:$0xf]
  %v665 = vsel %vm633, %v517, %v664
  %666 = vst [vmem:[%s631 + $0x28] sm:$0xf] %v665
  %v667 = vld [vmem:[%s631 + $0x2c] sm:$0x1]
  %v668 = vsel %vm28, %v518, %v667
  %669 = vst [vmem:[%s631 + $0x2c] sm:$0x1] %v668
  %v670 = vld [vmem:[%s631 + $0x30] sm:$0xf]
  %v671 = vsel %vm633, %v525, %v670
  %672 = vst [vmem:[%s631 + $0x30] sm:$0xf] %v671
  %v673 = vld [vmem:[%s631 + $0x34] sm:$0x1]
  %v674 = vsel %vm28, %v526, %v673
  %675 = vst [vmem:[%s631 + $0x34] sm:$0x1] %v674
  %v676 = vld [vmem:[%s631 + $0x38] sm:$0xf]
  %v677 = vsel %vm633, %v533, %v676
  %678 = vst [vmem:[%s631 + $0x38] sm:$0xf] %v677
  %v679 = vld [vmem:[%s631 + $0x3c] sm:$0x1]
  %v680 = vsel %vm28, %v534, %v679
  %681 = vst [vmem:[%s631 + $0x3c] sm:$0x1] %v680
  %v682 = vld [vmem:[%s631 + $0x50] sm:$0xf]
  %v683 = vsel %vm633, %v541, %v682
  %684 = vst [vmem:[%s631 + $0x50] sm:$0xf] %v683
  %v685 = vld [vmem:[%s631 + $0x54] sm:$0x1]
  %v686 = vsel %vm28, %v542, %v685
  %687 = vst [vmem:[%s631 + $0x54] sm:$0x1] %v686
  %v688 = vld [vmem:[%s631 + $0x58] sm:$0xf]
  %v689 = vsel %vm633, %v549, %v688
  %690 = vst [vmem:[%s631 + $0x58] sm:$0xf] %v689
  %v691 = vld [vmem:[%s631 + $0x5c] sm:$0x1]
  %v692 = vsel %vm28, %v550, %v691
  %693 = vst [vmem:[%s631 + $0x5c] sm:$0x1] %v692
  %v694 = vld [vmem:[%s631 + $0x60] sm:$0xf]
  %v695 = vsel %vm633, %v557, %v694
  %696 = vst [vmem:[%s631 + $0x60] sm:$0xf] %v695
  %v697 = vld [vmem:[%s631 + $0x64] sm:$0x1]
  %v698 = vsel %vm28, %v558, %v697
  %699 = vst [vmem:[%s631 + $0x64] sm:$0x1] %v698
  %v700 = vld [vmem:[%s631 + $0x68] sm:$0xf]
  %v701 = vsel %vm633, %v565, %v700
  %702 = vst [vmem:[%s631 + $0x68] sm:$0xf] %v701
  %v703 = vld [vmem:[%s631 + $0x6c] sm:$0x1]
  %v704 = vsel %vm28, %v566, %v703
  %705 = vst [vmem:[%s631 + $0x6c] sm:$0x1] %v704
  %v706 = vld [vmem:[%s631 + $0x70] sm:$0xf]
  %v707 = vsel %vm633, %v573, %v706
  %708 = vst [vmem:[%s631 + $0x70] sm:$0xf] %v707
  %v709 = vld [vmem:[%s631 + $0x74] sm:$0x1]
  %v710 = vsel %vm28, %v574, %v709
  %711 = vst [vmem:[%s631 + $0x74] sm:$0x1] %v710
  %v712 = vld [vmem:[%s631 + $0x78] sm:$0xf]
  %v713 = vsel %vm633, %v581, %v712
  %714 = vst [vmem:[%s631 + $0x78] sm:$0xf] %v713
  %v715 = vld [vmem:[%s631 + $0x7c] sm:$0x1]
  %v716 = vsel %vm28, %v582, %v715
  %717 = vst [vmem:[%s631 + $0x7c] sm:$0x1] %v716
  %v718 = vld [vmem:[%s631 + $0x80] sm:$0xf]
  %v719 = vsel %vm633, %v589, %v718
  %720 = vst [vmem:[%s631 + $0x80] sm:$0xf] %v719
  %v721 = vld [vmem:[%s631 + $0x84] sm:$0x1]
  %v722 = vsel %vm28, %v590, %v721
  %723 = vst [vmem:[%s631 + $0x84] sm:$0x1] %v722
  %v724 = vld [vmem:[%s631 + $0x88] sm:$0xf]
  %v725 = vsel %vm633, %v597, %v724
  %726 = vst [vmem:[%s631 + $0x88] sm:$0xf] %v725
  %v727 = vld [vmem:[%s631 + $0x8c] sm:$0x1]
  %v728 = vsel %vm28, %v598, %v727
  %729 = vst [vmem:[%s631 + $0x8c] sm:$0x1] %v728
  %v730 = vld [vmem:[#allocation2] sm:$0xf]
  %v731 = vld [vmem:[#allocation2 + $0x8] sm:$0xf]
  %v732 = vld [vmem:[#allocation2 + $0x10] sm:$0xf]
  %v733 = vld [vmem:[#allocation2 + $0x18] sm:$0xf]
  %v734 = vld [vmem:[#allocation2 + $0x20] sm:$0xf]
  %v735 = vld [vmem:[#allocation2 + $0x28] sm:$0xf]
  %v736 = vld [vmem:[#allocation2 + $0x30] sm:$0xf]
  %v737 = vld [vmem:[#allocation2 + $0x38] sm:$0xf]
  %v738 = vld [vmem:[#allocation2 + $0x50] sm:$0xf]
  %v739 = vld [vmem:[#allocation2 + $0x58] sm:$0xf]
  %v740 = vld [vmem:[#allocation2 + $0x60] sm:$0xf]
  %v741 = vld [vmem:[#allocation2 + $0x68] sm:$0xf]
  %v742 = vld [vmem:[#allocation2 + $0x70] sm:$0xf]
  %v743 = vld [vmem:[#allocation2 + $0x78] sm:$0xf]
  %v744 = vld [vmem:[#allocation2 + $0x80] sm:$0xf]
  %v745 = vld [vmem:[#allocation2 + $0x88] sm:$0xf]
  %746 = vst.msk [vmem:[#allocation3] sm:$0xf] %vm15, %v730
  %747 = vst.msk [vmem:[#allocation3 + $0x4] sm:$0xf] %vm15, %v731
  %748 = vst.msk [vmem:[#allocation3 + $0x8] sm:$0xf] %vm15, %v732
  %749 = vst.msk [vmem:[#allocation3 + $0xc] sm:$0xf] %vm15, %v733
  %750 = vst.msk [vmem:[#allocation3 + $0x10] sm:$0xf] %vm15, %v734
  %751 = vst.msk [vmem:[#allocation3 + $0x14] sm:$0xf] %vm15, %v735
  %752 = vst.msk [vmem:[#allocation3 + $0x18] sm:$0xf] %vm15, %v736
  %753 = vst.msk [vmem:[#allocation3 + $0x1c] sm:$0xf] %vm15, %v737
  %754 = vst.msk [vmem:[#allocation3 + $0x20] sm:$0xf] %vm15, %v738
  %755 = vst.msk [vmem:[#allocation3 + $0x24] sm:$0xf] %vm15, %v739
  %756 = vst.msk [vmem:[#allocation3 + $0x28] sm:$0xf] %vm15, %v740
  %757 = vst.msk [vmem:[#allocation3 + $0x2c] sm:$0xf] %vm15, %v741
  %758 = vst.msk [vmem:[#allocation3 + $0x30] sm:$0xf] %vm15, %v742
  %759 = vst.msk [vmem:[#allocation3 + $0x34] sm:$0xf] %vm15, %v743
  %760 = vst.msk [vmem:[#allocation3 + $0x38] sm:$0xf] %vm15, %v744
  %761 = vst.msk [vmem:[#allocation3 + $0x3c] sm:$0xf] %vm15, %v745
  %v762 = vld [vmem:[#allocation2] sm:$0xf]
  %v763 = vld [vmem:[#allocation2 + $0x4] sm:$0x1]
  %v764 = vld [vmem:[#allocation2 + $0x8] sm:$0xf]
  %v765 = vld [vmem:[#allocation2 + $0xc] sm:$0x1]
  %v766 = vld [vmem:[#allocation2 + $0x10] sm:$0xf]
  %v767 = vld [vmem:[#allocation2 + $0x14] sm:$0x1]
  %v768 = vld [vmem:[#allocation2 + $0x18] sm:$0xf]
  %v769 = vld [vmem:[#allocation2 + $0x1c] sm:$0x1]
  %v770 = vld [vmem:[#allocation2 + $0x20] sm:$0xf]
  %v771 = vld [vmem:[#allocation2 + $0x24] sm:$0x1]
  %v772 = vld [vmem:[#allocation2 + $0x28] sm:$0xf]
  %v773 = vld [vmem:[#allocation2 + $0x2c] sm:$0x1]
  %v774 = vld [vmem:[#allocation2 + $0x30] sm:$0xf]
  %v775 = vld [vmem:[#allocation2 + $0x34] sm:$0x1]
  %v776 = vld [vmem:[#allocation2 + $0x38] sm:$0xf]
  %v777 = vld [vmem:[#allocation2 + $0x3c] sm:$0x1]
  %v778 = vld [vmem:[#allocation2 + $0x50] sm:$0xf]
  %v779 = vld [vmem:[#allocation2 + $0x54] sm:$0x1]
  %v780 = vld [vmem:[#allocation2 + $0x58] sm:$0xf]
  %v781 = vld [vmem:[#allocation2 + $0x5c] sm:$0x1]
  %v782 = vld [vmem:[#allocation2 + $0x60] sm:$0xf]
  %v783 = vld [vmem:[#allocation2 + $0x64] sm:$0x1]
  %v784 = vld [vmem:[#allocation2 + $0x68] sm:$0xf]
  %v785 = vld [vmem:[#allocation2 + $0x6c] sm:$0x1]
  %v786 = vld [vmem:[#allocation2 + $0x70] sm:$0xf]
  %v787 = vld [vmem:[#allocation2 + $0x74] sm:$0x1]
  %v788 = vld [vmem:[#allocation2 + $0x78] sm:$0xf]
  %v789 = vld [vmem:[#allocation2 + $0x7c] sm:$0x1]
  %v790 = vld [vmem:[#allocation2 + $0x80] sm:$0xf]
  %v791 = vld [vmem:[#allocation2 + $0x84] sm:$0x1]
  %v792 = vld [vmem:[#allocation2 + $0x88] sm:$0xf]
  %v793 = vld [vmem:[#allocation2 + $0x8c] sm:$0x1]
  %vm794 = vsmask.f32 3328
  %vm795 = vsmask.f32 7440
  %vm796 = vmor %vm794, %vm795
  %v798 = vshrl.u32 %v762, 16
  %v800 = vrot.slane %v798, 4
  %v801 = vshll.u32 %v762, 16
  %v803 = vrot.slane %v801, 5
  %v804 = vor.u32 %v800, %v803
  %v805 = vrot.slane %v804, 4
  %v807 = vshll.u32 %v763, 16
  %v809 = vrot.slane %v807, 5
  %v810 = vsel %vm796, %v805, %v809
  %v812 = vshrl.u32 %v764, 16
  %v814 = vrot.slane %v812, 4
  %v815 = vshll.u32 %v764, 16
  %v817 = vrot.slane %v815, 5
  %v818 = vor.u32 %v814, %v817
  %v819 = vrot.slane %v818, 4
  %v821 = vshll.u32 %v765, 16
  %v823 = vrot.slane %v821, 5
  %v824 = vsel %vm796, %v819, %v823
  %v826 = vshrl.u32 %v766, 16
  %v828 = vrot.slane %v826, 4
  %v829 = vshll.u32 %v766, 16
  %v831 = vrot.slane %v829, 5
  %v832 = vor.u32 %v828, %v831
  %v833 = vrot.slane %v832, 4
  %v835 = vshll.u32 %v767, 16
  %v837 = vrot.slane %v835, 5
  %v838 = vsel %vm796, %v833, %v837
  %v840 = vshrl.u32 %v768, 16
  %v842 = vrot.slane %v840, 4
  %v843 = vshll.u32 %v768, 16
  %v845 = vrot.slane %v843, 5
  %v846 = vor.u32 %v842, %v845
  %v847 = vrot.slane %v846, 4
  %v849 = vshll.u32 %v769, 16
  %v851 = vrot.slane %v849, 5
  %v852 = vsel %vm796, %v847, %v851
  %v854 = vshrl.u32 %v770, 16
  %v856 = vrot.slane %v854, 4
  %v857 = vshll.u32 %v770, 16
  %v859 = vrot.slane %v857, 5
  %v860 = vor.u32 %v856, %v859
  %v861 = vrot.slane %v860, 4
  %v863 = vshll.u32 %v771, 16
  %v865 = vrot.slane %v863, 5
  %v866 = vsel %vm796, %v861, %v865
  %v868 = vshrl.u32 %v772, 16
  %v870 = vrot.slane %v868, 4
  %v871 = vshll.u32 %v772, 16
  %v873 = vrot.slane %v871, 5
  %v874 = vor.u32 %v870, %v873
  %v875 = vrot.slane %v874, 4
  %v877 = vshll.u32 %v773, 16
  %v879 = vrot.slane %v877, 5
  %v880 = vsel %vm796, %v875, %v879
  %v882 = vshrl.u32 %v774, 16
  %v884 = vrot.slane %v882, 4
  %v885 = vshll.u32 %v774, 16
  %v887 = vrot.slane %v885, 5
  %v888 = vor.u32 %v884, %v887
  %v889 = vrot.slane %v888, 4
  %v891 = vshll.u32 %v775, 16
  %v893 = vrot.slane %v891, 5
  %v894 = vsel %vm796, %v889, %v893
  %v896 = vshrl.u32 %v776, 16
  %v898 = vrot.slane %v896, 4
  %v899 = vshll.u32 %v776, 16
  %v901 = vrot.slane %v899, 5
  %v902 = vor.u32 %v898, %v901
  %v903 = vrot.slane %v902, 4
  %v905 = vshll.u32 %v777, 16
  %v907 = vrot.slane %v905, 5
  %v908 = vsel %vm796, %v903, %v907
  %v910 = vshrl.u32 %v778, 16
  %v912 = vrot.slane %v910, 4
  %v913 = vshll.u32 %v778, 16
  %v915 = vrot.slane %v913, 5
  %v916 = vor.u32 %v912, %v915
  %v917 = vrot.slane %v916, 4
  %v919 = vshll.u32 %v779, 16
  %v921 = vrot.slane %v919, 5
  %v922 = vsel %vm796, %v917, %v921
  %v924 = vshrl.u32 %v780, 16
  %v926 = vrot.slane %v924, 4
  %v927 = vshll.u32 %v780, 16
  %v929 = vrot.slane %v927, 5
  %v930 = vor.u32 %v926, %v929
  %v931 = vrot.slane %v930, 4
  %v933 = vshll.u32 %v781, 16
  %v935 = vrot.slane %v933, 5
  %v936 = vsel %vm796, %v931, %v935
  %v938 = vshrl.u32 %v782, 16
  %v940 = vrot.slane %v938, 4
  %v941 = vshll.u32 %v782, 16
  %v943 = vrot.slane %v941, 5
  %v944 = vor.u32 %v940, %v943
  %v945 = vrot.slane %v944, 4
  %v947 = vshll.u32 %v783, 16
  %v949 = vrot.slane %v947, 5
  %v950 = vsel %vm796, %v945, %v949
  %v952 = vshrl.u32 %v784, 16
  %v954 = vrot.slane %v952, 4
  %v955 = vshll.u32 %v784, 16
  %v957 = vrot.slane %v955, 5
  %v958 = vor.u32 %v954, %v957
  %v959 = vrot.slane %v958, 4
  %v961 = vshll.u32 %v785, 16
  %v963 = vrot.slane %v961, 5
  %v964 = vsel %vm796, %v959, %v963
  %v966 = vshrl.u32 %v786, 16
  %v968 = vrot.slane %v966, 4
  %v969 = vshll.u32 %v786, 16
  %v971 = vrot.slane %v969, 5
  %v972 = vor.u32 %v968, %v971
  %v973 = vrot.slane %v972, 4
  %v975 = vshll.u32 %v787, 16
  %v977 = vrot.slane %v975, 5
  %v978 = vsel %vm796, %v973, %v977
  %v980 = vshrl.u32 %v788, 16
  %v982 = vrot.slane %v980, 4
  %v983 = vshll.u32 %v788, 16
  %v985 = vrot.slane %v983, 5
  %v986 = vor.u32 %v982, %v985
  %v987 = vrot.slane %v986, 4
  %v989 = vshll.u32 %v789, 16
  %v991 = vrot.slane %v989, 5
  %v992 = vsel %vm796, %v987, %v991
  %v994 = vshrl.u32 %v790, 16
  %v996 = vrot.slane %v994, 4
  %v997 = vshll.u32 %v790, 16
  %v999 = vrot.slane %v997, 5
  %v1000 = vor.u32 %v996, %v999
  %v1001 = vrot.slane %v1000, 4
  %v1003 = vshll.u32 %v791, 16
  %v1005 = vrot.slane %v1003, 5
  %v1006 = vsel %vm796, %v1001, %v1005
  %v1008 = vshrl.u32 %v792, 16
  %v1010 = vrot.slane %v1008, 4
  %v1011 = vshll.u32 %v792, 16
  %v1013 = vrot.slane %v1011, 5
  %v1014 = vor.u32 %v1010, %v1013
  %v1015 = vrot.slane %v1014, 4
  %v1017 = vshll.u32 %v793, 16
  %v1019 = vrot.slane %v1017, 5
  %v1020 = vsel %vm796, %v1015, %v1019
  %1021 = vrot.lane.b32.xlu0 %v810, 4
  %v1022 = vpop.permute.xlu0 %1021
  %1023 = vrot.lane.b32.xlu0 %v824, 4
  %v1024 = vpop.permute.xlu0 %1023
  %1025 = vrot.lane.b32.xlu0 %v838, 4
  %v1026 = vpop.permute.xlu0 %1025
  %1027 = vrot.lane.b32.xlu0 %v852, 4
  %v1028 = vpop.permute.xlu0 %1027
  %1029 = vrot.lane.b32.xlu0 %v866, 4
  %v1030 = vpop.permute.xlu0 %1029
  %1031 = vrot.lane.b32.xlu0 %v880, 4
  %v1032 = vpop.permute.xlu0 %1031
  %1033 = vrot.lane.b32.xlu0 %v894, 4
  %v1034 = vpop.permute.xlu0 %1033
  %1035 = vrot.lane.b32.xlu0 %v908, 4
  %v1036 = vpop.permute.xlu0 %1035
  %1037 = vrot.lane.b32.xlu0 %v922, 4
  %v1038 = vpop.permute.xlu0 %1037
  %1039 = vrot.lane.b32.xlu0 %v936, 4
  %v1040 = vpop.permute.xlu0 %1039
  %1041 = vrot.lane.b32.xlu0 %v950, 4
  %v1042 = vpop.permute.xlu0 %1041
  %1043 = vrot.lane.b32.xlu0 %v964, 4
  %v1044 = vpop.permute.xlu0 %1043
  %1045 = vrot.lane.b32.xlu0 %v978, 4
  %v1046 = vpop.permute.xlu0 %1045
  %1047 = vrot.lane.b32.xlu0 %v992, 4
  %v1048 = vpop.permute.xlu0 %1047
  %1049 = vrot.lane.b32.xlu0 %v1006, 4
  %v1050 = vpop.permute.xlu0 %1049
  %1051 = vrot.lane.b32.xlu0 %v1020, 4
  %v1052 = vpop.permute.xlu0 %1051
  %vm1069 = vcmask 60448
  %1070 = vst.msk [vmem:[#allocation3] sm:$0xf] %vm1069, %v1022
  %1071 = vst.msk [vmem:[#allocation3 + $0x4] sm:$0xf] %vm1069, %v1024
  %1072 = vst.msk [vmem:[#allocation3 + $0x8] sm:$0xf] %vm1069, %v1026
  %1073 = vst.msk [vmem:[#allocation3 + $0xc] sm:$0xf] %vm1069, %v1028
  %1074 = vst.msk [vmem:[#allocation3 + $0x10] sm:$0xf] %vm1069, %v1030
  %1075 = vst.msk [vmem:[#allocation3 + $0x14] sm:$0xf] %vm1069, %v1032
  %1076 = vst.msk [vmem:[#allocation3 + $0x18] sm:$0xf] %vm1069, %v1034
  %1077 = vst.msk [vmem:[#allocation3 + $0x1c] sm:$0xf] %vm1069, %v1036
  %1078 = vst.msk [vmem:[#allocation3 + $0x20] sm:$0xf] %vm1069, %v1038
  %1079 = vst.msk [vmem:[#allocation3 + $0x24] sm:$0xf] %vm1069, %v1040
  %1080 = vst.msk [vmem:[#allocation3 + $0x28] sm:$0xf] %vm1069, %v1042
  %1081 = vst.msk [vmem:[#allocation3 + $0x2c] sm:$0xf] %vm1069, %v1044
  %1082 = vst.msk [vmem:[#allocation3 + $0x30] sm:$0xf] %vm1069, %v1046
  %1083 = vst.msk [vmem:[#allocation3 + $0x34] sm:$0xf] %vm1069, %v1048
  %1084 = vst.msk [vmem:[#allocation3 + $0x38] sm:$0xf] %vm1069, %v1050
  %1085 = vst.msk [vmem:[#allocation3 + $0x3c] sm:$0xf] %vm1069, %v1052
  %v1086 = vld [vmem:[#allocation2] sm:$0xe]
  %v1087 = vld [vmem:[#allocation2 + $0x4] sm:$0x1]
  %v1088 = vld [vmem:[#allocation2 + $0x8] sm:$0xe]
  %v1089 = vld [vmem:[#allocation2 + $0xc] sm:$0x1]
  %v1090 = vld [vmem:[#allocation2 + $0x10] sm:$0xe]
  %v1091 = vld [vmem:[#allocation2 + $0x14] sm:$0x1]
  %v1092 = vld [vmem:[#allocation2 + $0x18] sm:$0xe]
  %v1093 = vld [vmem:[#allocation2 + $0x1c] sm:$0x1]
  %v1094 = vld [vmem:[#allocation2 + $0x20] sm:$0xe]
  %v1095 = vld [vmem:[#allocation2 + $0x24] sm:$0x1]
  %v1096 = vld [vmem:[#allocation2 + $0x28] sm:$0xe]
  %v1097 = vld [vmem:[#allocation2 + $0x2c] sm:$0x1]
  %v1098 = vld [vmem:[#allocation2 + $0x30] sm:$0xe]
  %v1099 = vld [vmem:[#allocation2 + $0x34] sm:$0x1]
  %v1100 = vld [vmem:[#allocation2 + $0x38] sm:$0xe]
  %v1101 = vld [vmem:[#allocation2 + $0x3c] sm:$0x1]
  %v1102 = vld [vmem:[#allocation2 + $0x50] sm:$0xe]
  %v1103 = vld [vmem:[#allocation2 + $0x54] sm:$0x1]
  %v1104 = vld [vmem:[#allocation2 + $0x58] sm:$0xe]
  %v1105 = vld [vmem:[#allocation2 + $0x5c] sm:$0x1]
  %v1106 = vld [vmem:[#allocation2 + $0x60] sm:$0xe]
  %v1107 = vld [vmem:[#allocation2 + $0x64] sm:$0x1]
  %v1108 = vld [vmem:[#allocation2 + $0x68] sm:$0xe]
  %v1109 = vld [vmem:[#allocation2 + $0x6c] sm:$0x1]
  %v1110 = vld [vmem:[#allocation2 + $0x70] sm:$0xe]
  %v1111 = vld [vmem:[#allocation2 + $0x74] sm:$0x1]
  %v1112 = vld [vmem:[#allocation2 + $0x78] sm:$0xe]
  %v1113 = vld [vmem:[#allocation2 + $0x7c] sm:$0x1]
  %v1114 = vld [vmem:[#allocation2 + $0x80] sm:$0xe]
  %v1115 = vld [vmem:[#allocation2 + $0x84] sm:$0x1]
  %v1116 = vld [vmem:[#allocation2 + $0x88] sm:$0xe]
  %v1117 = vld [vmem:[#allocation2 + $0x8c] sm:$0x1]
  %vm1150 = vcmask 1042432
  %vm1151 = vcmask 1046532
  %vm1152 = vmor %vm1150, %vm1151
  %v1153 = vrot.slane %v1086, 5
  %v1154 = vrot.slane %v1153, 4
  %v1155 = vrot.slane %v1087, 5
  %v1156 = vsel %vm1152, %v1154, %v1155
  %v1157 = vrot.slane %v1088, 5
  %v1158 = vrot.slane %v1157, 4
  %v1159 = vrot.slane %v1089, 5
  %v1160 = vsel %vm1152, %v1158, %v1159
  %v1161 = vrot.slane %v1090, 5
  %v1162 = vrot.slane %v1161, 4
  %v1163 = vrot.slane %v1091, 5
  %v1164 = vsel %vm1152, %v1162, %v1163
  %v1165 = vrot.slane %v1092, 5
  %v1166 = vrot.slane %v1165, 4
  %v1167 = vrot.slane %v1093, 5
  %v1168 = vsel %vm1152, %v1166, %v1167
  %v1169 = vrot.slane %v1094, 5
  %v1170 = vrot.slane %v1169, 4
  %v1171 = vrot.slane %v1095, 5
  %v1172 = vsel %vm1152, %v1170, %v1171
  %v1173 = vrot.slane %v1096, 5
  %v1174 = vrot.slane %v1173, 4
  %v1175 = vrot.slane %v1097, 5
  %v1176 = vsel %vm1152, %v1174, %v1175
  %v1177 = vrot.slane %v1098, 5
  %v1178 = vrot.slane %v1177, 4
  %v1179 = vrot.slane %v1099, 5
  %v1180 = vsel %vm1152, %v1178, %v1179
  %v1181 = vrot.slane %v1100, 5
  %v1182 = vrot.slane %v1181, 4
  %v1183 = vrot.slane %v1101, 5
  %v1184 = vsel %vm1152, %v1182, %v1183
  %v1185 = vrot.slane %v1102, 5
  %v1186 = vrot.slane %v1185, 4
  %v1187 = vrot.slane %v1103, 5
  %v1188 = vsel %vm1152, %v1186, %v1187
  %v1189 = vrot.slane %v1104, 5
  %v1190 = vrot.slane %v1189, 4
  %v1191 = vrot.slane %v1105, 5
  %v1192 = vsel %vm1152, %v1190, %v1191
  %v1193 = vrot.slane %v1106, 5
  %v1194 = vrot.slane %v1193, 4
  %v1195 = vrot.slane %v1107, 5
  %v1196 = vsel %vm1152, %v1194, %v1195
  %v1197 = vrot.slane %v1108, 5
  %v1198 = vrot.slane %v1197, 4
  %v1199 = vrot.slane %v1109, 5
  %v1200 = vsel %vm1152, %v1198, %v1199
  %v1201 = vrot.slane %v1110, 5
  %v1202 = vrot.slane %v1201, 4
  %v1203 = vrot.slane %v1111, 5
  %v1204 = vsel %vm1152, %v1202, %v1203
  %v1205 = vrot.slane %v1112, 5
  %v1206 = vrot.slane %v1205, 4
  %v1207 = vrot.slane %v1113, 5
  %v1208 = vsel %vm1152, %v1206, %v1207
  %v1209 = vrot.slane %v1114, 5
  %v1210 = vrot.slane %v1209, 4
  %v1211 = vrot.slane %v1115, 5
  %v1212 = vsel %vm1152, %v1210, %v1211
  %v1213 = vrot.slane %v1116, 5
  %v1214 = vrot.slane %v1213, 4
  %v1215 = vrot.slane %v1117, 5
  %v1216 = vsel %vm1152, %v1214, %v1215
  %1217 = vrot.lane.b32.xlu0 %v1156, 8
  %v1218 = vpop.permute.xlu0 %1217
  %1219 = vrot.lane.b32.xlu0 %v1160, 8
  %v1220 = vpop.permute.xlu0 %1219
  %1221 = vrot.lane.b32.xlu0 %v1164, 8
  %v1222 = vpop.permute.xlu0 %1221
  %1223 = vrot.lane.b32.xlu0 %v1168, 8
  %v1224 = vpop.permute.xlu0 %1223
  %1225 = vrot.lane.b32.xlu0 %v1172, 8
  %v1226 = vpop.permute.xlu0 %1225
  %1227 = vrot.lane.b32.xlu0 %v1176, 8
  %v1228 = vpop.permute.xlu0 %1227
  %1229 = vrot.lane.b32.xlu0 %v1180, 8
  %v1230 = vpop.permute.xlu0 %1229
  %1231 = vrot.lane.b32.xlu0 %v1184, 8
  %v1232 = vpop.permute.xlu0 %1231
  %1233 = vrot.lane.b32.xlu0 %v1188, 8
  %v1234 = vpop.permute.xlu0 %1233
  %1235 = vrot.lane.b32.xlu0 %v1192, 8
  %v1236 = vpop.permute.xlu0 %1235
  %1237 = vrot.lane.b32.xlu0 %v1196, 8
  %v1238 = vpop.permute.xlu0 %1237
  %1239 = vrot.lane.b32.xlu0 %v1200, 8
  %v1240 = vpop.permute.xlu0 %1239
  %1241 = vrot.lane.b32.xlu0 %v1204, 8
  %v1242 = vpop.permute.xlu0 %1241
  %1243 = vrot.lane.b32.xlu0 %v1208, 8
  %v1244 = vpop.permute.xlu0 %1243
  %1245 = vrot.lane.b32.xlu0 %v1212, 8
  %v1246 = vpop.permute.xlu0 %1245
  %1247 = vrot.lane.b32.xlu0 %v1216, 8
  %v1248 = vpop.permute.xlu0 %1247
  %vm1265 = vcmask 93248
  %1266 = vst.msk [vmem:[#allocation3] sm:$0xf] %vm1265, %v1218
  %1267 = vst.msk [vmem:[#allocation3 + $0x4] sm:$0xf] %vm1265, %v1220
  %1268 = vst.msk [vmem:[#allocation3 + $0x8] sm:$0xf] %vm1265, %v1222
  %1269 = vst.msk [vmem:[#allocation3 + $0xc] sm:$0xf] %vm1265, %v1224
  %1270 = vst.msk [vmem:[#allocation3 + $0x10] sm:$0xf] %vm1265, %v1226
  %1271 = vst.msk [vmem:[#allocation3 + $0x14] sm:$0xf] %vm1265, %v1228
  %1272 = vst.msk [vmem:[#allocation3 + $0x18] sm:$0xf] %vm1265, %v1230
  %1273 = vst.msk [vmem:[#allocation3 + $0x1c] sm:$0xf] %vm1265, %v1232
  %1274 = vst.msk [vmem:[#allocation3 + $0x20] sm:$0xf] %vm1265, %v1234
  %1275 = vst.msk [vmem:[#allocation3 + $0x24] sm:$0xf] %vm1265, %v1236
  %1276 = vst.msk [vmem:[#allocation3 + $0x28] sm:$0xf] %vm1265, %v1238
  %1277 = vst.msk [vmem:[#allocation3 + $0x2c] sm:$0xf] %vm1265, %v1240
  %1278 = vst.msk [vmem:[#allocation3 + $0x30] sm:$0xf] %vm1265, %v1242
  %1279 = vst.msk [vmem:[#allocation3 + $0x34] sm:$0xf] %vm1265, %v1244
  %1280 = vst.msk [vmem:[#allocation3 + $0x38] sm:$0xf] %vm1265, %v1246
  %1281 = vst.msk [vmem:[#allocation3 + $0x3c] sm:$0xf] %vm1265, %v1248
  %v1282 = vld [vmem:[%s631] sm:$0xf]
  %v1283 = vld [vmem:[%s631 + $0x8] sm:$0xf]
  %v1284 = vld [vmem:[%s631 + $0x10] sm:$0xf]
  %v1285 = vld [vmem:[%s631 + $0x18] sm:$0xf]
  %v1286 = vld [vmem:[%s631 + $0x20] sm:$0xf]
  %v1287 = vld [vmem:[%s631 + $0x28] sm:$0xf]
  %v1288 = vld [vmem:[%s631 + $0x30] sm:$0xf]
  %v1289 = vld [vmem:[%s631 + $0x38] sm:$0xf]
  %v1290 = vld [vmem:[%s631 + $0x50] sm:$0xf]
  %v1291 = vld [vmem:[%s631 + $0x58] sm:$0xf]
  %v1292 = vld [vmem:[%s631 + $0x60] sm:$0xf]
  %v1293 = vld [vmem:[%s631 + $0x68] sm:$0xf]
  %v1294 = vld [vmem:[%s631 + $0x70] sm:$0xf]
  %v1295 = vld [vmem:[%s631 + $0x78] sm:$0xf]
  %v1296 = vld [vmem:[%s631 + $0x80] sm:$0xf]
  %v1297 = vld [vmem:[%s631 + $0x88] sm:$0xf]
  %1314 = vrot.lane.b32.xlu0 %v1282, 12
  %v1315 = vpop.permute.xlu0 %1314
  %1316 = vrot.lane.b32.xlu0 %v1283, 12
  %v1317 = vpop.permute.xlu0 %1316
  %1318 = vrot.lane.b32.xlu0 %v1284, 12
  %v1319 = vpop.permute.xlu0 %1318
  %1320 = vrot.lane.b32.xlu0 %v1285, 12
  %v1321 = vpop.permute.xlu0 %1320
  %1322 = vrot.lane.b32.xlu0 %v1286, 12
  %v1323 = vpop.permute.xlu0 %1322
  %1324 = vrot.lane.b32.xlu0 %v1287, 12
  %v1325 = vpop.permute.xlu0 %1324
  %1326 = vrot.lane.b32.xlu0 %v1288, 12
  %v1327 = vpop.permute.xlu0 %1326
  %1328 = vrot.lane.b32.xlu0 %v1289, 12
  %v1329 = vpop.permute.xlu0 %1328
  %1330 = vrot.lane.b32.xlu0 %v1290, 12
  %v1331 = vpop.permute.xlu0 %1330
  %1332 = vrot.lane.b32.xlu0 %v1291, 12
  %v1333 = vpop.permute.xlu0 %1332
  %1334 = vrot.lane.b32.xlu0 %v1292, 12
  %v1335 = vpop.permute.xlu0 %1334
  %1336 = vrot.lane.b32.xlu0 %v1293, 12
  %v1337 = vpop.permute.xlu0 %1336
  %1338 = vrot.lane.b32.xlu0 %v1294, 12
  %v1339 = vpop.permute.xlu0 %1338
  %1340 = vrot.lane.b32.xlu0 %v1295, 12
  %v1341 = vpop.permute.xlu0 %1340
  %1342 = vrot.lane.b32.xlu0 %v1296, 12
  %v1343 = vpop.permute.xlu0 %1342
  %1344 = vrot.lane.b32.xlu0 %v1297, 12
  %v1345 = vpop.permute.xlu0 %1344
  %vm1362 = vcmask 126048
  %1363 = vst.msk [vmem:[#allocation3] sm:$0xf] %vm1362, %v1315
  %1364 = vst.msk [vmem:[#allocation3 + $0x4] sm:$0xf] %vm1362, %v1317
  %1365 = vst.msk [vmem:[#allocation3 + $0x8] sm:$0xf] %vm1362, %v1319
  %1366 = vst.msk [vmem:[#allocation3 + $0xc] sm:$0xf] %vm1362, %v1321
  %1367 = vst.msk [vmem:[#allocation3 + $0x10] sm:$0xf] %vm1362, %v1323
  %1368 = vst.msk [vmem:[#allocation3 + $0x14] sm:$0xf] %vm1362, %v1325
  %1369 = vst.msk [vmem:[#allocation3 + $0x18] sm:$0xf] %vm1362, %v1327
  %1370 = vst.msk [vmem:[#allocation3 + $0x1c] sm:$0xf] %vm1362, %v1329
  %1371 = vst.msk [vmem:[#allocation3 + $0x20] sm:$0xf] %vm1362, %v1331
  %1372 = vst.msk [vmem:[#allocation3 + $0x24] sm:$0xf] %vm1362, %v1333
  %1373 = vst.msk [vmem:[#allocation3 + $0x28] sm:$0xf] %vm1362, %v1335
  %1374 = vst.msk [vmem:[#allocation3 + $0x2c] sm:$0xf] %vm1362, %v1337
  %1375 = vst.msk [vmem:[#allocation3 + $0x30] sm:$0xf] %vm1362, %v1339
  %1376 = vst.msk [vmem:[#allocation3 + $0x34] sm:$0xf] %vm1362, %v1341
  %1377 = vst.msk [vmem:[#allocation3 + $0x38] sm:$0xf] %vm1362, %v1343
  %1378 = vst.msk [vmem:[#allocation3 + $0x3c] sm:$0xf] %vm1362, %v1345
  %v1379 = vld [vmem:[%s631] sm:$0xf]
  %v1380 = vld [vmem:[%s631 + $0x4] sm:$0x1]
  %v1381 = vld [vmem:[%s631 + $0x8] sm:$0xf]
  %v1382 = vld [vmem:[%s631 + $0xc] sm:$0x1]
  %v1383 = vld [vmem:[%s631 + $0x10] sm:$0xf]
  %v1384 = vld [vmem:[%s631 + $0x14] sm:$0x1]
  %v1385 = vld [vmem:[%s631 + $0x18] sm:$0xf]
  %v1386 = vld [vmem:[%s631 + $0x1c] sm:$0x1]
  %v1387 = vld [vmem:[%s631 + $0x20] sm:$0xf]
  %v1388 = vld [vmem:[%s631 + $0x24] sm:$0x1]
  %v1389 = vld [vmem:[%s631 + $0x28] sm:$0xf]
  %v1390 = vld [vmem:[%s631 + $0x2c] sm:$0x1]
  %v1391 = vld [vmem:[%s631 + $0x30] sm:$0xf]
  %v1392 = vld [vmem:[%s631 + $0x34] sm:$0x1]
  %v1393 = vld [vmem:[%s631 + $0x38] sm:$0xf]
  %v1394 = vld [vmem:[%s631 + $0x3c] sm:$0x1]
  %v1395 = vld [vmem:[%s631 + $0x50] sm:$0xf]
  %v1396 = vld [vmem:[%s631 + $0x54] sm:$0x1]
  %v1397 = vld [vmem:[%s631 + $0x58] sm:$0xf]
  %v1398 = vld [vmem:[%s631 + $0x5c] sm:$0x1]
  %v1399 = vld [vmem:[%s631 + $0x60] sm:$0xf]
  %v1400 = vld [vmem:[%s631 + $0x64] sm:$0x1]
  %v1401 = vld [vmem:[%s631 + $0x68] sm:$0xf]
  %v1402 = vld [vmem:[%s631 + $0x6c] sm:$0x1]
  %v1403 = vld [vmem:[%s631 + $0x70] sm:$0xf]
  %v1404 = vld [vmem:[%s631 + $0x74] sm:$0x1]
  %v1405 = vld [vmem:[%s631 + $0x78] sm:$0xf]
  %v1406 = vld [vmem:[%s631 + $0x7c] sm:$0x1]
  %v1407 = vld [vmem:[%s631 + $0x80] sm:$0xf]
  %v1408 = vld [vmem:[%s631 + $0x84] sm:$0x1]
  %v1409 = vld [vmem:[%s631 + $0x88] sm:$0xf]
  %v1410 = vld [vmem:[%s631 + $0x8c] sm:$0x1]
  %v1412 = vshrl.u32 %v1379, 16
  %v1414 = vrot.slane %v1412, 4
  %v1415 = vshll.u32 %v1379, 16
  %v1417 = vrot.slane %v1415, 5
  %v1418 = vor.u32 %v1414, %v1417
  %v1419 = vrot.slane %v1418, 4
  %v1421 = vshll.u32 %v1380, 16
  %v1423 = vrot.slane %v1421, 5
  %v1424 = vsel %vm796, %v1419, %v1423
  %v1426 = vshrl.u32 %v1381, 16
  %v1428 = vrot.slane %v1426, 4
  %v1429 = vshll.u32 %v1381, 16
  %v1431 = vrot.slane %v1429, 5
  %v1432 = vor.u32 %v1428, %v1431
  %v1433 = vrot.slane %v1432, 4
  %v1435 = vshll.u32 %v1382, 16
  %v1437 = vrot.slane %v1435, 5
  %v1438 = vsel %vm796, %v1433, %v1437
  %v1440 = vshrl.u32 %v1383, 16
  %v1442 = vrot.slane %v1440, 4
  %v1443 = vshll.u32 %v1383, 16
  %v1445 = vrot.slane %v1443, 5
  %v1446 = vor.u32 %v1442, %v1445
  %v1447 = vrot.slane %v1446, 4
  %v1449 = vshll.u32 %v1384, 16
  %v1451 = vrot.slane %v1449, 5
  %v1452 = vsel %vm796, %v1447, %v1451
  %v1454 = vshrl.u32 %v1385, 16
  %v1456 = vrot.slane %v1454, 4
  %v1457 = vshll.u32 %v1385, 16
  %v1459 = vrot.slane %v1457, 5
  %v1460 = vor.u32 %v1456, %v1459
  %v1461 = vrot.slane %v1460, 4
  %v1463 = vshll.u32 %v1386, 16
  %v1465 = vrot.slane %v1463, 5
  %v1466 = vsel %vm796, %v1461, %v1465
  %v1468 = vshrl.u32 %v1387, 16
  %v1470 = vrot.slane %v1468, 4
  %v1471 = vshll.u32 %v1387, 16
  %v1473 = vrot.slane %v1471, 5
  %v1474 = vor.u32 %v1470, %v1473
  %v1475 = vrot.slane %v1474, 4
  %v1477 = vshll.u32 %v1388, 16
  %v1479 = vrot.slane %v1477, 5
  %v1480 = vsel %vm796, %v1475, %v1479
  %v1482 = vshrl.u32 %v1389, 16
  %v1484 = vrot.slane %v1482, 4
  %v1485 = vshll.u32 %v1389, 16
  %v1487 = vrot.slane %v1485, 5
  %v1488 = vor.u32 %v1484, %v1487
  %v1489 = vrot.slane %v1488, 4
  %v1491 = vshll.u32 %v1390, 16
  %v1493 = vrot.slane %v1491, 5
  %v1494 = vsel %vm796, %v1489, %v1493
  %v1496 = vshrl.u32 %v1391, 16
  %v1498 = vrot.slane %v1496, 4
  %v1499 = vshll.u32 %v1391, 16
  %v1501 = vrot.slane %v1499, 5
  %v1502 = vor.u32 %v1498, %v1501
  %v1503 = vrot.slane %v1502, 4
  %v1505 = vshll.u32 %v1392, 16
  %v1507 = vrot.slane %v1505, 5
  %v1508 = vsel %vm796, %v1503, %v1507
  %v1510 = vshrl.u32 %v1393, 16
  %v1512 = vrot.slane %v1510, 4
  %v1513 = vshll.u32 %v1393, 16
  %v1515 = vrot.slane %v1513, 5
  %v1516 = vor.u32 %v1512, %v1515
  %v1517 = vrot.slane %v1516, 4
  %v1519 = vshll.u32 %v1394, 16
  %v1521 = vrot.slane %v1519, 5
  %v1522 = vsel %vm796, %v1517, %v1521
  %v1524 = vshrl.u32 %v1395, 16
  %v1526 = vrot.slane %v1524, 4
  %v1527 = vshll.u32 %v1395, 16
  %v1529 = vrot.slane %v1527, 5
  %v1530 = vor.u32 %v1526, %v1529
  %v1531 = vrot.slane %v1530, 4
  %v1533 = vshll.u32 %v1396, 16
  %v1535 = vrot.slane %v1533, 5
  %v1536 = vsel %vm796, %v1531, %v1535
  %v1538 = vshrl.u32 %v1397, 16
  %v1540 = vrot.slane %v1538, 4
  %v1541 = vshll.u32 %v1397, 16
  %v1543 = vrot.slane %v1541, 5
  %v1544 = vor.u32 %v1540, %v1543
  %v1545 = vrot.slane %v1544, 4
  %v1547 = vshll.u32 %v1398, 16
  %v1549 = vrot.slane %v1547, 5
  %v1550 = vsel %vm796, %v1545, %v1549
  %v1552 = vshrl.u32 %v1399, 16
  %v1554 = vrot.slane %v1552, 4
  %v1555 = vshll.u32 %v1399, 16
  %v1557 = vrot.slane %v1555, 5
  %v1558 = vor.u32 %v1554, %v1557
  %v1559 = vrot.slane %v1558, 4
  %v1561 = vshll.u32 %v1400, 16
  %v1563 = vrot.slane %v1561, 5
  %v1564 = vsel %vm796, %v1559, %v1563
  %v1566 = vshrl.u32 %v1401, 16
  %v1568 = vrot.slane %v1566, 4
  %v1569 = vshll.u32 %v1401, 16
  %v1571 = vrot.slane %v1569, 5
  %v1572 = vor.u32 %v1568, %v1571
  %v1573 = vrot.slane %v1572, 4
  %v1575 = vshll.u32 %v1402, 16
  %v1577 = vrot.slane %v1575, 5
  %v1578 = vsel %vm796, %v1573, %v1577
  %v1580 = vshrl.u32 %v1403, 16
  %v1582 = vrot.slane %v1580, 4
  %v1583 = vshll.u32 %v1403, 16
  %v1585 = vrot.slane %v1583, 5
  %v1586 = vor.u32 %v1582, %v1585
  %v1587 = vrot.slane %v1586, 4
  %v1589 = vshll.u32 %v1404, 16
  %v1591 = vrot.slane %v1589, 5
  %v1592 = vsel %vm796, %v1587, %v1591
  %v1594 = vshrl.u32 %v1405, 16
  %v1596 = vrot.slane %v1594, 4
  %v1597 = vshll.u32 %v1405, 16
  %v1599 = vrot.slane %v1597, 5
  %v1600 = vor.u32 %v1596, %v1599
  %v1601 = vrot.slane %v1600, 4
  %v1603 = vshll.u32 %v1406, 16
  %v1605 = vrot.slane %v1603, 5
  %v1606 = vsel %vm796, %v1601, %v1605
  %v1608 = vshrl.u32 %v1407, 16
  %v1610 = vrot.slane %v1608, 4
  %v1611 = vshll.u32 %v1407, 16
  %v1613 = vrot.slane %v1611, 5
  %v1614 = vor.u32 %v1610, %v1613
  %v1615 = vrot.slane %v1614, 4
  %v1617 = vshll.u32 %v1408, 16
  %v1619 = vrot.slane %v1617, 5
  %v1620 = vsel %vm796, %v1615, %v1619
  %v1622 = vshrl.u32 %v1409, 16
  %v1624 = vrot.slane %v1622, 4
  %v1625 = vshll.u32 %v1409, 16
  %v1627 = vrot.slane %v1625, 5
  %v1628 = vor.u32 %v1624, %v1627
  %v1629 = vrot.slane %v1628, 4
  %v1631 = vshll.u32 %v1410, 16
  %v1633 = vrot.slane %v1631, 5
  %v1634 = vsel %vm796, %v1629, %v1633
  %1635 = vrot.lane.b32.xlu0 %v1424, 16
  %v1636 = vpop.permute.xlu0 %1635
  %1637 = vrot.lane.b32.xlu0 %v1438, 16
  %v1638 = vpop.permute.xlu0 %1637
  %1639 = vrot.lane.b32.xlu0 %v1452, 16
  %v1640 = vpop.permute.xlu0 %1639
  %1641 = vrot.lane.b32.xlu0 %v1466, 16
  %v1642 = vpop.permute.xlu0 %1641
  %1643 = vrot.lane.b32.xlu0 %v1480, 16
  %v1644 = vpop.permute.xlu0 %1643
  %1645 = vrot.lane.b32.xlu0 %v1494, 16
  %v1646 = vpop.permute.xlu0 %1645
  %1647 = vrot.lane.b32.xlu0 %v1508, 16
  %v1648 = vpop.permute.xlu0 %1647
  %1649 = vrot.lane.b32.xlu0 %v1522, 16
  %v1650 = vpop.permute.xlu0 %1649
  %1651 = vrot.lane.b32.xlu0 %v1536, 16
  %v1652 = vpop.permute.xlu0 %1651
  %1653 = vrot.lane.b32.xlu0 %v1550, 16
  %v1654 = vpop.permute.xlu0 %1653
  %1655 = vrot.lane.b32.xlu0 %v1564, 16
  %v1656 = vpop.permute.xlu0 %1655
  %1657 = vrot.lane.b32.xlu0 %v1578, 16
  %v1658 = vpop.permute.xlu0 %1657
  %1659 = vrot.lane.b32.xlu0 %v1592, 16
  %v1660 = vpop.permute.xlu0 %1659
  %1661 = vrot.lane.b32.xlu0 %v1606, 16
  %v1662 = vpop.permute.xlu0 %1661
  %1663 = vrot.lane.b32.xlu0 %v1620, 16
  %v1664 = vpop.permute.xlu0 %1663
  %1665 = vrot.lane.b32.xlu0 %v1634, 16
  %v1666 = vpop.permute.xlu0 %1665
  %vm1683 = vcmask 158848
  %1684 = vst.msk [vmem:[#allocation3] sm:$0xf] %vm1683, %v1636
  %1685 = vst.msk [vmem:[#allocation3 + $0x4] sm:$0xf] %vm1683, %v1638
  %1686 = vst.msk [vmem:[#allocation3 + $0x8] sm:$0xf] %vm1683, %v1640
  %1687 = vst.msk [vmem:[#allocation3 + $0xc] sm:$0xf] %vm1683, %v1642
  %1688 = vst.msk [vmem:[#allocation3 + $0x10] sm:$0xf] %vm1683, %v1644
  %1689 = vst.msk [vmem:[#allocation3 + $0x14] sm:$0xf] %vm1683, %v1646
  %1690 = vst.msk [vmem:[#allocation3 + $0x18] sm:$0xf] %vm1683, %v1648
  %1691 = vst.msk [vmem:[#allocation3 + $0x1c] sm:$0xf] %vm1683, %v1650
  %1692 = vst.msk [vmem:[#allocation3 + $0x20] sm:$0xf] %vm1683, %v1652
  %1693 = vst.msk [vmem:[#allocation3 + $0x24] sm:$0xf] %vm1683, %v1654
  %1694 = vst.msk [vmem:[#allocation3 + $0x28] sm:$0xf] %vm1683, %v1656
  %1695 = vst.msk [vmem:[#allocation3 + $0x2c] sm:$0xf] %vm1683, %v1658
  %1696 = vst.msk [vmem:[#allocation3 + $0x30] sm:$0xf] %vm1683, %v1660
  %1697 = vst.msk [vmem:[#allocation3 + $0x34] sm:$0xf] %vm1683, %v1662
  %1698 = vst.msk [vmem:[#allocation3 + $0x38] sm:$0xf] %vm1683, %v1664
  %1699 = vst.msk [vmem:[#allocation3 + $0x3c] sm:$0xf] %vm1683, %v1666
  %v1700 = vld [vmem:[%s631] sm:$0xe]
  %v1701 = vld [vmem:[%s631 + $0x4] sm:$0x1]
  %v1702 = vld [vmem:[%s631 + $0x8] sm:$0xe]
  %v1703 = vld [vmem:[%s631 + $0xc] sm:$0x1]
  %v1704 = vld [vmem:[%s631 + $0x10] sm:$0xe]
  %v1705 = vld [vmem:[%s631 + $0x14] sm:$0x1]
  %v1706 = vld [vmem:[%s631 + $0x18] sm:$0xe]
  %v1707 = vld [vmem:[%s631 + $0x1c] sm:$0x1]
  %v1708 = vld [vmem:[%s631 + $0x20] sm:$0xe]
  %v1709 = vld [vmem:[%s631 + $0x24] sm:$0x1]
  %v1710 = vld [vmem:[%s631 + $0x28] sm:$0xe]
  %v1711 = vld [vmem:[%s631 + $0x2c] sm:$0x1]
  %v1712 = vld [vmem:[%s631 + $0x30] sm:$0xe]
  %v1713 = vld [vmem:[%s631 + $0x34] sm:$0x1]
  %v1714 = vld [vmem:[%s631 + $0x38] sm:$0xe]
  %v1715 = vld [vmem:[%s631 + $0x3c] sm:$0x1]
  %v1716 = vld [vmem:[%s631 + $0x50] sm:$0xe]
  %v1717 = vld [vmem:[%s631 + $0x54] sm:$0x1]
  %v1718 = vld [vmem:[%s631 + $0x58] sm:$0xe]
  %v1719 = vld [vmem:[%s631 + $0x5c] sm:$0x1]
  %v1720 = vld [vmem:[%s631 + $0x60] sm:$0xe]
  %v1721 = vld [vmem:[%s631 + $0x64] sm:$0x1]
  %v1722 = vld [vmem:[%s631 + $0x68] sm:$0xe]
  %v1723 = vld [vmem:[%s631 + $0x6c] sm:$0x1]
  %v1724 = vld [vmem:[%s631 + $0x70] sm:$0xe]
  %v1725 = vld [vmem:[%s631 + $0x74] sm:$0x1]
  %v1726 = vld [vmem:[%s631 + $0x78] sm:$0xe]
  %v1727 = vld [vmem:[%s631 + $0x7c] sm:$0x1]
  %v1728 = vld [vmem:[%s631 + $0x80] sm:$0xe]
  %v1729 = vld [vmem:[%s631 + $0x84] sm:$0x1]
  %v1730 = vld [vmem:[%s631 + $0x88] sm:$0xe]
  %v1731 = vld [vmem:[%s631 + $0x8c] sm:$0x1]
  %v1764 = vrot.slane %v1700, 5
  %v1765 = vrot.slane %v1764, 4
  %v1766 = vrot.slane %v1701, 5
  %v1767 = vsel %vm1152, %v1765, %v1766
  %v1768 = vrot.slane %v1702, 5
  %v1769 = vrot.slane %v1768, 4
  %v1770 = vrot.slane %v1703, 5
  %v1771 = vsel %vm1152, %v1769, %v1770
  %v1772 = vrot.slane %v1704, 5
  %v1773 = vrot.slane %v1772, 4
  %v1774 = vrot.slane %v1705, 5
  %v1775 = vsel %vm1152, %v1773, %v1774
  %v1776 = vrot.slane %v1706, 5
  %v1777 = vrot.slane %v1776, 4
  %v1778 = vrot.slane %v1707, 5
  %v1779 = vsel %vm1152, %v1777, %v1778
  %v1780 = vrot.slane %v1708, 5
  %v1781 = vrot.slane %v1780, 4
  %v1782 = vrot.slane %v1709, 5
  %v1783 = vsel %vm1152, %v1781, %v1782
  %v1784 = vrot.slane %v1710, 5
  %v1785 = vrot.slane %v1784, 4
  %v1786 = vrot.slane %v1711, 5
  %v1787 = vsel %vm1152, %v1785, %v1786
  %v1788 = vrot.slane %v1712, 5
  %v1789 = vrot.slane %v1788, 4
  %v1790 = vrot.slane %v1713, 5
  %v1791 = vsel %vm1152, %v1789, %v1790
  %v1792 = vrot.slane %v1714, 5
  %v1793 = vrot.slane %v1792, 4
  %v1794 = vrot.slane %v1715, 5
  %v1795 = vsel %vm1152, %v1793, %v1794
  %v1796 = vrot.slane %v1716, 5
  %v1797 = vrot.slane %v1796, 4
  %v1798 = vrot.slane %v1717, 5
  %v1799 = vsel %vm1152, %v1797, %v1798
  %v1800 = vrot.slane %v1718, 5
  %v1801 = vrot.slane %v1800, 4
  %v1802 = vrot.slane %v1719, 5
  %v1803 = vsel %vm1152, %v1801, %v1802
  %v1804 = vrot.slane %v1720, 5
  %v1805 = vrot.slane %v1804, 4
  %v1806 = vrot.slane %v1721, 5
  %v1807 = vsel %vm1152, %v1805, %v1806
  %v1808 = vrot.slane %v1722, 5
  %v1809 = vrot.slane %v1808, 4
  %v1810 = vrot.slane %v1723, 5
  %v1811 = vsel %vm1152, %v1809, %v1810
  %v1812 = vrot.slane %v1724, 5
  %v1813 = vrot.slane %v1812, 4
  %v1814 = vrot.slane %v1725, 5
  %v1815 = vsel %vm1152, %v1813, %v1814
  %v1816 = vrot.slane %v1726, 5
  %v1817 = vrot.slane %v1816, 4
  %v1818 = vrot.slane %v1727, 5
  %v1819 = vsel %vm1152, %v1817, %v1818
  %v1820 = vrot.slane %v1728, 5
  %v1821 = vrot.slane %v1820, 4
  %v1822 = vrot.slane %v1729, 5
  %v1823 = vsel %vm1152, %v1821, %v1822
  %v1824 = vrot.slane %v1730, 5
  %v1825 = vrot.slane %v1824, 4
  %v1826 = vrot.slane %v1731, 5
  %v1827 = vsel %vm1152, %v1825, %v1826
  %1828 = vrot.lane.b32.xlu0 %v1767, 20
  %v1829 = vpop.permute.xlu0 %1828
  %1830 = vrot.lane.b32.xlu0 %v1771, 20
  %v1831 = vpop.permute.xlu0 %1830
  %1832 = vrot.lane.b32.xlu0 %v1775, 20
  %v1833 = vpop.permute.xlu0 %1832
  %1834 = vrot.lane.b32.xlu0 %v1779, 20
  %v1835 = vpop.permute.xlu0 %1834
  %1836 = vrot.lane.b32.xlu0 %v1783, 20
  %v1837 = vpop.permute.xlu0 %1836
  %1838 = vrot.lane.b32.xlu0 %v1787, 20
  %v1839 = vpop.permute.xlu0 %1838
  %1840 = vrot.lane.b32.xlu0 %v1791, 20
  %v1841 = vpop.permute.xlu0 %1840
  %1842 = vrot.lane.b32.xlu0 %v1795, 20
  %v1843 = vpop.permute.xlu0 %1842
  %1844 = vrot.lane.b32.xlu0 %v1799, 20
  %v1845 = vpop.permute.xlu0 %1844
  %1846 = vrot.lane.b32.xlu0 %v1803, 20
  %v1847 = vpop.permute.xlu0 %1846
  %1848 = vrot.lane.b32.xlu0 %v1807, 20
  %v1849 = vpop.permute.xlu0 %1848
  %1850 = vrot.lane.b32.xlu0 %v1811, 20
  %v1851 = vpop.permute.xlu0 %1850
  %1852 = vrot.lane.b32.xlu0 %v1815, 20
  %v1853 = vpop.permute.xlu0 %1852
  %1854 = vrot.lane.b32.xlu0 %v1819, 20
  %v1855 = vpop.permute.xlu0 %1854
  %1856 = vrot.lane.b32.xlu0 %v1823, 20
  %v1857 = vpop.permute.xlu0 %1856
  %1858 = vrot.lane.b32.xlu0 %v1827, 20
  %v1859 = vpop.permute.xlu0 %1858
  %vm1876 = vcmask 191648
  %1877 = vst.msk [vmem:[#allocation3] sm:$0xf] %vm1876, %v1829
  %1878 = vst.msk [vmem:[#allocation3 + $0x4] sm:$0xf] %vm1876, %v1831
  %1879 = vst.msk [vmem:[#allocation3 + $0x8] sm:$0xf] %vm1876, %v1833
  %1880 = vst.msk [vmem:[#allocation3 + $0xc] sm:$0xf] %vm1876, %v1835
  %1881 = vst.msk [vmem:[#allocation3 + $0x10] sm:$0xf] %vm1876, %v1837
  %1882 = vst.msk [vmem:[#allocation3 + $0x14] sm:$0xf] %vm1876, %v1839
  %1883 = vst.msk [vmem:[#allocation3 + $0x18] sm:$0xf] %vm1876, %v1841
  %1884 = vst.msk [vmem:[#allocation3 + $0x1c] sm:$0xf] %vm1876, %v1843
  %1885 = vst.msk [vmem:[#allocation3 + $0x20] sm:$0xf] %vm1876, %v1845
  %1886 = vst.msk [vmem:[#allocation3 + $0x24] sm:$0xf] %vm1876, %v1847
  %1887 = vst.msk [vmem:[#allocation3 + $0x28] sm:$0xf] %vm1876, %v1849
  %1888 = vst.msk [vmem:[#allocation3 + $0x2c] sm:$0xf] %vm1876, %v1851
  %1889 = vst.msk [vmem:[#allocation3 + $0x30] sm:$0xf] %vm1876, %v1853
  %1890 = vst.msk [vmem:[#allocation3 + $0x34] sm:$0xf] %vm1876, %v1855
  %1891 = vst.msk [vmem:[#allocation3 + $0x38] sm:$0xf] %vm1876, %v1857
  %1892 = vst.msk [vmem:[#allocation3 + $0x3c] sm:$0xf] %vm1876, %v1859
  %s1893 = scalar_lea.vmem [#allocation2], 16
  %v1894 = vld [vmem:[%s1893] sm:$0xf]
  %v1895 = vld [vmem:[%s1893 + $0x8] sm:$0xf]
  %v1896 = vld [vmem:[%s1893 + $0x10] sm:$0xf]
  %v1897 = vld [vmem:[%s1893 + $0x18] sm:$0xf]
  %v1898 = vld [vmem:[%s1893 + $0x20] sm:$0xf]
  %v1899 = vld [vmem:[%s1893 + $0x28] sm:$0xf]
  %v1900 = vld [vmem:[%s1893 + $0x30] sm:$0xf]
  %v1901 = vld [vmem:[%s1893 + $0x38] sm:$0xf]
  %v1902 = vld [vmem:[%s1893 + $0x50] sm:$0xf]
  %v1903 = vld [vmem:[%s1893 + $0x58] sm:$0xf]
  %v1904 = vld [vmem:[%s1893 + $0x60] sm:$0xf]
  %v1905 = vld [vmem:[%s1893 + $0x68] sm:$0xf]
  %v1906 = vld [vmem:[%s1893 + $0x70] sm:$0xf]
  %v1907 = vld [vmem:[%s1893 + $0x78] sm:$0xf]
  %v1908 = vld [vmem:[%s1893 + $0x80] sm:$0xf]
  %v1909 = vld [vmem:[%s1893 + $0x88] sm:$0xf]
  %1926 = vrot.lane.b32.xlu0 %v1894, 24
  %v1927 = vpop.permute.xlu0 %1926
  %1928 = vrot.lane.b32.xlu0 %v1895, 24
  %v1929 = vpop.permute.xlu0 %1928
  %1930 = vrot.lane.b32.xlu0 %v1896, 24
  %v1931 = vpop.permute.xlu0 %1930
  %1932 = vrot.lane.b32.xlu0 %v1897, 24
  %v1933 = vpop.permute.xlu0 %1932
  %1934 = vrot.lane.b32.xlu0 %v1898, 24
  %v1935 = vpop.permute.xlu0 %1934
  %1936 = vrot.lane.b32.xlu0 %v1899, 24
  %v1937 = vpop.permute.xlu0 %1936
  %1938 = vrot.lane.b32.xlu0 %v1900, 24
  %v1939 = vpop.permute.xlu0 %1938
  %1940 = vrot.lane.b32.xlu0 %v1901, 24
  %v1941 = vpop.permute.xlu0 %1940
  %1942 = vrot.lane.b32.xlu0 %v1902, 24
  %v1943 = vpop.permute.xlu0 %1942
  %1944 = vrot.lane.b32.xlu0 %v1903, 24
  %v1945 = vpop.permute.xlu0 %1944
  %1946 = vrot.lane.b32.xlu0 %v1904, 24
  %v1947 = vpop.permute.xlu0 %1946
  %1948 = vrot.lane.b32.xlu0 %v1905, 24
  %v1949 = vpop.permute.xlu0 %1948
  %1950 = vrot.lane.b32.xlu0 %v1906, 24
  %v1951 = vpop.permute.xlu0 %1950
  %1952 = vrot.lane.b32.xlu0 %v1907, 24
  %v1953 = vpop.permute.xlu0 %1952
  %1954 = vrot.lane.b32.xlu0 %v1908, 24
  %v1955 = vpop.permute.xlu0 %1954
  %1956 = vrot.lane.b32.xlu0 %v1909, 24
  %v1957 = vpop.permute.xlu0 %1956
  %vm1974 = vcmask 224448
  %1975 = vst.msk [vmem:[#allocation3] sm:$0xf] %vm1974, %v1927
  %1976 = vst.msk [vmem:[#allocation3 + $0x4] sm:$0xf] %vm1974, %v1929
  %1977 = vst.msk [vmem:[#allocation3 + $0x8] sm:$0xf] %vm1974, %v1931
  %1978 = vst.msk [vmem:[#allocation3 + $0xc] sm:$0xf] %vm1974, %v1933
  %1979 = vst.msk [vmem:[#allocation3 + $0x10] sm:$0xf] %vm1974, %v1935
  %1980 = vst.msk [vmem:[#allocation3 + $0x14] sm:$0xf] %vm1974, %v1937
  %1981 = vst.msk [vmem:[#allocation3 + $0x18] sm:$0xf] %vm1974, %v1939
  %1982 = vst.msk [vmem:[#allocation3 + $0x1c] sm:$0xf] %vm1974, %v1941
  %1983 = vst.msk [vmem:[#allocation3 + $0x20] sm:$0xf] %vm1974, %v1943
  %1984 = vst.msk [vmem:[#allocation3 + $0x24] sm:$0xf] %vm1974, %v1945
  %1985 = vst.msk [vmem:[#allocation3 + $0x28] sm:$0xf] %vm1974, %v1947
  %1986 = vst.msk [vmem:[#allocation3 + $0x2c] sm:$0xf] %vm1974, %v1949
  %1987 = vst.msk [vmem:[#allocation3 + $0x30] sm:$0xf] %vm1974, %v1951
  %1988 = vst.msk [vmem:[#allocation3 + $0x34] sm:$0xf] %vm1974, %v1953
  %1989 = vst.msk [vmem:[#allocation3 + $0x38] sm:$0xf] %vm1974, %v1955
  %1990 = vst.msk [vmem:[#allocation3 + $0x3c] sm:$0xf] %vm1974, %v1957
  %v1991 = vld [vmem:[%s1893] sm:$0xf]
  %v1992 = vld [vmem:[%s1893 + $0x4] sm:$0x1]
  %v1993 = vld [vmem:[%s1893 + $0x8] sm:$0xf]
  %v1994 = vld [vmem:[%s1893 + $0xc] sm:$0x1]
  %v1995 = vld [vmem:[%s1893 + $0x10] sm:$0xf]
  %v1996 = vld [vmem:[%s1893 + $0x14] sm:$0x1]
  %v1997 = vld [vmem:[%s1893 + $0x18] sm:$0xf]
  %v1998 = vld [vmem:[%s1893 + $0x1c] sm:$0x1]
  %v1999 = vld [vmem:[%s1893 + $0x20] sm:$0xf]
  %v2000 = vld [vmem:[%s1893 + $0x24] sm:$0x1]
  %v2001 = vld [vmem:[%s1893 + $0x28] sm:$0xf]
  %v2002 = vld [vmem:[%s1893 + $0x2c] sm:$0x1]
  %v2003 = vld [vmem:[%s1893 + $0x30] sm:$0xf]
  %v2004 = vld [vmem:[%s1893 + $0x34] sm:$0x1]
  %v2005 = vld [vmem:[%s1893 + $0x38] sm:$0xf]
  %v2006 = vld [vmem:[%s1893 + $0x3c] sm:$0x1]
  %v2007 = vld [vmem:[%s1893 + $0x50] sm:$0xf]
  %v2008 = vld [vmem:[%s1893 + $0x54] sm:$0x1]
  %v2009 = vld [vmem:[%s1893 + $0x58] sm:$0xf]
  %v2010 = vld [vmem:[%s1893 + $0x5c] sm:$0x1]
  %v2011 = vld [vmem:[%s1893 + $0x60] sm:$0xf]
  %v2012 = vld [vmem:[%s1893 + $0x64] sm:$0x1]
  %v2013 = vld [vmem:[%s1893 + $0x68] sm:$0xf]
  %v2014 = vld [vmem:[%s1893 + $0x6c] sm:$0x1]
  %v2015 = vld [vmem:[%s1893 + $0x70] sm:$0xf]
  %v2016 = vld [vmem:[%s1893 + $0x74] sm:$0x1]
  %v2017 = vld [vmem:[%s1893 + $0x78] sm:$0xf]
  %v2018 = vld [vmem:[%s1893 + $0x7c] sm:$0x1]
  %v2019 = vld [vmem:[%s1893 + $0x80] sm:$0xf]
  %v2020 = vld [vmem:[%s1893 + $0x84] sm:$0x1]
  %v2021 = vld [vmem:[%s1893 + $0x88] sm:$0xf]
  %v2022 = vld [vmem:[%s1893 + $0x8c] sm:$0x1]
  %v2024 = vshrl.u32 %v1991, 16
  %v2026 = vrot.slane %v2024, 4
  %v2027 = vshll.u32 %v1991, 16
  %v2029 = vrot.slane %v2027, 5
  %v2030 = vor.u32 %v2026, %v2029
  %v2031 = vrot.slane %v2030, 4
  %v2033 = vshll.u32 %v1992, 16
  %v2035 = vrot.slane %v2033, 5
  %v2036 = vsel %vm796, %v2031, %v2035
  %v2038 = vshrl.u32 %v1993, 16
  %v2040 = vrot.slane %v2038, 4
  %v2041 = vshll.u32 %v1993, 16
  %v2043 = vrot.slane %v2041, 5
  %v2044 = vor.u32 %v2040, %v2043
  %v2045 = vrot.slane %v2044, 4
  %v2047 = vshll.u32 %v1994, 16
  %v2049 = vrot.slane %v2047, 5
  %v2050 = vsel %vm796, %v2045, %v2049
  %v2052 = vshrl.u32 %v1995, 16
  %v2054 = vrot.slane %v2052, 4
  %v2055 = vshll.u32 %v1995, 16
  %v2057 = vrot.slane %v2055, 5
  %v2058 = vor.u32 %v2054, %v2057
  %v2059 = vrot.slane %v2058, 4
  %v2061 = vshll.u32 %v1996, 16
  %v2063 = vrot.slane %v2061, 5
  %v2064 = vsel %vm796, %v2059, %v2063
  %v2066 = vshrl.u32 %v1997, 16
  %v2068 = vrot.slane %v2066, 4
  %v2069 = vshll.u32 %v1997, 16
  %v2071 = vrot.slane %v2069, 5
  %v2072 = vor.u32 %v2068, %v2071
  %v2073 = vrot.slane %v2072, 4
  %v2075 = vshll.u32 %v1998, 16
  %v2077 = vrot.slane %v2075, 5
  %v2078 = vsel %vm796, %v2073, %v2077
  %v2080 = vshrl.u32 %v1999, 16
  %v2082 = vrot.slane %v2080, 4
  %v2083 = vshll.u32 %v1999, 16
  %v2085 = vrot.slane %v2083, 5
  %v2086 = vor.u32 %v2082, %v2085
  %v2087 = vrot.slane %v2086, 4
  %v2089 = vshll.u32 %v2000, 16
  %v2091 = vrot.slane %v2089, 5
  %v2092 = vsel %vm796, %v2087, %v2091
  %v2094 = vshrl.u32 %v2001, 16
  %v2096 = vrot.slane %v2094, 4
  %v2097 = vshll.u32 %v2001, 16
  %v2099 = vrot.slane %v2097, 5
  %v2100 = vor.u32 %v2096, %v2099
  %v2101 = vrot.slane %v2100, 4
  %v2103 = vshll.u32 %v2002, 16
  %v2105 = vrot.slane %v2103, 5
  %v2106 = vsel %vm796, %v2101, %v2105
  %v2108 = vshrl.u32 %v2003, 16
  %v2110 = vrot.slane %v2108, 4
  %v2111 = vshll.u32 %v2003, 16
  %v2113 = vrot.slane %v2111, 5
  %v2114 = vor.u32 %v2110, %v2113
  %v2115 = vrot.slane %v2114, 4
  %v2117 = vshll.u32 %v2004, 16
  %v2119 = vrot.slane %v2117, 5
  %v2120 = vsel %vm796, %v2115, %v2119
  %v2122 = vshrl.u32 %v2005, 16
  %v2124 = vrot.slane %v2122, 4
  %v2125 = vshll.u32 %v2005, 16
  %v2127 = vrot.slane %v2125, 5
  %v2128 = vor.u32 %v2124, %v2127
  %v2129 = vrot.slane %v2128, 4
  %v2131 = vshll.u32 %v2006, 16
  %v2133 = vrot.slane %v2131, 5
  %v2134 = vsel %vm796, %v2129, %v2133
  %v2136 = vshrl.u32 %v2007, 16
  %v2138 = vrot.slane %v2136, 4
  %v2139 = vshll.u32 %v2007, 16
  %v2141 = vrot.slane %v2139, 5
  %v2142 = vor.u32 %v2138, %v2141
  %v2143 = vrot.slane %v2142, 4
  %v2145 = vshll.u32 %v2008, 16
  %v2147 = vrot.slane %v2145, 5
  %v2148 = vsel %vm796, %v2143, %v2147
  %v2150 = vshrl.u32 %v2009, 16
  %v2152 = vrot.slane %v2150, 4
  %v2153 = vshll.u32 %v2009, 16
  %v2155 = vrot.slane %v2153, 5
  %v2156 = vor.u32 %v2152, %v2155
  %v2157 = vrot.slane %v2156, 4
  %v2159 = vshll.u32 %v2010, 16
  %v2161 = vrot.slane %v2159, 5
  %v2162 = vsel %vm796, %v2157, %v2161
  %v2164 = vshrl.u32 %v2011, 16
  %v2166 = vrot.slane %v2164, 4
  %v2167 = vshll.u32 %v2011, 16
  %v2169 = vrot.slane %v2167, 5
  %v2170 = vor.u32 %v2166, %v2169
  %v2171 = vrot.slane %v2170, 4
  %v2173 = vshll.u32 %v2012, 16
  %v2175 = vrot.slane %v2173, 5
  %v2176 = vsel %vm796, %v2171, %v2175
  %v2178 = vshrl.u32 %v2013, 16
  %v2180 = vrot.slane %v2178, 4
  %v2181 = vshll.u32 %v2013, 16
  %v2183 = vrot.slane %v2181, 5
  %v2184 = vor.u32 %v2180, %v2183
  %v2185 = vrot.slane %v2184, 4
  %v2187 = vshll.u32 %v2014, 16
  %v2189 = vrot.slane %v2187, 5
  %v2190 = vsel %vm796, %v2185, %v2189
  %v2192 = vshrl.u32 %v2015, 16
  %v2194 = vrot.slane %v2192, 4
  %v2195 = vshll.u32 %v2015, 16
  %v2197 = vrot.slane %v2195, 5
  %v2198 = vor.u32 %v2194, %v2197
  %v2199 = vrot.slane %v2198, 4
  %v2201 = vshll.u32 %v2016, 16
  %v2203 = vrot.slane %v2201, 5
  %v2204 = vsel %vm796, %v2199, %v2203
  %v2206 = vshrl.u32 %v2017, 16
  %v2208 = vrot.slane %v2206, 4
  %v2209 = vshll.u32 %v2017, 16
  %v2211 = vrot.slane %v2209, 5
  %v2212 = vor.u32 %v2208, %v2211
  %v2213 = vrot.slane %v2212, 4
  %v2215 = vshll.u32 %v2018, 16
  %v2217 = vrot.slane %v2215, 5
  %v2218 = vsel %vm796, %v2213, %v2217
  %v2220 = vshrl.u32 %v2019, 16
  %v2222 = vrot.slane %v2220, 4
  %v2223 = vshll.u32 %v2019, 16
  %v2225 = vrot.slane %v2223, 5
  %v2226 = vor.u32 %v2222, %v2225
  %v2227 = vrot.slane %v2226, 4
  %v2229 = vshll.u32 %v2020, 16
  %v2231 = vrot.slane %v2229, 5
  %v2232 = vsel %vm796, %v2227, %v2231
  %v2234 = vshrl.u32 %v2021, 16
  %v2236 = vrot.slane %v2234, 4
  %v2237 = vshll.u32 %v2021, 16
  %v2239 = vrot.slane %v2237, 5
  %v2240 = vor.u32 %v2236, %v2239
  %v2241 = vrot.slane %v2240, 4
  %v2243 = vshll.u32 %v2022, 16
  %v2245 = vrot.slane %v2243, 5
  %v2246 = vsel %vm796, %v2241, %v2245
  %2247 = vrot.lane.b32.xlu0 %v2036, 28
  %v2248 = vpop.permute.xlu0 %2247
  %2249 = vrot.lane.b32.xlu0 %v2050, 28
  %v2250 = vpop.permute.xlu0 %2249
  %2251 = vrot.lane.b32.xlu0 %v2064, 28
  %v2252 = vpop.permute.xlu0 %2251
  %2253 = vrot.lane.b32.xlu0 %v2078, 28
  %v2254 = vpop.permute.xlu0 %2253
  %2255 = vrot.lane.b32.xlu0 %v2092, 28
  %v2256 = vpop.permute.xlu0 %2255
  %2257 = vrot.lane.b32.xlu0 %v2106, 28
  %v2258 = vpop.permute.xlu0 %2257
  %2259 = vrot.lane.b32.xlu0 %v2120, 28
  %v2260 = vpop.permute.xlu0 %2259
  %2261 = vrot.lane.b32.xlu0 %v2134, 28
  %v2262 = vpop.permute.xlu0 %2261
  %2263 = vrot.lane.b32.xlu0 %v2148, 28
  %v2264 = vpop.permute.xlu0 %2263
  %2265 = vrot.lane.b32.xlu0 %v2162, 28
  %v2266 = vpop.permute.xlu0 %2265
  %2267 = vrot.lane.b32.xlu0 %v2176, 28
  %v2268 = vpop.permute.xlu0 %2267
  %2269 = vrot.lane.b32.xlu0 %v2190, 28
  %v2270 = vpop.permute.xlu0 %2269
  %2271 = vrot.lane.b32.xlu0 %v2204, 28
  %v2272 = vpop.permute.xlu0 %2271
  %2273 = vrot.lane.b32.xlu0 %v2218, 28
  %v2274 = vpop.permute.xlu0 %2273
  %2275 = vrot.lane.b32.xlu0 %v2232, 28
  %v2276 = vpop.permute.xlu0 %2275
  %2277 = vrot.lane.b32.xlu0 %v2246, 28
  %v2278 = vpop.permute.xlu0 %2277
  %vm2295 = vcmask 257248
  %2296 = vst.msk [vmem:[#allocation3] sm:$0xf] %vm2295, %v2248
  %2297 = vst.msk [vmem:[#allocation3 + $0x4] sm:$0xf] %vm2295, %v2250
  %2298 = vst.msk [vmem:[#allocation3 + $0x8] sm:$0xf] %vm2295, %v2252
  %2299 = vst.msk [vmem:[#allocation3 + $0xc] sm:$0xf] %vm2295, %v2254
  %2300 = vst.msk [vmem:[#allocation3 + $0x10] sm:$0xf] %vm2295, %v2256
  %2301 = vst.msk [vmem:[#allocation3 + $0x14] sm:$0xf] %vm2295, %v2258
  %2302 = vst.msk [vmem:[#allocation3 + $0x18] sm:$0xf] %vm2295, %v2260
  %2303 = vst.msk [vmem:[#allocation3 + $0x1c] sm:$0xf] %vm2295, %v2262
  %2304 = vst.msk [vmem:[#allocation3 + $0x20] sm:$0xf] %vm2295, %v2264
  %2305 = vst.msk [vmem:[#allocation3 + $0x24] sm:$0xf] %vm2295, %v2266
  %2306 = vst.msk [vmem:[#allocation3 + $0x28] sm:$0xf] %vm2295, %v2268
  %2307 = vst.msk [vmem:[#allocation3 + $0x2c] sm:$0xf] %vm2295, %v2270
  %2308 = vst.msk [vmem:[#allocation3 + $0x30] sm:$0xf] %vm2295, %v2272
  %2309 = vst.msk [vmem:[#allocation3 + $0x34] sm:$0xf] %vm2295, %v2274
  %2310 = vst.msk [vmem:[#allocation3 + $0x38] sm:$0xf] %vm2295, %v2276
  %2311 = vst.msk [vmem:[#allocation3 + $0x3c] sm:$0xf] %vm2295, %v2278
  %v2312 = vld [vmem:[%s1893] sm:$0xe]
  %v2313 = vld [vmem:[%s1893 + $0x4] sm:$0x1]
  %v2314 = vld [vmem:[%s1893 + $0x8] sm:$0xe]
  %v2315 = vld [vmem:[%s1893 + $0xc] sm:$0x1]
  %v2316 = vld [vmem:[%s1893 + $0x10] sm:$0xe]
  %v2317 = vld [vmem:[%s1893 + $0x14] sm:$0x1]
  %v2318 = vld [vmem:[%s1893 + $0x18] sm:$0xe]
  %v2319 = vld [vmem:[%s1893 + $0x1c] sm:$0x1]
  %v2320 = vld [vmem:[%s1893 + $0x20] sm:$0xe]
  %v2321 = vld [vmem:[%s1893 + $0x24] sm:$0x1]
  %v2322 = vld [vmem:[%s1893 + $0x28] sm:$0xe]
  %v2323 = vld [vmem:[%s1893 + $0x2c] sm:$0x1]
  %v2324 = vld [vmem:[%s1893 + $0x30] sm:$0xe]
  %v2325 = vld [vmem:[%s1893 + $0x34] sm:$0x1]
  %v2326 = vld [vmem:[%s1893 + $0x38] sm:$0xe]
  %v2327 = vld [vmem:[%s1893 + $0x3c] sm:$0x1]
  %v2328 = vld [vmem:[%s1893 + $0x50] sm:$0xe]
  %v2329 = vld [vmem:[%s1893 + $0x54] sm:$0x1]
  %v2330 = vld [vmem:[%s1893 + $0x58] sm:$0xe]
  %v2331 = vld [vmem:[%s1893 + $0x5c] sm:$0x1]
  %v2332 = vld [vmem:[%s1893 + $0x60] sm:$0xe]
  %v2333 = vld [vmem:[%s1893 + $0x64] sm:$0x1]
  %v2334 = vld [vmem:[%s1893 + $0x68] sm:$0xe]
  %v2335 = vld [vmem:[%s1893 + $0x6c] sm:$0x1]
  %v2336 = vld [vmem:[%s1893 + $0x70] sm:$0xe]
  %v2337 = vld [vmem:[%s1893 + $0x74] sm:$0x1]
  %v2338 = vld [vmem:[%s1893 + $0x78] sm:$0xe]
  %v2339 = vld [vmem:[%s1893 + $0x7c] sm:$0x1]
  %v2340 = vld [vmem:[%s1893 + $0x80] sm:$0xe]
  %v2341 = vld [vmem:[%s1893 + $0x84] sm:$0x1]
  %v2342 = vld [vmem:[%s1893 + $0x88] sm:$0xe]
  %v2343 = vld [vmem:[%s1893 + $0x8c] sm:$0x1]
  %v2376 = vrot.slane %v2312, 5
  %v2377 = vrot.slane %v2376, 4
  %v2378 = vrot.slane %v2313, 5
  %v2379 = vsel %vm1152, %v2377, %v2378
  %v2380 = vrot.slane %v2314, 5
  %v2381 = vrot.slane %v2380, 4
  %v2382 = vrot.slane %v2315, 5
  %v2383 = vsel %vm1152, %v2381, %v2382
  %v2384 = vrot.slane %v2316, 5
  %v2385 = vrot.slane %v2384, 4
  %v2386 = vrot.slane %v2317, 5
  %v2387 = vsel %vm1152, %v2385, %v2386
  %v2388 = vrot.slane %v2318, 5
  %v2389 = vrot.slane %v2388, 4
  %v2390 = vrot.slane %v2319, 5
  %v2391 = vsel %vm1152, %v2389, %v2390
  %v2392 = vrot.slane %v2320, 5
  %v2393 = vrot.slane %v2392, 4
  %v2394 = vrot.slane %v2321, 5
  %v2395 = vsel %vm1152, %v2393, %v2394
  %v2396 = vrot.slane %v2322, 5
  %v2397 = vrot.slane %v2396, 4
  %v2398 = vrot.slane %v2323, 5
  %v2399 = vsel %vm1152, %v2397, %v2398
  %v2400 = vrot.slane %v2324, 5
  %v2401 = vrot.slane %v2400, 4
  %v2402 = vrot.slane %v2325, 5
  %v2403 = vsel %vm1152, %v2401, %v2402
  %v2404 = vrot.slane %v2326, 5
  %v2405 = vrot.slane %v2404, 4
  %v2406 = vrot.slane %v2327, 5
  %v2407 = vsel %vm1152, %v2405, %v2406
  %v2408 = vrot.slane %v2328, 5
  %v2409 = vrot.slane %v2408, 4
  %v2410 = vrot.slane %v2329, 5
  %v2411 = vsel %vm1152, %v2409, %v2410
  %v2412 = vrot.slane %v2330, 5
  %v2413 = vrot.slane %v2412, 4
  %v2414 = vrot.slane %v2331, 5
  %v2415 = vsel %vm1152, %v2413, %v2414
  %v2416 = vrot.slane %v2332, 5
  %v2417 = vrot.slane %v2416, 4
  %v2418 = vrot.slane %v2333, 5
  %v2419 = vsel %vm1152, %v2417, %v2418
  %v2420 = vrot.slane %v2334, 5
  %v2421 = vrot.slane %v2420, 4
  %v2422 = vrot.slane %v2335, 5
  %v2423 = vsel %vm1152, %v2421, %v2422
  %v2424 = vrot.slane %v2336, 5
  %v2425 = vrot.slane %v2424, 4
  %v2426 = vrot.slane %v2337, 5
  %v2427 = vsel %vm1152, %v2425, %v2426
  %v2428 = vrot.slane %v2338, 5
  %v2429 = vrot.slane %v2428, 4
  %v2430 = vrot.slane %v2339, 5
  %v2431 = vsel %vm1152, %v2429, %v2430
  %v2432 = vrot.slane %v2340, 5
  %v2433 = vrot.slane %v2432, 4
  %v2434 = vrot.slane %v2341, 5
  %v2435 = vsel %vm1152, %v2433, %v2434
  %v2436 = vrot.slane %v2342, 5
  %v2437 = vrot.slane %v2436, 4
  %v2438 = vrot.slane %v2343, 5
  %v2439 = vsel %vm1152, %v2437, %v2438
  %2440 = vrot.lane.b32.xlu0 %v2379, 32
  %v2441 = vpop.permute.xlu0 %2440
  %2442 = vrot.lane.b32.xlu0 %v2383, 32
  %v2443 = vpop.permute.xlu0 %2442
  %2444 = vrot.lane.b32.xlu0 %v2387, 32
  %v2445 = vpop.permute.xlu0 %2444
  %2446 = vrot.lane.b32.xlu0 %v2391, 32
  %v2447 = vpop.permute.xlu0 %2446
  %2448 = vrot.lane.b32.xlu0 %v2395, 32
  %v2449 = vpop.permute.xlu0 %2448
  %2450 = vrot.lane.b32.xlu0 %v2399, 32
  %v2451 = vpop.permute.xlu0 %2450
  %2452 = vrot.lane.b32.xlu0 %v2403, 32
  %v2453 = vpop.permute.xlu0 %2452
  %2454 = vrot.lane.b32.xlu0 %v2407, 32
  %v2455 = vpop.permute.xlu0 %2454
  %2456 = vrot.lane.b32.xlu0 %v2411, 32
  %v2457 = vpop.permute.xlu0 %2456
  %2458 = vrot.lane.b32.xlu0 %v2415, 32
  %v2459 = vpop.permute.xlu0 %2458
  %2460 = vrot.lane.b32.xlu0 %v2419, 32
  %v2461 = vpop.permute.xlu0 %2460
  %2462 = vrot.lane.b32.xlu0 %v2423, 32
  %v2463 = vpop.permute.xlu0 %2462
  %2464 = vrot.lane.b32.xlu0 %v2427, 32
  %v2465 = vpop.permute.xlu0 %2464
  %2466 = vrot.lane.b32.xlu0 %v2431, 32
  %v2467 = vpop.permute.xlu0 %2466
  %2468 = vrot.lane.b32.xlu0 %v2435, 32
  %v2469 = vpop.permute.xlu0 %2468
  %2470 = vrot.lane.b32.xlu0 %v2439, 32
  %v2471 = vpop.permute.xlu0 %2470
  %vm2488 = vcmask 290048
  %2489 = vst.msk [vmem:[#allocation3] sm:$0xf] %vm2488, %v2441
  %2490 = vst.msk [vmem:[#allocation3 + $0x4] sm:$0xf] %vm2488, %v2443
  %2491 = vst.msk [vmem:[#allocation3 + $0x8] sm:$0xf] %vm2488, %v2445
  %2492 = vst.msk [vmem:[#allocation3 + $0xc] sm:$0xf] %vm2488, %v2447
  %2493 = vst.msk [vmem:[#allocation3 + $0x10] sm:$0xf] %vm2488, %v2449
  %2494 = vst.msk [vmem:[#allocation3 + $0x14] sm:$0xf] %vm2488, %v2451
  %2495 = vst.msk [vmem:[#allocation3 + $0x18] sm:$0xf] %vm2488, %v2453
  %2496 = vst.msk [vmem:[#allocation3 + $0x1c] sm:$0xf] %vm2488, %v2455
  %2497 = vst.msk [vmem:[#allocation3 + $0x20] sm:$0xf] %vm2488, %v2457
  %2498 = vst.msk [vmem:[#allocation3 + $0x24] sm:$0xf] %vm2488, %v2459
  %2499 = vst.msk [vmem:[#allocation3 + $0x28] sm:$0xf] %vm2488, %v2461
  %2500 = vst.msk [vmem:[#allocation3 + $0x2c] sm:$0xf] %vm2488, %v2463
  %2501 = vst.msk [vmem:[#allocation3 + $0x30] sm:$0xf] %vm2488, %v2465
  %2502 = vst.msk [vmem:[#allocation3 + $0x34] sm:$0xf] %vm2488, %v2467
  %2503 = vst.msk [vmem:[#allocation3 + $0x38] sm:$0xf] %vm2488, %v2469
  %2504 = vst.msk [vmem:[#allocation3 + $0x3c] sm:$0xf] %vm2488, %v2471
  %v2505 = vld [vmem:[#allocation3] sm:$0xf]
  %v2506 = vld [vmem:[#allocation3 + $0x4] sm:$0xf]
  %v2507 = vld [vmem:[#allocation3 + $0x8] sm:$0xf]
  %v2508 = vld [vmem:[#allocation3 + $0xc] sm:$0xf]
  %v2509 = vld [vmem:[#allocation3 + $0x10] sm:$0xf]
  %v2510 = vld [vmem:[#allocation3 + $0x14] sm:$0xf]
  %v2511 = vld [vmem:[#allocation3 + $0x18] sm:$0xf]
  %v2512 = vld [vmem:[#allocation3 + $0x1c] sm:$0xf]
  %v2513 = vld [vmem:[#allocation3 + $0x20] sm:$0xf]
  %v2514 = vld [vmem:[#allocation3 + $0x24] sm:$0xf]
  %v2515 = vld [vmem:[#allocation3 + $0x28] sm:$0xf]
  %v2516 = vld [vmem:[#allocation3 + $0x2c] sm:$0xf]
  %v2517 = vld [vmem:[#allocation3 + $0x30] sm:$0xf]
  %v2518 = vld [vmem:[#allocation3 + $0x34] sm:$0xf]
  %v2519 = vld [vmem:[#allocation3 + $0x38] sm:$0xf]
  %v2520 = vld [vmem:[#allocation3 + $0x3c] sm:$0xf]
  %v2521 = vld [vmem:[%s1] sm:$0xf]
  %v2522 = vld [vmem:[%s1 + $0x4] sm:$0xf]
  %v2523 = vld [vmem:[%s1 + $0x8] sm:$0xf]
  %v2524 = vld [vmem:[%s1 + $0xc] sm:$0xf]
  %v2525 = vld [vmem:[%s1 + $0x10] sm:$0x3]
  %v2542 = vunpack.c.l.b16 %v2505
  %v2543 = vunpack.c.l.b16 %v2506
  %v2544 = vunpack.c.l.b16 %v2507
  %v2545 = vunpack.c.l.b16 %v2508
  %v2546 = vunpack.c.l.b16 %v2509
  %v2547 = vunpack.c.l.b16 %v2510
  %v2548 = vunpack.c.l.b16 %v2511
  %v2549 = vunpack.c.l.b16 %v2512
  %v2550 = vunpack.c.l.b16 %v2513
  %v2551 = vunpack.c.l.b16 %v2514
  %v2552 = vunpack.c.l.b16 %v2515
  %v2553 = vunpack.c.l.b16 %v2516
  %v2554 = vunpack.c.l.b16 %v2517
  %v2555 = vunpack.c.l.b16 %v2518
  %v2556 = vunpack.c.l.b16 %v2519
  %v2557 = vunpack.c.l.b16 %v2520
  %v2558 = vpack.c.b16 %v2543, %v2542
  %v2559 = vpack.c.b16 %v2545, %v2544
  %v2560 = vpack.c.b16 %v2547, %v2546
  %v2561 = vpack.c.b16 %v2549, %v2548
  %v2562 = vpack.c.b16 %v2551, %v2550
  %v2563 = vpack.c.b16 %v2553, %v2552
  %v2564 = vpack.c.b16 %v2555, %v2554
  %v2565 = vpack.c.b16 %v2557, %v2556
  %v2571 = vunpack.c.l.b16 %v2521
  %v2572 = vunpack.c.l.b16 %v2522
  %v2573 = vunpack.c.l.b16 %v2523
  %v2574 = vunpack.c.l.b16 %v2524
  %v2575 = vunpack.c.l.b16 %v2525
  %v2576 = vpack.c.b16 %v2572, %v2571
  %v2577 = vpack.c.b16 %v2574, %v2573
  %v2578 = vpack.c.b16 %v2575, %v2575
  %vm2581 = vcmask 293888
  %v2583 = vsel %vm2581, %v2558, 0
  %v2586 = vsel %vm2581, %v2559, 0
  %v2589 = vsel %vm2581, %v2560, 0
  %v2592 = vsel %vm2581, %v2561, 0
  %v2595 = vsel %vm2581, %v2562, 0
  %v2598 = vsel %vm2581, %v2563, 0
  %v2601 = vsel %vm2581, %v2564, 0
  %v2604 = vsel %vm2581, %v2565, 0
  %vm2606 = vcmask 1041408
  %v2608 = vsel %vm2606, %v2578, 0
  %2610 = vmatpush.bf16.msra.mxu0 0
  %2611 = vmatpush.bf16.msra.mxu0 0
  %2612 = vmatpush.bf16.msra.mxu0 0
  %2613 = vmatpush.bf16.msra.mxu0 0
  %2614 = vmatpush.bf16.msra.mxu0 0
  %2615 = vmatpush.bf16.msra.mxu0 %v2608
  %2616 = vmatpush.bf16.msra.mxu0 %v2577
  %2617 = vmatpush.bf16.msra.mxu0 %v2576
  %2618 = vmatmul.bf16.gmra.mxu0 %v2583
  %v2619 = vpop.f32.mrf.mxu0
  %v2620 = vadd.f32 0.0, %v2619
  %v2621 = vpop.f32.mrf.mxu0
  %v2622 = vadd.f32 0.0, %v2621
  %2623 = vmatmul.bf16.gmra.mxu0 %v2586
  %v2624 = vpop.f32.mrf.mxu0
  %v2625 = vadd.f32 0.0, %v2624
  %v2626 = vpop.f32.mrf.mxu0
  %v2627 = vadd.f32 0.0, %v2626
  %2628 = vmatmul.bf16.gmra.mxu0 %v2589
  %v2629 = vpop.f32.mrf.mxu0
  %v2630 = vadd.f32 0.0, %v2629
  %v2631 = vpop.f32.mrf.mxu0
  %v2632 = vadd.f32 0.0, %v2631
  %2633 = vmatmul.bf16.gmra.mxu0 %v2592
  %v2634 = vpop.f32.mrf.mxu0
  %v2635 = vadd.f32 0.0, %v2634
  %v2636 = vpop.f32.mrf.mxu0
  %v2637 = vadd.f32 0.0, %v2636
  %2638 = vmatmul.bf16.gmra.mxu0 %v2595
  %v2639 = vpop.f32.mrf.mxu0
  %v2640 = vadd.f32 0.0, %v2639
  %v2641 = vpop.f32.mrf.mxu0
  %v2642 = vadd.f32 0.0, %v2641
  %2643 = vmatmul.bf16.gmra.mxu0 %v2598
  %v2644 = vpop.f32.mrf.mxu0
  %v2645 = vadd.f32 0.0, %v2644
  %v2646 = vpop.f32.mrf.mxu0
  %v2647 = vadd.f32 0.0, %v2646
  %2648 = vmatmul.bf16.gmra.mxu0 %v2601
  %v2649 = vpop.f32.mrf.mxu0
  %v2650 = vadd.f32 0.0, %v2649
  %v2651 = vpop.f32.mrf.mxu0
  %v2652 = vadd.f32 0.0, %v2651
  %2653 = vmatmul.bf16.gmra.mxu0 %v2604
  %v2654 = vpop.f32.mrf.mxu0
  %v2655 = vadd.f32 0.0, %v2654
  %v2656 = vpop.f32.mrf.mxu0
  %v2657 = vadd.f32 0.0, %v2656
  %2658 = vdwg.mxu0
  %v2659 = vpack.c.bf16 %v2620, %v2620
  %v2660 = vpack.c.bf16 %v2622, %v2622
  %v2661 = vpack.c.bf16 %v2625, %v2625
  %v2662 = vpack.c.bf16 %v2627, %v2627
  %v2663 = vpack.c.bf16 %v2630, %v2630
  %v2664 = vpack.c.bf16 %v2632, %v2632
  %v2665 = vpack.c.bf16 %v2635, %v2635
  %v2666 = vpack.c.bf16 %v2637, %v2637
  %v2667 = vpack.c.bf16 %v2640, %v2640
  %v2668 = vpack.c.bf16 %v2642, %v2642
  %v2669 = vpack.c.bf16 %v2645, %v2645
  %v2670 = vpack.c.bf16 %v2647, %v2647
  %v2671 = vpack.c.bf16 %v2650, %v2650
  %v2672 = vpack.c.bf16 %v2652, %v2652
  %v2673 = vpack.c.bf16 %v2655, %v2655
  %v2674 = vpack.c.bf16 %v2657, %v2657
  %vm2675 = vcmask 60416
  %2676 = vst.msk [vmem:[%s2] sm:$0xf] %vm2675, %v2659
  %2677 = vst.msk [vmem:[%s2 + $0x4] sm:$0xf] %vm2675, %v2660
  %2678 = vst.msk [vmem:[%s2 + $0x8] sm:$0xf] %vm2675, %v2661
  %2679 = vst.msk [vmem:[%s2 + $0xc] sm:$0xf] %vm2675, %v2662
  %2680 = vst.msk [vmem:[%s2 + $0x10] sm:$0xf] %vm2675, %v2663
  %2681 = vst.msk [vmem:[%s2 + $0x14] sm:$0xf] %vm2675, %v2664
  %2682 = vst.msk [vmem:[%s2 + $0x18] sm:$0xf] %vm2675, %v2665
  %2683 = vst.msk [vmem:[%s2 + $0x1c] sm:$0xf] %vm2675, %v2666
  %2684 = vst.msk [vmem:[%s2 + $0x20] sm:$0xf] %vm2675, %v2667
  %2685 = vst.msk [vmem:[%s2 + $0x24] sm:$0xf] %vm2675, %v2668
  %2686 = vst.msk [vmem:[%s2 + $0x28] sm:$0xf] %vm2675, %v2669
  %2687 = vst.msk [vmem:[%s2 + $0x2c] sm:$0xf] %vm2675, %v2670
  %2688 = vst.msk [vmem:[%s2 + $0x30] sm:$0xf] %vm2675, %v2671
  %2689 = vst.msk [vmem:[%s2 + $0x34] sm:$0xf] %vm2675, %v2672
  %2690 = vst.msk [vmem:[%s2 + $0x38] sm:$0xf] %vm2675, %v2673
  %2691 = vst.msk [vmem:[%s2 + $0x3c] sm:$0xf] %vm2675, %v2674
  %vm2692 = vcmask 64512
  %v2693 = vsel %vm2692, %v2620, 0.0
  %v2694 = vsel %vm2692, %v2622, 0.0
  %v2695 = vadd.f32 %v2693, %v2694
  %v2696 = vsel %vm2692, %v2625, 0.0
  %v2697 = vadd.f32 %v2695, %v2696
  %v2698 = vsel %vm2692, %v2627, 0.0
  %v2699 = vadd.f32 %v2697, %v2698
  %v2700 = vsel %vm2692, %v2630, 0.0
  %v2701 = vadd.f32 %v2699, %v2700
  %v2702 = vsel %vm2692, %v2632, 0.0
  %v2703 = vadd.f32 %v2701, %v2702
  %v2704 = vsel %vm2692, %v2635, 0.0
  %v2705 = vadd.f32 %v2703, %v2704
  %v2706 = vsel %vm2692, %v2637, 0.0
  %v2707 = vadd.f32 %v2705, %v2706
  %v2708 = vsel %vm2692, %v2640, 0.0
  %v2709 = vadd.f32 %v2707, %v2708
  %v2710 = vsel %vm2692, %v2642, 0.0
  %v2711 = vadd.f32 %v2709, %v2710
  %v2712 = vsel %vm2692, %v2645, 0.0
  %v2713 = vadd.f32 %v2711, %v2712
  %v2714 = vsel %vm2692, %v2647, 0.0
  %v2715 = vadd.f32 %v2713, %v2714
  %v2716 = vsel %vm2692, %v2650, 0.0
  %v2717 = vadd.f32 %v2715, %v2716
  %v2718 = vsel %vm2692, %v2652, 0.0
  %v2719 = vadd.f32 %v2717, %v2718
  %v2720 = vsel %vm2692, %v2655, 0.0
  %v2721 = vadd.f32 %v2719, %v2720
  %v2722 = vsel %vm2692, %v2657, 0.0
  %v2723 = vadd.f32 %v2721, %v2722
  %v2724 = vrot.slane %v2723, 4
  %v2725 = vadd.f32 %v2723, %v2724
  %v2726 = vrot.slane %v2725, 2
  %v2727 = vadd.f32 %v2725, %v2726
  %v2728 = vrot.slane %v2727, 1
  %v2729 = vadd.f32 %v2727, %v2728
  %vm2730 = vcmask 57344
  %2731 = vst.msk [vmem:[%s3] sm:$0x1] %vm2730, %v2729
  %v2732 = vmul.f32 %v2620, %v2620
  %v2733 = vmul.f32 %v2622, %v2622
  %v2734 = vmul.f32 %v2625, %v2625
  %v2735 = vmul.f32 %v2627, %v2627
  %v2736 = vmul.f32 %v2630, %v2630
  %v2737 = vmul.f32 %v2632, %v2632
  %v2738 = vmul.f32 %v2635, %v2635
  %v2739 = vmul.f32 %v2637, %v2637
  %v2740 = vmul.f32 %v2640, %v2640
  %v2741 = vmul.f32 %v2642, %v2642
  %v2742 = vmul.f32 %v2645, %v2645
  %v2743 = vmul.f32 %v2647, %v2647
  %v2744 = vmul.f32 %v2650, %v2650
  %v2745 = vmul.f32 %v2652, %v2652
  %v2746 = vmul.f32 %v2655, %v2655
  %v2747 = vmul.f32 %v2657, %v2657
  %v2748 = vsel %vm2692, %v2732, 0.0
  %v2749 = vsel %vm2692, %v2733, 0.0
  %v2750 = vadd.f32 %v2748, %v2749
  %v2751 = vsel %vm2692, %v2734, 0.0
  %v2752 = vadd.f32 %v2750, %v2751
  %v2753 = vsel %vm2692, %v2735, 0.0
  %v2754 = vadd.f32 %v2752, %v2753
  %v2755 = vsel %vm2692, %v2736, 0.0
  %v2756 = vadd.f32 %v2754, %v2755
  %v2757 = vsel %vm2692, %v2737, 0.0
  %v2758 = vadd.f32 %v2756, %v2757
  %v2759 = vsel %vm2692, %v2738, 0.0
  %v2760 = vadd.f32 %v2758, %v2759
  %v2761 = vsel %vm2692, %v2739, 0.0
  %v2762 = vadd.f32 %v2760, %v2761
  %v2763 = vsel %vm2692, %v2740, 0.0
  %v2764 = vadd.f32 %v2762, %v2763
  %v2765 = vsel %vm2692, %v2741, 0.0
  %v2766 = vadd.f32 %v2764, %v2765
  %v2767 = vsel %vm2692, %v2742, 0.0
  %v2768 = vadd.f32 %v2766, %v2767
  %v2769 = vsel %vm2692, %v2743, 0.0
  %v2770 = vadd.f32 %v2768, %v2769
  %v2771 = vsel %vm2692, %v2744, 0.0
  %v2772 = vadd.f32 %v2770, %v2771
  %v2773 = vsel %vm2692, %v2745, 0.0
  %v2774 = vadd.f32 %v2772, %v2773
  %v2775 = vsel %vm2692, %v2746, 0.0
  %v2776 = vadd.f32 %v2774, %v2775
  %v2777 = vsel %vm2692, %v2747, 0.0
  %v2778 = vadd.f32 %v2776, %v2777
  %v2779 = vrot.slane %v2778, 4
  %v2780 = vadd.f32 %v2778, %v2779
  %v2781 = vrot.slane %v2780, 2
  %v2782 = vadd.f32 %v2780, %v2781
  %v2783 = vrot.slane %v2782, 1
  %v2784 = vadd.f32 %v2782, %v2783
  %2785 = vst.msk [vmem:[%s4] sm:$0x1] %vm2730, %v2784
  // Predicated region
  $region10: #{down_forward.3} parent=0 // pred_check
    _
  $region11: #{down_forward.3} parent=0 // pred_check_branch
    %2787 = sbr.rel (0) target = $region13
  $region12: #{down_forward.3} parent=0 // pred_region
    _
  $region13: #{down_forward.3} parent=0 // pred_fallthru
    _
  // Predicated region
  $region14: #{down_forward.3} parent=0 // pred_check
    _
  $region15: #{down_forward.3} parent=0 // pred_check_branch
    %2789 = sbr.rel (0) target = $region17
  $region16: #{down_forward.3} parent=0 // pred_region
    _
  $region17: #{down_forward.3} parent=0 // pred_fallthru
    _
  // Predicated region
  $region18: #{down_forward.3} parent=0 // pred_check
    _
  $region19: #{down_forward.3} parent=0 // pred_check_branch
    %2791 = sbr.rel (0) target = $region21
  $region20: #{down_forward.3} parent=0 // pred_region
    _
  $region21: #{down_forward.3} parent=0 // pred_fallthru
    _
  // Predicated region
  $region22: #{down_forward.3} parent=0 // pred_check
    _
  $region23: #{down_forward.3} parent=0 // pred_check_branch
    %2793 = sbr.rel (0) target = $region25
  $region24: #{down_forward.3} parent=0 // pred_region
    _
  $region25: #{down_forward.3} parent=0 // pred_fallthru
    _
  // Predicated region
  $region26: #{down_forward.3} parent=0 // pred_check
    _
  $region27: #{down_forward.3} parent=0 // pred_check_branch
    %2795 = sbr.rel (0) target = $region29
  $region28: #{down_forward.3} parent=0 // pred_region
    _
  $region29: #{down_forward.3} parent=0 // pred_fallthru
    _
  // Predicated region
  $region30: #{down_forward.3} parent=0 // pred_check
    _
  $region31: #{down_forward.3} parent=0 // pred_check_branch
    %2797 = sbr.rel (0) target = $region33
  $region32: #{down_forward.3} parent=0 // pred_region
    _
  $region33: #{down_forward.3} parent=0 // pred_fallthru
    _

</llo_original>
